<compile_context>
chip_gen: v5e
topology: v5e:2x2
jax: 0.10.0
libtpu: 0.0.40
codegen_flags: <defaults>
</compile_context>

<pallas_src>
import functools

import jax
import jax.numpy as jnp
from jax.experimental import pallas as pl
from jax.experimental.pallas import tpu as pltpu

KSIZE = 7          # both convs use kernel_size=7
PAD = 3            # both convs use padding=3
LPAD = 7           # left zero-halo carried in the padded input
NEG_SLOPE = 0.01   # F.leaky_relu default

# Index-scheme coupling (explicit so a future LPAD/PAD change cannot silently
# break the reflection fix):
#   y column q of a tile holds conv_pre output y_true[j0 + q - OFF],
#   padded-z index m = j0 + q - OFF + 1, reflection source y_true[1] sits at
#   column REFL_COL of tile 0.  This requires LPAD == 2*PAD + 1.
OFF = LPAD - PAD
REFL_COL = 1 + OFF
assert LPAD == 2 * PAD + 1, "index scheme requires LPAD == 2*PAD + 1"


def _round_up(a, b):
    return (a + b - 1) // b * b


def _gen_kernel(a_ref, h_ref, w1f_ref, b1_ref, w2f_ref, b2_ref, out_ref,
                xstack_ref, zstack_ref, *, T, Cin, C1, CS_PAD, TT):
    """One (batch, time-tile) grid step.

    a_ref     : (Cin, TT)          bf16  padded-input tile [j0, j0+TT)
    h_ref     : (Cin, 128)         bf16  right halo        [j0+TT, j0+TT+128)
    w1f_ref   : (C1, 7*Cin)        bf16  conv_pre weight, taps folded into K
    b1_ref    : (C1, 1)            f32
    w2f_ref   : (C2_PAD, 7*C1)     f32   conv_post weight, spec rows over phase rows
    b2_ref    : (C2_PAD, 1)        f32
    out_ref   : (C2_PAD, TT)       f32   rows [:CS_PAD]=exp(spec), [CS_PAD:]=sin(phase)
    xstack_ref: (7*Cin, TT+6)      bf16  scratch: im2col of padded x
    zstack_ref: (7*C1, TT)         f32   scratch: im2col of padded/reflected y
    """
    t = pl.program_id(1)
    j0 = t * TT
    TTH = TT + 2 * PAD                       # conv_pre tile width incl. halo

    # ---- conv_pre im2col: tile block + 128-col halo block -> xstack --------
    for k in range(KSIZE):                   # static unroll: 7 taps
        r0 = k * Cin
        xstack_ref[r0:r0 + Cin, 0:TT - k] = a_ref[:, k:TT]
        xstack_ref[r0:r0 + Cin, TT - k:TTH] = h_ref[:, 0:k + 2 * PAD]
    y = jnp.dot(w1f_ref[...], xstack_ref[...],
                preferred_element_type=jnp.float32)           # (C1, TT+6) f32
    y = y + b1_ref[...]
    y = jnp.where(y > 0, y, NEG_SLOPE * y)                    # leaky_relu f32

    # y column q holds y_true[j0 + q - OFF]; padded-z index m = j0 + q - OFF + 1
    #   z[m] = y_true[m-1] for 1 <= m <= T,  z[0] = y_true[1] (reflection, tile 0,
    #   column REFL_COL), z[m] = 0 otherwise (conv_post zero padding).
    # Only the first and last time tiles touch m < 1 or m > T.
    needs_mask = jnp.logical_or(t == 0, j0 + TT + PAD - 1 > T)

    @pl.when(jnp.logical_not(needs_mask))
    def _():                                  # interior tiles: z == y, no masking
        for k in range(KSIZE):
            zstack_ref[k * C1:(k + 1) * C1, :] = y[:, k:k + TT]

    @pl.when(needs_mask)
    def _():                                  # boundary tiles only
        q = jax.lax.broadcasted_iota(jnp.int32, (C1, TTH), 1)
        m = q + (j0 - OFF + 1)
        z = jnp.where((m >= 1) & (m <= T), y, 0.0)
        z = jnp.where(m == 0, y[:, REFL_COL:REFL_COL + 1], z)   # reflection col
        for k in range(KSIZE):
            zstack_ref[k * C1:(k + 1) * C1, :] = z[:, k:k + TT]

    # ---- conv_post: single fused (spec|phase) matmul in f32 ----------------
    o = jnp.dot(w2f_ref[...], zstack_ref[...],
                preferred_element_type=jnp.float32) + b2_ref[...]
    out_ref[0:CS_PAD, :] = jnp.exp(o[0:CS_PAD, :])      # spec rows (lane-dense)
    out_ref[CS_PAD:, :] = jnp.sin(o[CS_PAD:, :])        # phase rows (lane-dense)


@functools.partial(jax.jit, static_argnames=("gen_istft_n_fft", "tt_max"))
def generator_conf_forward(x, params, *, gen_istft_n_fft, tt_max=1024):
    """x: (B, 80, T) f32 -> (spec (B, center, T+1), phase (B, C2-center, T+1))."""
    B, Cin, T = x.shape
    w1, b1, w2, b2 = params["w1"], params["b1"], params["w2"], params["b2"]
    C1 = w1.shape[1]
    C2 = w2.shape[1]
    center = gen_istft_n_fft // 2 + 1
    Cphase = C2 - center
    Tout = T + 1

    # Balanced, lane-dense time tiling: nt tiles of equal width TT (x128),
    # TT <= tt_max, so the last tile is not mostly padding.
    nt = -(-Tout // tt_max)
    TT = max(128, _round_up(-(-Tout // nt), 128))
    Tout_pad = nt * TT
    CS_PAD = _round_up(center, 8)
    CP_PAD = _round_up(Cphase, 8)
    C2_PAD = CS_PAD + CP_PAD

    # Padded bf16 input; the pad fuses with the cast (single HBM pass).
    Txp = Tout_pad + 128
    xpb = jnp.pad(x.astype(jnp.bfloat16), ((0, 0), (0, 0), (LPAD, Txp - LPAD - T)))

    # conv_pre weight: fold the 7 taps into the contraction dim (bf16).
    w1f = jnp.transpose(w1, (1, 0, 2)).reshape(C1, KSIZE * Cin).astype(jnp.bfloat16)
    b1c = b1.astype(jnp.float32)
    # conv_post weight: taps folded, spec rows stacked over phase rows (each
    # padded to a sublane multiple), kept in f32 (exp() is error-sensitive).
    w2t = jnp.transpose(w2, (1, 0, 2)).reshape(C2, KSIZE * C1).astype(jnp.float32)
    w2f = jnp.concatenate([
        jnp.pad(w2t[:center], ((0, CS_PAD - center), (0, 0))),
        jnp.pad(w2t[center:], ((0, CP_PAD - Cphase), (0, 0))),
    ], axis=0)
    b2f = jnp.concatenate([
        jnp.pad(b2[:center].astype(jnp.float32), ((0, CS_PAD - center), (0, 0))),
        jnp.pad(b2[center:].astype(jnp.float32), ((0, CP_PAD - Cphase), (0, 0))),
    ], axis=0)

    kernel = functools.partial(_gen_kernel, T=T, Cin=Cin, C1=C1,
                               CS_PAD=CS_PAD, TT=TT)

    hb = TT // 128   # halo block stride in 128-column block units

    # VMEM budget from actual block sizes (all O(TT), independent of T).
    vmem_need = (
        2 * Cin * (TT + 128) * 2                       # dbl-buffered input tile + halo (bf16)
        + 2 * C2_PAD * TT * 4                          # dbl-buffered output tile (f32)
        + 2 * (C1 * KSIZE * Cin * 2 + C2_PAD * KSIZE * C1 * 4 + (C1 + C2_PAD) * 4)
        + KSIZE * Cin * (TT + 2 * PAD) * 2             # xstack scratch (bf16)
        + KSIZE * C1 * TT * 4                          # zstack scratch (f32)
    )
    vmem_limit = int(min(max(2 * vmem_need, 8 * 1024 * 1024), 32 * 1024 * 1024))

    out_pad = pl.pallas_call(
        kernel,
        out_shape=jax.ShapeDtypeStruct((B, C2_PAD, Tout_pad), jnp.float32),
        grid_spec=pltpu.PrefetchScalarGridSpec(
            num_scalar_prefetch=0,
            grid=(B, nt),
            in_specs=[
                pl.BlockSpec((None, Cin, TT), lambda b, t: (b, 0, t)),
                pl.BlockSpec((None, Cin, 128), lambda b, t: (b, 0, (t + 1) * hb)),
                pl.BlockSpec((C1, KSIZE * Cin), lambda b, t: (0, 0)),
                pl.BlockSpec((C1, 1), lambda b, t: (0, 0)),
                pl.BlockSpec((C2_PAD, KSIZE * C1), lambda b, t: (0, 0)),
                pl.BlockSpec((C2_PAD, 1), lambda b, t: (0, 0)),
            ],
            out_specs=pl.BlockSpec((None, C2_PAD, TT), lambda b, t: (b, 0, t)),
            scratch_shapes=[
                pltpu.VMEM((KSIZE * Cin, TT + 2 * PAD), jnp.bfloat16),
                pltpu.VMEM((KSIZE * C1, TT), jnp.float32),
            ],
        ),
        compiler_params=pltpu.CompilerParams(
            dimension_semantics=("parallel", "parallel"),
            vmem_limit_bytes=vmem_limit,
        ),
    )(xpb, xpb, w1f, b1c, w2f, b2f)

    # Padded channel rows / time columns hold garbage by construction; any
    # consumer of the padded buffer must apply this slicing.
    spec = out_pad[:, :center, :Tout]
    phase = out_pad[:, CS_PAD:CS_PAD + Cphase, :Tout]
    return spec, phase


def make_params(key, *, cin=80, upsample_initial_channel=32, gen_istft_n_fft=16):
    """Deterministic synthetic parameters (weight_norm folded into the weights).

    Weights are stored tap-major as (KSIZE, C_out, C_in); biases as (C_out, 1).
    """
    c1 = upsample_initial_channel
    c2 = gen_istft_n_fft + 2
    k1, k2, k3, k4 = jax.random.split(key, 4)
    w1 = jax.random.normal(k1, (KSIZE, c1, cin), jnp.float32) * 0.05
    b1 = jax.random.normal(k2, (c1, 1), jnp.float32) * 0.01
    w2 = jax.random.normal(k3, (KSIZE, c2, c1), jnp.float32) * 0.01
    b2 = jax.random.normal(k4, (c2, 1), jnp.float32) * 0.01
    return {"w1": w1, "b1": b1, "w2": w2, "b2": b2}


def _reference_forward(x, params, *, gen_istft_n_fft):
    """Pure-JAX f32 reference matching the PyTorch module semantics."""
    w1, b1, w2, b2 = params["w1"], params["b1"], params["w2"], params["b2"]
    B, _, T = x.shape
    C1, C2 = w1.shape[1], w2.shape[1]
    center = gen_istft_n_fft // 2 + 1
    xpad = jnp.pad(x, ((0, 0), (0, 0), (PAD, PAD)))
    y = jnp.zeros((B, C1, T), jnp.float32) + b1[None]
    for k in range(KSIZE):
        y = y + jnp.einsum("oc,bct->bot", w1[k], xpad[:, :, k:k + T])
    y = jnp.where(y > 0, y, NEG_SLOPE * y)
    z = jnp.concatenate([y[:, :, 1:2], y], axis=2)            # ReflectionPad1d((1,0))
    zpad = jnp.pad(z, ((0, 0), (0, 0), (PAD, PAD)))
    out = jnp.zeros((B, C2, T + 1), jnp.float32) + b2[None]
    for k in range(KSIZE):
        out = out + jnp.einsum("oc,bct->bot", w2[k], zpad[:, :, k:k + T + 1])
    return jnp.exp(out[:, :center]), jnp.sin(out[:, center:])


if __name__ == "__main__":
    # small config: upsample_initial_channel=32, gen_istft_n_fft=16 -> center=9, C2=18
    GEN_ISTFT_N_FFT = 16
    B, CIN, T = 2, 80, 16

    key = jax.random.PRNGKey(0)
    kx, kx2, kp = jax.random.split(key, 3)
    x = jax.random.normal(kx, (B, CIN, T), jnp.float32)
    params = make_params(kp, cin=CIN, upsample_initial_channel=32,
                         gen_istft_n_fft=GEN_ISTFT_N_FFT)

    spec, phase = generator_conf_forward(x, params, gen_istft_n_fft=GEN_ISTFT_N_FFT)
    jax.block_until_ready((spec, phase))

    center = GEN_ISTFT_N_FFT // 2 + 1
    assert spec.shape == (B, center, T + 1), spec.shape
    assert phase.shape == (B, GEN_ISTFT_N_FFT + 2 - center, T + 1), phase.shape
    assert bool(jnp.all(spec > 0)), "spec must be exp(.) > 0"

    spec_ref, phase_ref = _reference_forward(x, params, gen_istft_n_fft=GEN_ISTFT_N_FFT)
    assert bool(jnp.allclose(spec, spec_ref, rtol=3e-2, atol=3e-2)), \
        float(jnp.max(jnp.abs(spec - spec_ref)))
    assert bool(jnp.allclose(phase, phase_ref, rtol=3e-2, atol=3e-2)), \
        float(jnp.max(jnp.abs(phase - phase_ref)))

    # Multi-tile case (tt_max=128 -> 3 time tiles) exercising the interior
    # (unmasked) tile path as well as both boundary tiles.
    T2 = 300
    x2 = jax.random.normal(kx2, (1, CIN, T2), jnp.float32)
    spec2, phase2 = generator_conf_forward(x2, params,
                                           gen_istft_n_fft=GEN_ISTFT_N_FFT,
                                           tt_max=128)
    jax.block_until_ready((spec2, phase2))
    spec2_ref, phase2_ref = _reference_forward(x2, params,
                                               gen_istft_n_fft=GEN_ISTFT_N_FFT)
    assert bool(jnp.allclose(spec2, spec2_ref, rtol=3e-2, atol=3e-2)), \
        float(jnp.max(jnp.abs(spec2 - spec2_ref)))
    assert bool(jnp.allclose(phase2, phase2_ref, rtol=3e-2, atol=3e-2)), \
        float(jnp.max(jnp.abs(phase2 - phase2_ref)))

    print("KERNEL_OK")
</pallas_src>

<mosaic_0001>
module attributes {stable_mosaic.version = 11 : i64} {
  func.func @_gen_kernel(%arg0: i32, %arg1: i32, %arg2: memref<1x80x128xbf16, #tpu.memory_space<vmem>>, %arg3: memref<1x80x128xbf16, #tpu.memory_space<vmem>>, %arg4: memref<32x560xbf16, #tpu.memory_space<vmem>>, %arg5: memref<32x1xf32, #tpu.memory_space<vmem>>, %arg6: memref<32x224xf32, #tpu.memory_space<vmem>>, %arg7: memref<32x1xf32, #tpu.memory_space<vmem>>, %arg8: memref<1x32x128xf32, #tpu.memory_space<vmem>>, %arg9: memref<560x134xbf16, #tpu.memory_space<vmem>>, %arg10: memref<224x128xf32, #tpu.memory_space<vmem>>) attributes {dimension_semantics = [#tpu.dimension_semantics<parallel>, #tpu.dimension_semantics<parallel>], iteration_bounds = array<i64: 2, 1>, scalar_prefetch = 0 : i64, scratch_operands = 2 : i64, tpu.core_type = #tpu.core_type<tc>, window_params = [{transform_indices = @transform_0, window_bounds = array<i64: 1, 80, 128>}, {transform_indices = @transform_1, window_bounds = array<i64: 1, 80, 128>}, {pipeline_mode = #tpu.pipeline_mode<synchronous>, transform_indices = @transform_2, window_bounds = array<i64: 32, 560>}, {pipeline_mode = #tpu.pipeline_mode<synchronous>, transform_indices = @transform_3, window_bounds = array<i64: 32, 1>}, {pipeline_mode = #tpu.pipeline_mode<synchronous>, transform_indices = @transform_4, window_bounds = array<i64: 32, 224>}, {pipeline_mode = #tpu.pipeline_mode<synchronous>, transform_indices = @transform_5, window_bounds = array<i64: 32, 1>}, {transform_indices = @transform_6, window_bounds = array<i64: 1, 32, 128>}]} {
    %c128_i32 = arith.constant 128 : i32
    %0 = arith.muli %arg1, %c128_i32 : i32
    %c0 = arith.constant 0 : index
    %c0_0 = arith.constant 0 : index
    %c0_1 = arith.constant 0 : index
    %1 = vector.load %arg2[%c0, %c0_0, %c0_1] : memref<1x80x128xbf16, #tpu.memory_space<vmem>>, vector<1x80x128xbf16>
    %2 = vector.shape_cast %1 : vector<1x80x128xbf16> to vector<80x128xbf16>
    %c0_2 = arith.constant 0 : index
    %c0_3 = arith.constant 0 : index
    %3 = vector.load %arg9[%c0_2, %c0_3] : memref<560x134xbf16, #tpu.memory_space<vmem>>, vector<80x128xbf16>
    tpu.vector_store %arg9[%c0_2, %c0_3], %2 {strides = array<i32>} : memref<560x134xbf16, #tpu.memory_space<vmem>>, vector<80x128xbf16>,
    %c0_4 = arith.constant 0 : index
    %c0_5 = arith.constant 0 : index
    %c0_6 = arith.constant 0 : index
    %4 = vector.load %arg3[%c0_4, %c0_5, %c0_6] : memref<1x80x128xbf16, #tpu.memory_space<vmem>>, vector<1x80x6xbf16>
    %5 = vector.shape_cast %4 : vector<1x80x6xbf16> to vector<80x6xbf16>
    %c0_7 = arith.constant 0 : index
    %c128 = arith.constant 128 : index
    %6 = vector.load %arg9[%c0_7, %c128] : memref<560x134xbf16, #tpu.memory_space<vmem>>, vector<80x6xbf16>
    tpu.vector_store %arg9[%c0_7, %c128], %5 {strides = array<i32>} : memref<560x134xbf16, #tpu.memory_space<vmem>>, vector<80x6xbf16>,
    %c0_8 = arith.constant 0 : index
    %c0_9 = arith.constant 0 : index
    %c1 = arith.constant 1 : index
    %7 = vector.load %arg2[%c0_8, %c0_9, %c1] : memref<1x80x128xbf16, #tpu.memory_space<vmem>>, vector<1x80x127xbf16>
    %8 = vector.shape_cast %7 : vector<1x80x127xbf16> to vector<80x127xbf16>
    %c80 = arith.constant 80 : index
    %c0_10 = arith.constant 0 : index
    %9 = vector.load %arg9[%c80, %c0_10] : memref<560x134xbf16, #tpu.memory_space<vmem>>, vector<80x127xbf16>
    tpu.vector_store %arg9[%c80, %c0_10], %8 {strides = array<i32>} : memref<560x134xbf16, #tpu.memory_space<vmem>>, vector<80x127xbf16>,
    %c0_11 = arith.constant 0 : index
    %c0_12 = arith.constant 0 : index
    %c0_13 = arith.constant 0 : index
    %10 = vector.load %arg3[%c0_11, %c0_12, %c0_13] : memref<1x80x128xbf16, #tpu.memory_space<vmem>>, vector<1x80x7xbf16>
    %11 = vector.shape_cast %10 : vector<1x80x7xbf16> to vector<80x7xbf16>
    %c80_14 = arith.constant 80 : index
    %c127 = arith.constant 127 : index
    %12 = vector.load %arg9[%c80_14, %c127] : memref<560x134xbf16, #tpu.memory_space<vmem>>, vector<80x7xbf16>
    tpu.vector_store %arg9[%c80_14, %c127], %11 {strides = array<i32>} : memref<560x134xbf16, #tpu.memory_space<vmem>>, vector<80x7xbf16>,
    %c0_15 = arith.constant 0 : index
    %c0_16 = arith.constant 0 : index
    %c2 = arith.constant 2 : index
    %13 = vector.load %arg2[%c0_15, %c0_16, %c2] : memref<1x80x128xbf16, #tpu.memory_space<vmem>>, vector<1x80x126xbf16>
    %14 = vector.shape_cast %13 : vector<1x80x126xbf16> to vector<80x126xbf16>
    %c160 = arith.constant 160 : index
    %c0_17 = arith.constant 0 : index
    %15 = vector.load %arg9[%c160, %c0_17] : memref<560x134xbf16, #tpu.memory_space<vmem>>, vector<80x126xbf16>
    tpu.vector_store %arg9[%c160, %c0_17], %14 {strides = array<i32>} : memref<560x134xbf16, #tpu.memory_space<vmem>>, vector<80x126xbf16>,
    %c0_18 = arith.constant 0 : index
    %c0_19 = arith.constant 0 : index
    %c0_20 = arith.constant 0 : index
    %16 = vector.load %arg3[%c0_18, %c0_19, %c0_20] : memref<1x80x128xbf16, #tpu.memory_space<vmem>>, vector<1x80x8xbf16>
    %17 = vector.shape_cast %16 : vector<1x80x8xbf16> to vector<80x8xbf16>
    %c160_21 = arith.constant 160 : index
    %c126 = arith.constant 126 : index
    %18 = vector.load %arg9[%c160_21, %c126] : memref<560x134xbf16, #tpu.memory_space<vmem>>, vector<80x8xbf16>
    tpu.vector_store %arg9[%c160_21, %c126], %17 {strides = array<i32>} : memref<560x134xbf16, #tpu.memory_space<vmem>>, vector<80x8xbf16>,
    %c0_22 = arith.constant 0 : index
    %c0_23 = arith.constant 0 : index
    %c3 = arith.constant 3 : index
    %19 = vector.load %arg2[%c0_22, %c0_23, %c3] : memref<1x80x128xbf16, #tpu.memory_space<vmem>>, vector<1x80x125xbf16>
    %20 = vector.shape_cast %19 : vector<1x80x125xbf16> to vector<80x125xbf16>
    %c240 = arith.constant 240 : index
    %c0_24 = arith.constant 0 : index
    %21 = vector.load %arg9[%c240, %c0_24] : memref<560x134xbf16, #tpu.memory_space<vmem>>, vector<80x125xbf16>
    tpu.vector_store %arg9[%c240, %c0_24], %20 {strides = array<i32>} : memref<560x134xbf16, #tpu.memory_space<vmem>>, vector<80x125xbf16>,
    %c0_25 = arith.constant 0 : index
    %c0_26 = arith.constant 0 : index
    %c0_27 = arith.constant 0 : index
    %22 = vector.load %arg3[%c0_25, %c0_26, %c0_27] : memref<1x80x128xbf16, #tpu.memory_space<vmem>>, vector<1x80x9xbf16>
    %23 = vector.shape_cast %22 : vector<1x80x9xbf16> to vector<80x9xbf16>
    %c240_28 = arith.constant 240 : index
    %c125 = arith.constant 125 : index
    %24 = vector.load %arg9[%c240_28, %c125] : memref<560x134xbf16, #tpu.memory_space<vmem>>, vector<80x9xbf16>
    tpu.vector_store %arg9[%c240_28, %c125], %23 {strides = array<i32>} : memref<560x134xbf16, #tpu.memory_space<vmem>>, vector<80x9xbf16>,
    %c0_29 = arith.constant 0 : index
    %c0_30 = arith.constant 0 : index
    %c4 = arith.constant 4 : index
    %25 = vector.load %arg2[%c0_29, %c0_30, %c4] : memref<1x80x128xbf16, #tpu.memory_space<vmem>>, vector<1x80x124xbf16>
    %26 = vector.shape_cast %25 : vector<1x80x124xbf16> to vector<80x124xbf16>
    %c320 = arith.constant 320 : index
    %c0_31 = arith.constant 0 : index
    %27 = vector.load %arg9[%c320, %c0_31] : memref<560x134xbf16, #tpu.memory_space<vmem>>, vector<80x124xbf16>
    tpu.vector_store %arg9[%c320, %c0_31], %26 {strides = array<i32>} : memref<560x134xbf16, #tpu.memory_space<vmem>>, vector<80x124xbf16>,
    %c0_32 = arith.constant 0 : index
    %c0_33 = arith.constant 0 : index
    %c0_34 = arith.constant 0 : index
    %28 = vector.load %arg3[%c0_32, %c0_33, %c0_34] : memref<1x80x128xbf16, #tpu.memory_space<vmem>>, vector<1x80x10xbf16>
    %29 = vector.shape_cast %28 : vector<1x80x10xbf16> to vector<80x10xbf16>
    %c320_35 = arith.constant 320 : index
    %c124 = arith.constant 124 : index
    %30 = vector.load %arg9[%c320_35, %c124] : memref<560x134xbf16, #tpu.memory_space<vmem>>, vector<80x10xbf16>
    tpu.vector_store %arg9[%c320_35, %c124], %29 {strides = array<i32>} : memref<560x134xbf16, #tpu.memory_space<vmem>>, vector<80x10xbf16>,
    %c0_36 = arith.constant 0 : index
    %c0_37 = arith.constant 0 : index
    %c5 = arith.constant 5 : index
    %31 = vector.load %arg2[%c0_36, %c0_37, %c5] : memref<1x80x128xbf16, #tpu.memory_space<vmem>>, vector<1x80x123xbf16>
    %32 = vector.shape_cast %31 : vector<1x80x123xbf16> to vector<80x123xbf16>
    %c400 = arith.constant 400 : index
    %c0_38 = arith.constant 0 : index
    %33 = vector.load %arg9[%c400, %c0_38] : memref<560x134xbf16, #tpu.memory_space<vmem>>, vector<80x123xbf16>
    tpu.vector_store %arg9[%c400, %c0_38], %32 {strides = array<i32>} : memref<560x134xbf16, #tpu.memory_space<vmem>>, vector<80x123xbf16>,
    %c0_39 = arith.constant 0 : index
    %c0_40 = arith.constant 0 : index
    %c0_41 = arith.constant 0 : index
    %34 = vector.load %arg3[%c0_39, %c0_40, %c0_41] : memref<1x80x128xbf16, #tpu.memory_space<vmem>>, vector<1x80x11xbf16>
    %35 = vector.shape_cast %34 : vector<1x80x11xbf16> to vector<80x11xbf16>
    %c400_42 = arith.constant 400 : index
    %c123 = arith.constant 123 : index
    %36 = vector.load %arg9[%c400_42, %c123] : memref<560x134xbf16, #tpu.memory_space<vmem>>, vector<80x11xbf16>
    tpu.vector_store %arg9[%c400_42, %c123], %35 {strides = array<i32>} : memref<560x134xbf16, #tpu.memory_space<vmem>>, vector<80x11xbf16>,
    %c0_43 = arith.constant 0 : index
    %c0_44 = arith.constant 0 : index
    %c6 = arith.constant 6 : index
    %37 = vector.load %arg2[%c0_43, %c0_44, %c6] : memref<1x80x128xbf16, #tpu.memory_space<vmem>>, vector<1x80x122xbf16>
    %38 = vector.shape_cast %37 : vector<1x80x122xbf16> to vector<80x122xbf16>
    %c480 = arith.constant 480 : index
    %c0_45 = arith.constant 0 : index
    %39 = vector.load %arg9[%c480, %c0_45] : memref<560x134xbf16, #tpu.memory_space<vmem>>, vector<80x122xbf16>
    tpu.vector_store %arg9[%c480, %c0_45], %38 {strides = array<i32>} : memref<560x134xbf16, #tpu.memory_space<vmem>>, vector<80x122xbf16>,
    %c0_46 = arith.constant 0 : index
    %c0_47 = arith.constant 0 : index
    %c0_48 = arith.constant 0 : index
    %40 = vector.load %arg3[%c0_46, %c0_47, %c0_48] : memref<1x80x128xbf16, #tpu.memory_space<vmem>>, vector<1x80x12xbf16>
    %41 = vector.shape_cast %40 : vector<1x80x12xbf16> to vector<80x12xbf16>
    %c480_49 = arith.constant 480 : index
    %c122 = arith.constant 122 : index
    %42 = vector.load %arg9[%c480_49, %c122] : memref<560x134xbf16, #tpu.memory_space<vmem>>, vector<80x12xbf16>
    tpu.vector_store %arg9[%c480_49, %c122], %41 {strides = array<i32>} : memref<560x134xbf16, #tpu.memory_space<vmem>>, vector<80x12xbf16>,
    %c0_50 = arith.constant 0 : index
    %c0_51 = arith.constant 0 : index
    %43 = vector.load %arg4[%c0_50, %c0_51] : memref<32x560xbf16, #tpu.memory_space<vmem>>, vector<32x560xbf16>
    %c0_52 = arith.constant 0 : index
    %c0_53 = arith.constant 0 : index
    %44 = vector.load %arg9[%c0_52, %c0_53] : memref<560x134xbf16, #tpu.memory_space<vmem>>, vector<560x134xbf16>
    %cst = arith.constant dense<0.000000e+00> : vector<32x134xf32>
    %45 = tpu.matmul %43, %44, %cst {dimension_numbers = #tpu.dot_dimension_numbers<[1], [0], [0], [1], [0, 0, 1, 1], [], []>} : vector<32x560xbf16>, vector<560x134xbf16>, vector<32x134xf32> -> vector<32x134xf32>
    %c0_54 = arith.constant 0 : index
    %c0_55 = arith.constant 0 : index
    %46 = vector.load %arg5[%c0_54, %c0_55] : memref<32x1xf32, #tpu.memory_space<vmem>>, vector<32x1xf32>
    %47 = vector.broadcast %46 : vector<32x1xf32> to vector<32x134xf32>
    %48 = arith.addf %45, %47 : vector<32x134xf32>
    %cst_56 = arith.constant 0.000000e+00 : f32
    %49 = vector.broadcast %cst_56 : f32 to vector<32x134xf32>
    %50 = arith.cmpf ogt, %48, %49 : vector<32x134xf32>
    %cst_57 = arith.constant 0.00999999977 : f32
    %51 = vector.broadcast %cst_57 : f32 to vector<32x134xf32>
    %52 = arith.mulf %51, %48 : vector<32x134xf32>
    %53 = arith.select %50, %48, %52 : vector<32x134xi1>, vector<32x134xf32>
    %c0_i32 = arith.constant 0 : i32
    %54 = arith.cmpi eq, %arg1, %c0_i32 : i32
    %c128_i32_58 = arith.constant 128 : i32
    %55 = arith.addi %0, %c128_i32_58 : i32
    %c3_i32 = arith.constant 3 : i32
    %56 = arith.addi %55, %c3_i32 : i32
    %c1_i32 = arith.constant 1 : i32
    %57 = arith.subi %56, %c1_i32 : i32
    %c16_i32 = arith.constant 16 : i32
    %58 = arith.cmpi sgt, %57, %c16_i32 : i32
    %59 = arith.ori %54, %58 : i1
    %true = arith.constant true
    %60 = arith.xori %59, %true : i1
    %61 = arith.extui %60 : i1 to i32
    %c0_i32_59 = arith.constant 0 : i32
    %62 = arith.cmpi ne, %61, %c0_i32_59 : i32
    scf.if %62 {
      %81 = vector.extract_strided_slice %53 {offsets = [0, 0], sizes = [32, 128], strides = [1, 1]} : vector<32x134xf32> to vector<32x128xf32>
      %c0_73 = arith.constant 0 : index
      %c0_74 = arith.constant 0 : index
      %82 = vector.load %arg10[%c0_73, %c0_74] : memref<224x128xf32, #tpu.memory_space<vmem>>, vector<32x128xf32>
      tpu.vector_store %arg10[%c0_73, %c0_74], %81 {strides = array<i32>} : memref<224x128xf32, #tpu.memory_space<vmem>>, vector<32x128xf32>,
      %83 = vector.extract_strided_slice %53 {offsets = [0, 1], sizes = [32, 128], strides = [1, 1]} : vector<32x134xf32> to vector<32x128xf32>
      %c32 = arith.constant 32 : index
      %c0_75 = arith.constant 0 : index
      %84 = vector.load %arg10[%c32, %c0_75] : memref<224x128xf32, #tpu.memory_space<vmem>>, vector<32x128xf32>
      tpu.vector_store %arg10[%c32, %c0_75], %83 {strides = array<i32>} : memref<224x128xf32, #tpu.memory_space<vmem>>, vector<32x128xf32>,
      %85 = vector.extract_strided_slice %53 {offsets = [0, 2], sizes = [32, 128], strides = [1, 1]} : vector<32x134xf32> to vector<32x128xf32>
      %c64 = arith.constant 64 : index
      %c0_76 = arith.constant 0 : index
      %86 = vector.load %arg10[%c64, %c0_76] : memref<224x128xf32, #tpu.memory_space<vmem>>, vector<32x128xf32>
      tpu.vector_store %arg10[%c64, %c0_76], %85 {strides = array<i32>} : memref<224x128xf32, #tpu.memory_space<vmem>>, vector<32x128xf32>,
      %87 = vector.extract_strided_slice %53 {offsets = [0, 3], sizes = [32, 128], strides = [1, 1]} : vector<32x134xf32> to vector<32x128xf32>
      %c96 = arith.constant 96 : index
      %c0_77 = arith.constant 0 : index
      %88 = vector.load %arg10[%c96, %c0_77] : memref<224x128xf32, #tpu.memory_space<vmem>>, vector<32x128xf32>
      tpu.vector_store %arg10[%c96, %c0_77], %87 {strides = array<i32>} : memref<224x128xf32, #tpu.memory_space<vmem>>, vector<32x128xf32>,
      %89 = vector.extract_strided_slice %53 {offsets = [0, 4], sizes = [32, 128], strides = [1, 1]} : vector<32x134xf32> to vector<32x128xf32>
      %c128_78 = arith.constant 128 : index
      %c0_79 = arith.constant 0 : index
      %90 = vector.load %arg10[%c128_78, %c0_79] : memref<224x128xf32, #tpu.memory_space<vmem>>, vector<32x128xf32>
      tpu.vector_store %arg10[%c128_78, %c0_79], %89 {strides = array<i32>} : memref<224x128xf32, #tpu.memory_space<vmem>>, vector<32x128xf32>,
      %91 = vector.extract_strided_slice %53 {offsets = [0, 5], sizes = [32, 128], strides = [1, 1]} : vector<32x134xf32> to vector<32x128xf32>
      %c160_80 = arith.constant 160 : index
      %c0_81 = arith.constant 0 : index
      %92 = vector.load %arg10[%c160_80, %c0_81] : memref<224x128xf32, #tpu.memory_space<vmem>>, vector<32x128xf32>
      tpu.vector_store %arg10[%c160_80, %c0_81], %91 {strides = array<i32>} : memref<224x128xf32, #tpu.memory_space<vmem>>, vector<32x128xf32>,
      %93 = vector.extract_strided_slice %53 {offsets = [0, 6], sizes = [32, 128], strides = [1, 1]} : vector<32x134xf32> to vector<32x128xf32>
      %c192 = arith.constant 192 : index
      %c0_82 = arith.constant 0 : index
      %94 = vector.load %arg10[%c192, %c0_82] : memref<224x128xf32, #tpu.memory_space<vmem>>, vector<32x128xf32>
      tpu.vector_store %arg10[%c192, %c0_82], %93 {strides = array<i32>} : memref<224x128xf32, #tpu.memory_space<vmem>>, vector<32x128xf32>,
    } else {
    }
    %63 = arith.extui %59 : i1 to i32
    %c0_i32_60 = arith.constant 0 : i32
    %64 = arith.cmpi ne, %63, %c0_i32_60 : i32
    scf.if %64 {
      %81 = tpu.iota {dimensions = array<i32: 1>} : vector<32x134xi32>
      %c4_i32 = arith.constant 4 : i32
      %82 = arith.subi %0, %c4_i32 : i32
      %c1_i32_73 = arith.constant 1 : i32
      %83 = arith.addi %82, %c1_i32_73 : i32
      %84 = vector.broadcast %83 : i32 to vector<32x134xi32>
      %85 = arith.addi %81, %84 : vector<32x134xi32>
      %c1_i32_74 = arith.constant 1 : i32
      %86 = vector.broadcast %c1_i32_74 : i32 to vector<32x134xi32>
      %87 = arith.cmpi sge, %85, %86 : vector<32x134xi32>
      %c16_i32_75 = arith.constant 16 : i32
      %88 = vector.broadcast %c16_i32_75 : i32 to vector<32x134xi32>
      %89 = arith.cmpi sle, %85, %88 : vector<32x134xi32>
      %90 = arith.andi %87, %89 : vector<32x134xi1>
      %cst_76 = arith.constant 0.000000e+00 : f32
      %91 = vector.broadcast %cst_76 : f32 to vector<32x134xf32>
      %92 = arith.select %90, %53, %91 : vector<32x134xi1>, vector<32x134xf32>
      %c0_i32_77 = arith.constant 0 : i32
      %93 = vector.broadcast %c0_i32_77 : i32 to vector<32x134xi32>
      %94 = arith.cmpi eq, %85, %93 : vector<32x134xi32>
      %95 = vector.extract_strided_slice %53 {offsets = [0, 5], sizes = [32, 1], strides = [1, 1]} : vector<32x134xf32> to vector<32x1xf32>
      %96 = vector.shape_cast %95 : vector<32x1xf32> to vector<32x1xf32>
      %97 = vector.broadcast %96 : vector<32x1xf32> to vector<32x134xf32>
      %98 = arith.select %94, %97, %92 : vector<32x134xi1>, vector<32x134xf32>
      %99 = vector.extract_strided_slice %98 {offsets = [0, 0], sizes = [32, 128], strides = [1, 1]} : vector<32x134xf32> to vector<32x128xf32>
      %c0_78 = arith.constant 0 : index
      %c0_79 = arith.constant 0 : index
      %100 = vector.load %arg10[%c0_78, %c0_79] : memref<224x128xf32, #tpu.memory_space<vmem>>, vector<32x128xf32>
      tpu.vector_store %arg10[%c0_78, %c0_79], %99 {strides = array<i32>} : memref<224x128xf32, #tpu.memory_space<vmem>>, vector<32x128xf32>,
      %101 = vector.extract_strided_slice %98 {offsets = [0, 1], sizes = [32, 128], strides = [1, 1]} : vector<32x134xf32> to vector<32x128xf32>
      %c32 = arith.constant 32 : index
      %c0_80 = arith.constant 0 : index
      %102 = vector.load %arg10[%c32, %c0_80] : memref<224x128xf32, #tpu.memory_space<vmem>>, vector<32x128xf32>
      tpu.vector_store %arg10[%c32, %c0_80], %101 {strides = array<i32>} : memref<224x128xf32, #tpu.memory_space<vmem>>, vector<32x128xf32>,
      %103 = vector.extract_strided_slice %98 {offsets = [0, 2], sizes = [32, 128], strides = [1, 1]} : vector<32x134xf32> to vector<32x128xf32>
      %c64 = arith.constant 64 : index
      %c0_81 = arith.constant 0 : index
      %104 = vector.load %arg10[%c64, %c0_81] : memref<224x128xf32, #tpu.memory_space<vmem>>, vector<32x128xf32>
      tpu.vector_store %arg10[%c64, %c0_81], %103 {strides = array<i32>} : memref<224x128xf32, #tpu.memory_space<vmem>>, vector<32x128xf32>,
      %105 = vector.extract_strided_slice %98 {offsets = [0, 3], sizes = [32, 128], strides = [1, 1]} : vector<32x134xf32> to vector<32x128xf32>
      %c96 = arith.constant 96 : index
      %c0_82 = arith.constant 0 : index
      %106 = vector.load %arg10[%c96, %c0_82] : memref<224x128xf32, #tpu.memory_space<vmem>>, vector<32x128xf32>
      tpu.vector_store %arg10[%c96, %c0_82], %105 {strides = array<i32>} : memref<224x128xf32, #tpu.memory_space<vmem>>, vector<32x128xf32>,
      %107 = vector.extract_strided_slice %98 {offsets = [0, 4], sizes = [32, 128], strides = [1, 1]} : vector<32x134xf32> to vector<32x128xf32>
      %c128_83 = arith.constant 128 : index
      %c0_84 = arith.constant 0 : index
      %108 = vector.load %arg10[%c128_83, %c0_84] : memref<224x128xf32, #tpu.memory_space<vmem>>, vector<32x128xf32>
      tpu.vector_store %arg10[%c128_83, %c0_84], %107 {strides = array<i32>} : memref<224x128xf32, #tpu.memory_space<vmem>>, vector<32x128xf32>,
      %109 = vector.extract_strided_slice %98 {offsets = [0, 5], sizes = [32, 128], strides = [1, 1]} : vector<32x134xf32> to vector<32x128xf32>
      %c160_85 = arith.constant 160 : index
      %c0_86 = arith.constant 0 : index
      %110 = vector.load %arg10[%c160_85, %c0_86] : memref<224x128xf32, #tpu.memory_space<vmem>>, vector<32x128xf32>
      tpu.vector_store %arg10[%c160_85, %c0_86], %109 {strides = array<i32>} : memref<224x128xf32, #tpu.memory_space<vmem>>, vector<32x128xf32>,
      %111 = vector.extract_strided_slice %98 {offsets = [0, 6], sizes = [32, 128], strides = [1, 1]} : vector<32x134xf32> to vector<32x128xf32>
      %c192 = arith.constant 192 : index
      %c0_87 = arith.constant 0 : index
      %112 = vector.load %arg10[%c192, %c0_87] : memref<224x128xf32, #tpu.memory_space<vmem>>, vector<32x128xf32>
      tpu.vector_store %arg10[%c192, %c0_87], %111 {strides = array<i32>} : memref<224x128xf32, #tpu.memory_space<vmem>>, vector<32x128xf32>,
    } else {
    }
    %c0_61 = arith.constant 0 : index
    %c0_62 = arith.constant 0 : index
    %65 = vector.load %arg6[%c0_61, %c0_62] : memref<32x224xf32, #tpu.memory_space<vmem>>, vector<32x224xf32>
    %c0_63 = arith.constant 0 : index
    %c0_64 = arith.constant 0 : index
    %66 = vector.load %arg10[%c0_63, %c0_64] : memref<224x128xf32, #tpu.memory_space<vmem>>, vector<224x128xf32>
    %cst_65 = arith.constant dense<0.000000e+00> : vector<32x128xf32>
    %67 = tpu.matmul %65, %66, %cst_65 {dimension_numbers = #tpu.dot_dimension_numbers<[1], [0], [0], [1], [0, 0, 1, 1], [], []>} : vector<32x224xf32>, vector<224x128xf32>, vector<32x128xf32> -> vector<32x128xf32>
    %c0_66 = arith.constant 0 : index
    %c0_67 = arith.constant 0 : index
    %68 = vector.load %arg7[%c0_66, %c0_67] : memref<32x1xf32, #tpu.memory_space<vmem>>, vector<32x1xf32>
    %69 = vector.broadcast %68 : vector<32x1xf32> to vector<32x128xf32>
    %70 = arith.addf %67, %69 : vector<32x128xf32>
    %71 = vector.extract_strided_slice %70 {offsets = [0, 0], sizes = [16, 128], strides = [1, 1]} : vector<32x128xf32> to vector<16x128xf32>
    %72 = math.exp %71 : vector<16x128xf32>
    %c0_68 = arith.constant 0 : index
    %c0_69 = arith.constant 0 : index
    %c0_70 = arith.constant 0 : index
    %73 = vector.load %arg8[%c0_68, %c0_69, %c0_70] : memref<1x32x128xf32, #tpu.memory_space<vmem>>, vector<1x16x128xf32>
    %74 = vector.shape_cast %73 : vector<1x16x128xf32> to vector<16x128xf32>
    %75 = vector.shape_cast %72 : vector<16x128xf32> to vector<1x16x128xf32>
    tpu.vector_store %arg8[%c0_68, %c0_69, %c0_70], %75 {strides = array<i32>} : memref<1x32x128xf32, #tpu.memory_space<vmem>>, vector<1x16x128xf32>,
    %76 = vector.extract_strided_slice %70 {offsets = [16, 0], sizes = [16, 128], strides = [1, 1]} : vector<32x128xf32> to vector<16x128xf32>
    %77 = math.sin %76 : vector<16x128xf32>
    %c0_71 = arith.constant 0 : index
    %c16 = arith.constant 16 : index
    %c0_72 = arith.constant 0 : index
    %78 = vector.load %arg8[%c0_71, %c16, %c0_72] : memref<1x32x128xf32, #tpu.memory_space<vmem>>, vector<1x16x128xf32>
    %79 = vector.shape_cast %78 : vector<1x16x128xf32> to vector<16x128xf32>
    %80 = vector.shape_cast %77 : vector<16x128xf32> to vector<1x16x128xf32>
    tpu.vector_store %arg8[%c0_71, %c16, %c0_72], %80 {strides = array<i32>} : memref<1x32x128xf32, #tpu.memory_space<vmem>>, vector<1x16x128xf32>,
    return
  }
  func.func @transform_0(%arg0: i32, %arg1: i32) -> (i32, i32, i32) {
    %c0_i32 = arith.constant 0 : i32
    %c0_i32_0 = arith.constant 0 : i32
    return %arg0, %c0_i32, %arg1 : i32, i32, i32
  }
  func.func @transform_1(%arg0: i32, %arg1: i32) -> (i32, i32, i32) {
    %c1_i32 = arith.constant 1 : i32
    %0 = arith.addi %arg1, %c1_i32 : i32
    %c1_i32_0 = arith.constant 1 : i32
    %1 = arith.muli %0, %c1_i32_0 : i32
    %c0_i32 = arith.constant 0 : i32
    %c0_i32_1 = arith.constant 0 : i32
    return %arg0, %c0_i32, %1 : i32, i32, i32
  }
  func.func @transform_2(%arg0: i32, %arg1: i32) -> (i32, i32) {
    %c0_i32 = arith.constant 0 : i32
    %c0_i32_0 = arith.constant 0 : i32
    %c0_i32_1 = arith.constant 0 : i32
    return %c0_i32, %c0_i32_0 : i32, i32
  }
  func.func @transform_3(%arg0: i32, %arg1: i32) -> (i32, i32) {
    %c0_i32 = arith.constant 0 : i32
    %c0_i32_0 = arith.constant 0 : i32
    %c0_i32_1 = arith.constant 0 : i32
    return %c0_i32, %c0_i32_0 : i32, i32
  }
  func.func @transform_4(%arg0: i32, %arg1: i32) -> (i32, i32) {
    %c0_i32 = arith.constant 0 : i32
    %c0_i32_0 = arith.constant 0 : i32
    %c0_i32_1 = arith.constant 0 : i32
    return %c0_i32, %c0_i32_0 : i32, i32
  }
  func.func @transform_5(%arg0: i32, %arg1: i32) -> (i32, i32) {
    %c0_i32 = arith.constant 0 : i32
    %c0_i32_0 = arith.constant 0 : i32
    %c0_i32_1 = arith.constant 0 : i32
    return %c0_i32, %c0_i32_0 : i32, i32
  }
  func.func @transform_6(%arg0: i32, %arg1: i32) -> (i32, i32, i32) {
    %c0_i32 = arith.constant 0 : i32
    %c0_i32_0 = arith.constant 0 : i32
    return %arg0, %c0_i32, %arg1 : i32, i32, i32
  }
}

</mosaic_0001>

<llo_original>
// kernel: generator_conf_forward.1
$region0: #{generator_conf_forward.1}
  #allocation0 [shape = 'u32[]', space=smem, size = 0x4, offset = 0x4, fixed_abs, tag = 'smem constant byte address 0x4 - core index']
  #allocation1 [shape = 'u32[72,128]{1,0:T(1,128)}', space=vmem, size = 0x9000, scoped, tag = 'internal scratch']
  #allocation2 [shape = 'bf16[560,134]{1,0:T(8,128)(2,1)}', space=vmem, size = 0x46000, scoped, tag = 'scratch operand']
  #allocation3 [shape = 'f32[224,128]{1,0:T(8,128)}', space=vmem, size = 0x1c000, scoped, tag = 'scratch operand']
  %s0 = inlined_call_operand.vmem [shape: bf16[2,80,256], index: 0, kind: input, shape index: {}, may-alias: {0,1}]
  %s1 = inlined_call_operand.vmem [shape: bf16[2,80,256], index: 1, kind: input, shape index: {}, may-alias: {0,1}]
  %s2 = inlined_call_operand.vmem [shape: bf16[32,560], index: 2, kind: input, shape index: {}]
  %s3 = inlined_call_operand.vmem [shape: f32[32,1], index: 3, kind: input, shape index: {}]
  %s4 = inlined_call_operand.vmem [shape: f32[32,224], index: 4, kind: input, shape index: {}]
  %s5 = inlined_call_operand.vmem [shape: f32[32,1], index: 5, kind: input, shape index: {}]
  %s6 = inlined_call_operand.vmem [shape: f32[2,32,128], index: 6, kind: output, shape index: {}]
  %s7 = sld [smem:[#allocation0]]
  $region147: #{generator_conf_forward.1} parent=0
    _
  %s9 = ssub.s32 1, %s7
  %s10 = scalar_select 0, %s9, %s7
  $region1: #{generator_conf_forward.1} parent=0
    #allocation4 [shape = 'u8[40960]{0}', space=vmem, size = 0xa000, scoped, tag = 'input window, operand 0']
    #allocation5 [shape = 'u8[40960]{0}', space=vmem, size = 0xa000, scoped, tag = 'input window, operand 1']
    loop: start=0, step=1, limit=4
    $region2: #{generator_conf_forward.1} parent=1 // loop_pre_header
      _
    $region3: #{generator_conf_forward.1} parent=1 // loop_header
      %s12 = sphi 0, %s16
      %p13 = scmp.ge.s32.totalorder %s12, 4
      %s19 = sphi 0, %s31
      %s20 = sphi 0, %s27
      %s21 = sphi 0, %s19
      %s22 = sphi 0, %s20
      %s23 = sphi 0, %s21
      %s24 = sphi 0, %s22
      %s36 = sphi 0, %s38
      %s39 = sphi 0, %s36
      %s40 = sphi 0, %s39
      %s56 = sphi 0, %s40
      %s66 = sphi 0, %s68
      %s69 = sphi 0, %s66
      %s70 = sphi 0, %s69
      %s86 = sphi 0, %s70
      %s90 = sphi 0, %s90
      %s92 = sphi 0, %s90
      %s93 = sphi 0, %s92
      %s107 = sphi 0, %s93
      %s111 = sphi 0, %s111
      %s113 = sphi 0, %s111
      %s114 = sphi 0, %s113
      %s128 = sphi 0, %s114
      %s132 = sphi 0, %s132
      %s134 = sphi 0, %s132
      %s135 = sphi 0, %s134
      %s149 = sphi 0, %s135
      %s153 = sphi 0, %s153
      %s155 = sphi 0, %s153
      %s156 = sphi 0, %s155
      %s170 = sphi 0, %s156
      %s178 = sphi 0, %s180
      %s181 = sphi 0, %s178
      %s182 = sphi 0, %s181
      %s198 = sphi 0, %s182
    $region4: #{generator_conf_forward.1} parent=1 // loop_header_branch
      %15 = sbr.rel (%p13) target = $region8
    $region5: #{generator_conf_forward.1} parent=1 // loop_body
      %s17 = ssub.s32 %s12, 1
      %s18 = ssub.s32 %s12, 2
      %s25 = sadd.s32 1, %s20
      %p26 = scmp.ge.s32.totalorder %s25, 1
      %s27 = scalar_select %p26, 0, %s25
      %s28 = sadd.s32 1, %s19
      %s29 = scalar_select %p26, %s28, %s19
      %p30 = scmp.ge.s32.totalorder %s29, 2
      %s31 = scalar_select %p30, 0, %s29
      %s32 = ssub.s32 %s19, %s31
      %s33 = ssub.s32 %s20, %s27
      %s34 = sor.u32 %s32, %s33
      %p35 = scmp.eq.s32.totalorder %s34, 0
      %s37 = sadd.s32 %s36, 1
      %s38 = scalar_select %p35, %s36, %s37
      %p41 = pneg %p35
      %p42 = scmp.eq.s32.totalorder %s12, 1
      %p43 = por %p41, %p42
      %p44 = scmp.ne.s32.totalorder %s36, %s39
      %p45 = scmp.eq.s32.totalorder %s12, 0
      %p46 = por %p44, %p45
      %p47 = scmp.ne.s32.totalorder %s36, %s39
      %p48 = scmp.eq.s32.totalorder %s17, 1
      %p49 = por %p47, %p48
      %p50 = scmp.ne.s32.totalorder %s39, %s40
      %p51 = scmp.eq.s32.totalorder %s17, 0
      %p52 = por %p50, %p51
      %p53 = scmp.ne.s32.totalorder %s39, %s40
      %p54 = scmp.eq.s32.totalorder %s18, 1
      %p55 = por %p53, %p54
      %p57 = scmp.ne.s32.totalorder %s40, %s56
      %p58 = scmp.eq.s32.totalorder %s18, 0
      %p59 = por %p57, %p58
      %s60 = sadd.s32 %s20, 1
      %s61 = sadd.s32 %s27, 1
      %s62 = ssub.s32 %s19, %s31
      %s63 = ssub.s32 %s60, %s61
      %s64 = sor.u32 %s62, %s63
      %p65 = scmp.eq.s32.totalorder %s64, 0
      %s67 = sadd.s32 %s66, 1
      %s68 = scalar_select %p65, %s66, %s67
      %p71 = pneg %p65
      %p72 = scmp.eq.s32.totalorder %s12, 1
      %p73 = por %p71, %p72
      %p74 = scmp.ne.s32.totalorder %s66, %s69
      %p75 = scmp.eq.s32.totalorder %s12, 0
      %p76 = por %p74, %p75
      %p77 = scmp.ne.s32.totalorder %s66, %s69
      %p78 = scmp.eq.s32.totalorder %s17, 1
      %p79 = por %p77, %p78
      %p80 = scmp.ne.s32.totalorder %s69, %s70
      %p81 = scmp.eq.s32.totalorder %s17, 0
      %p82 = por %p80, %p81
      %p83 = scmp.ne.s32.totalorder %s69, %s70
      %p84 = scmp.eq.s32.totalorder %s18, 1
      %p85 = por %p83, %p84
      %p87 = scmp.ne.s32.totalorder %s70, %s86
      %p88 = scmp.eq.s32.totalorder %s18, 0
      %p89 = por %p87, %p88
      %s91 = sadd.s32 %s90, 1
      %p94 = scmp.eq.s32.totalorder %s12, 1
      %p95 = scmp.ne.s32.totalorder %s90, %s92
      %p96 = scmp.eq.s32.totalorder %s12, 0
      %p97 = por %p95, %p96
      %p98 = scmp.ne.s32.totalorder %s90, %s92
      %p99 = scmp.eq.s32.totalorder %s17, 1
      %p100 = por %p98, %p99
      %p101 = scmp.ne.s32.totalorder %s92, %s93
      %p102 = scmp.eq.s32.totalorder %s17, 0
      %p103 = por %p101, %p102
      %p104 = scmp.ne.s32.totalorder %s92, %s93
      %p105 = scmp.eq.s32.totalorder %s18, 1
      %p106 = por %p104, %p105
      %p108 = scmp.ne.s32.totalorder %s93, %s107
      %p109 = scmp.eq.s32.totalorder %s18, 0
      %p110 = por %p108, %p109
      %s112 = sadd.s32 %s111, 1
      %p115 = scmp.eq.s32.totalorder %s12, 1
      %p116 = scmp.ne.s32.totalorder %s111, %s113
      %p117 = scmp.eq.s32.totalorder %s12, 0
      %p118 = por %p116, %p117
      %p119 = scmp.ne.s32.totalorder %s111, %s113
      %p120 = scmp.eq.s32.totalorder %s17, 1
      %p121 = por %p119, %p120
      %p122 = scmp.ne.s32.totalorder %s113, %s114
      %p123 = scmp.eq.s32.totalorder %s17, 0
      %p124 = por %p122, %p123
      %p125 = scmp.ne.s32.totalorder %s113, %s114
      %p126 = scmp.eq.s32.totalorder %s18, 1
      %p127 = por %p125, %p126
      %p129 = scmp.ne.s32.totalorder %s114, %s128
      %p130 = scmp.eq.s32.totalorder %s18, 0
      %p131 = por %p129, %p130
      %s133 = sadd.s32 %s132, 1
      %p136 = scmp.eq.s32.totalorder %s12, 1
      %p137 = scmp.ne.s32.totalorder %s132, %s134
      %p138 = scmp.eq.s32.totalorder %s12, 0
      %p139 = por %p137, %p138
      %p140 = scmp.ne.s32.totalorder %s132, %s134
      %p141 = scmp.eq.s32.totalorder %s17, 1
      %p142 = por %p140, %p141
      %p143 = scmp.ne.s32.totalorder %s134, %s135
      %p144 = scmp.eq.s32.totalorder %s17, 0
      %p145 = por %p143, %p144
      %p146 = scmp.ne.s32.totalorder %s134, %s135
      %p147 = scmp.eq.s32.totalorder %s18, 1
      %p148 = por %p146, %p147
      %p150 = scmp.ne.s32.totalorder %s135, %s149
      %p151 = scmp.eq.s32.totalorder %s18, 0
      %p152 = por %p150, %p151
      %s154 = sadd.s32 %s153, 1
      %p157 = scmp.eq.s32.totalorder %s12, 1
      %p158 = scmp.ne.s32.totalorder %s153, %s155
      %p159 = scmp.eq.s32.totalorder %s12, 0
      %p160 = por %p158, %p159
      %p161 = scmp.ne.s32.totalorder %s153, %s155
      %p162 = scmp.eq.s32.totalorder %s17, 1
      %p163 = por %p161, %p162
      %p164 = scmp.ne.s32.totalorder %s155, %s156
      %p165 = scmp.eq.s32.totalorder %s17, 0
      %p166 = por %p164, %p165
      %p167 = scmp.ne.s32.totalorder %s155, %s156
      %p168 = scmp.eq.s32.totalorder %s18, 1
      %p169 = por %p167, %p168
      %p171 = scmp.ne.s32.totalorder %s156, %s170
      %p172 = scmp.eq.s32.totalorder %s18, 0
      %p173 = por %p171, %p172
      %s174 = ssub.s32 %s19, %s31
      %s175 = ssub.s32 %s20, %s27
      %s176 = sor.u32 %s174, %s175
      %p177 = scmp.eq.s32.totalorder %s176, 0
      %s179 = sadd.s32 %s178, 1
      %s180 = scalar_select %p177, %s178, %s179
      %p183 = pneg %p177
      %p184 = scmp.eq.s32.totalorder %s12, 1
      %p185 = por %p183, %p184
      %p186 = scmp.ne.s32.totalorder %s178, %s181
      %p187 = scmp.eq.s32.totalorder %s12, 0
      %p188 = por %p186, %p187
      %p189 = scmp.ne.s32.totalorder %s178, %s181
      %p190 = scmp.eq.s32.totalorder %s17, 1
      %p191 = por %p189, %p190
      %p192 = scmp.ne.s32.totalorder %s181, %s182
      %p193 = scmp.eq.s32.totalorder %s17, 0
      %p194 = por %p192, %p193
      %p195 = scmp.ne.s32.totalorder %s181, %s182
      %p196 = scmp.eq.s32.totalorder %s18, 1
      %p197 = por %p195, %p196
      %p199 = scmp.ne.s32.totalorder %s182, %s198
      %p200 = scmp.eq.s32.totalorder %s18, 0
      %p201 = por %p199, %p200
      %p202 = scmp.le.s32.totalorder 1, %s12
      %p203 = scmp.lt.s32.totalorder %s12, 3
      %p204 = pnand %p202, %p203
      %p205 = pneg %p204
      // Predicated region
      $region9: #{generator_conf_forward.1} parent=5 // pred_check
        _
      $region10: #{generator_conf_forward.1} parent=5 // pred_check_branch
        %207 = sbr.rel (%p204) target = $region12
      $region11: #{generator_conf_forward.1} parent=5 // pred_region
        %s208 = ssub.s32 %s12, 1
        // Predicated region
        $region13: #{generator_conf_forward.1} parent=11 // pred_check
          %p209 = pneg %p103
        $region14: #{generator_conf_forward.1} parent=11 // pred_check_branch
          %211 = sbr.rel (%p209) target = $region16
        $region15: #{generator_conf_forward.1} parent=11 // pred_region
          _
        $region16: #{generator_conf_forward.1} parent=11 // pred_fallthru
          _
        // Predicated region
        $region17: #{generator_conf_forward.1} parent=11 // pred_check
          %p212 = pneg %p124
        $region18: #{generator_conf_forward.1} parent=11 // pred_check_branch
          %214 = sbr.rel (%p212) target = $region20
        $region19: #{generator_conf_forward.1} parent=11 // pred_region
          _
        $region20: #{generator_conf_forward.1} parent=11 // pred_fallthru
          _
        // Predicated region
        $region21: #{generator_conf_forward.1} parent=11 // pred_check
          %p215 = pneg %p145
        $region22: #{generator_conf_forward.1} parent=11 // pred_check_branch
          %217 = sbr.rel (%p215) target = $region24
        $region23: #{generator_conf_forward.1} parent=11 // pred_region
          _
        $region24: #{generator_conf_forward.1} parent=11 // pred_fallthru
          _
        // Predicated region
        $region25: #{generator_conf_forward.1} parent=11 // pred_check
          %p218 = pneg %p166
        $region26: #{generator_conf_forward.1} parent=11 // pred_check_branch
          %220 = sbr.rel (%p218) target = $region28
        $region27: #{generator_conf_forward.1} parent=11 // pred_region
          _
        $region28: #{generator_conf_forward.1} parent=11 // pred_fallthru
          _
      $region12: #{generator_conf_forward.1} parent=5 // pred_fallthru
        _
      %p221 = scmp.lt.s32.totalorder %s12, 2
      // Predicated region
      $region29: #{generator_conf_forward.1} parent=5 // pred_check
        %p222 = pneg %p221
      $region30: #{generator_conf_forward.1} parent=5 // pred_check_branch
        %224 = sbr.rel (%p222) target = $region32
      $region31: #{generator_conf_forward.1} parent=5 // pred_region
        // Predicated region
        $region33: #{generator_conf_forward.1} parent=31 // pred_check
          %p225 = pneg %p46
        $region34: #{generator_conf_forward.1} parent=31 // pred_check_branch
          %227 = sbr.rel (%p225) target = $region36
        $region35: #{generator_conf_forward.1} parent=31 // pred_region
          %s228 = sand.u32 %s36, 1
          %s229 = sand.u32 %s36, 1
          %s230 = smul.addr %s229, 40
          %s231 = scalar_lea.vmem [#allocation4], %s230
          %s232 = smul.addr %s19, 20
          %s233 = sadd.s32 %s20, %s232
          %s234 = smul.addr %s233, 4
          %s235 = scalar_lea.vmem %s0, %s234
          // Predicated region
          $region37: #{generator_conf_forward.1} parent=35 // pred_check
            _
          $region38: #{generator_conf_forward.1} parent=35 // pred_check_branch
            %237 = sbr.rel (0) target = $region40
          $region39: #{generator_conf_forward.1} parent=35 // pred_region
            // Predicated region
            $region41: #{generator_conf_forward.1} parent=39 // pred_check
              _
            $region42: #{generator_conf_forward.1} parent=39 // pred_check_branch
              %239 = sbr.rel target = $region44
            $region43: #{generator_conf_forward.1} parent=39 // pred_region
              // Predicated region
              $region56: #{generator_conf_forward.1} parent=43 // pred_check
                _
              $region57: #{generator_conf_forward.1} parent=43 // pred_check_branch
                %273 = sbr.rel (0) target = $region59
              $region58: #{generator_conf_forward.1} parent=43 // pred_region
                loop: start=0, step=1, limit=1
                $region60: #{generator_conf_forward.1} parent=58 // loop_pre_header
                  _
                $region61: #{generator_conf_forward.1} parent=58 // loop_header
                  %s275 = sphi 0, %s279
                  %p276 = scmp.ge.s32.totalorder %s275, 1
                  %s280 = sphi %s235, %s235
                  %s281 = sphi %s231, %s231
                $region62: #{generator_conf_forward.1} parent=58 // loop_header_branch
                  %278 = sbr.rel (%p276) target = $region66
                $region63: #{generator_conf_forward.1} parent=58 // loop_body
                  _
                $region64: #{generator_conf_forward.1} parent=58 // loop_footer
                  %s279 = sadd.s32 1, %s275
                $region65: #{generator_conf_forward.1} parent=58 // loop_footer_branch
                  %274 = sbr.rel target = $region61
                $region66: #{generator_conf_forward.1} parent=58 // loop_exit
                  _
                %s283 = ssub.s32 16, 1
                loop: start=0, step=1, limit=1
                $region67: #{generator_conf_forward.1} parent=58 // loop_pre_header
                  _
                $region68: #{generator_conf_forward.1} parent=58 // loop_header
                  %s285 = sphi 0, %s289
                  %p286 = scmp.ge.s32.totalorder %s285, 1
                  %s290 = sphi %s235, %s235
                  %s291 = sphi %s231, %s231
                $region69: #{generator_conf_forward.1} parent=58 // loop_header_branch
                  %288 = sbr.rel (%p286) target = $region73
                $region70: #{generator_conf_forward.1} parent=58 // loop_body
                  %v292 = vld [vmem:[%s290] sm:%s283]
                  %293 = vst [vmem:[%s291] sm:%s283] %v292
                  %v294 = vld [vmem:[%s290 + $0x8] sm:%s283]
                  %295 = vst [vmem:[%s291 + $0x4] sm:%s283] %v294
                  %v296 = vld [vmem:[%s290 + $0x10] sm:%s283]
                  %297 = vst [vmem:[%s291 + $0x8] sm:%s283] %v296
                  %v298 = vld [vmem:[%s290 + $0x18] sm:%s283]
                  %299 = vst [vmem:[%s291 + $0xc] sm:%s283] %v298
                  %v300 = vld [vmem:[%s290 + $0x20] sm:%s283]
                  %301 = vst [vmem:[%s291 + $0x10] sm:%s283] %v300
                  %v302 = vld [vmem:[%s290 + $0x28] sm:%s283]
                  %303 = vst [vmem:[%s291 + $0x14] sm:%s283] %v302
                  %v304 = vld [vmem:[%s290 + $0x30] sm:%s283]
                  %305 = vst [vmem:[%s291 + $0x18] sm:%s283] %v304
                  %v306 = vld [vmem:[%s290 + $0x38] sm:%s283]
                  %307 = vst [vmem:[%s291 + $0x1c] sm:%s283] %v306
                  %v308 = vld [vmem:[%s290 + $0x40] sm:%s283]
                  %309 = vst [vmem:[%s291 + $0x20] sm:%s283] %v308
                  %v310 = vld [vmem:[%s290 + $0x48] sm:%s283]
                  %311 = vst [vmem:[%s291 + $0x24] sm:%s283] %v310
                $region71: #{generator_conf_forward.1} parent=58 // loop_footer
                  %s289 = sadd.s32 1, %s285
                $region72: #{generator_conf_forward.1} parent=58 // loop_footer_branch
                  %284 = sbr.rel target = $region68
                $region73: #{generator_conf_forward.1} parent=58 // loop_exit
                  _
              $region59: #{generator_conf_forward.1} parent=43 // pred_fallthru
                _
            $region44: #{generator_conf_forward.1} parent=39 // pred_fallthru
              _
            // Predicated region
            $region45: #{generator_conf_forward.1} parent=39 // pred_check
              _
            $region46: #{generator_conf_forward.1} parent=39 // pred_check_branch
              %241 = sbr.rel (0) target = $region48
            $region47: #{generator_conf_forward.1} parent=39 // pred_region
              %s243 = ssub.s32 16, 1
              loop: start=0, step=1, limit=1
              $region49: #{generator_conf_forward.1} parent=47 // loop_pre_header
                _
              $region50: #{generator_conf_forward.1} parent=47 // loop_header
                %s245 = sphi 0, %s249
                %p246 = scmp.ge.s32.totalorder %s245, 1
                %s250 = sphi %s235, %s235
                %s251 = sphi %s231, %s231
              $region51: #{generator_conf_forward.1} parent=47 // loop_header_branch
                %248 = sbr.rel (%p246) target = $region55
              $region52: #{generator_conf_forward.1} parent=47 // loop_body
                %v252 = vld [vmem:[%s250] sm:%s243]
                %253 = vst [vmem:[%s251] sm:%s243] %v252
                %v254 = vld [vmem:[%s250 + $0x8] sm:%s243]
                %255 = vst [vmem:[%s251 + $0x4] sm:%s243] %v254
                %v256 = vld [vmem:[%s250 + $0x10] sm:%s243]
                %257 = vst [vmem:[%s251 + $0x8] sm:%s243] %v256
                %v258 = vld [vmem:[%s250 + $0x18] sm:%s243]
                %259 = vst [vmem:[%s251 + $0xc] sm:%s243] %v258
                %v260 = vld [vmem:[%s250 + $0x20] sm:%s243]
                %261 = vst [vmem:[%s251 + $0x10] sm:%s243] %v260
                %v262 = vld [vmem:[%s250 + $0x28] sm:%s243]
                %263 = vst [vmem:[%s251 + $0x14] sm:%s243] %v262
                %v264 = vld [vmem:[%s250 + $0x30] sm:%s243]
                %265 = vst [vmem:[%s251 + $0x18] sm:%s243] %v264
                %v266 = vld [vmem:[%s250 + $0x38] sm:%s243]
                %267 = vst [vmem:[%s251 + $0x1c] sm:%s243] %v266
                %v268 = vld [vmem:[%s250 + $0x40] sm:%s243]
                %269 = vst [vmem:[%s251 + $0x20] sm:%s243] %v268
                %v270 = vld [vmem:[%s250 + $0x48] sm:%s243]
                %271 = vst [vmem:[%s251 + $0x24] sm:%s243] %v270
              $region53: #{generator_conf_forward.1} parent=47 // loop_footer
                %s249 = sadd.s32 1, %s245
              $region54: #{generator_conf_forward.1} parent=47 // loop_footer_branch
                %244 = sbr.rel target = $region50
              $region55: #{generator_conf_forward.1} parent=47 // loop_exit
                _
            $region48: #{generator_conf_forward.1} parent=39 // pred_fallthru
              _
          $region40: #{generator_conf_forward.1} parent=35 // pred_fallthru
            _
          %312 = vnop
        $region36: #{generator_conf_forward.1} parent=31 // pred_fallthru
          _
        // Predicated region
        $region74: #{generator_conf_forward.1} parent=31 // pred_check
          %p313 = pneg %p76
        $region75: #{generator_conf_forward.1} parent=31 // pred_check_branch
          %315 = sbr.rel (%p313) target = $region77
        $region76: #{generator_conf_forward.1} parent=31 // pred_region
          %s316 = sand.u32 %s66, 1
          %s317 = sand.u32 %s66, 1
          %s318 = smul.addr %s317, 40
          %s319 = scalar_lea.vmem [#allocation5], %s318
          %s320 = sadd.s32 %s20, 1
          %s321 = smul.addr %s19, 20
          %s322 = sadd.s32 %s320, %s321
          %s323 = smul.addr %s322, 4
          %s324 = scalar_lea.vmem %s1, %s323
          // Predicated region
          $region78: #{generator_conf_forward.1} parent=76 // pred_check
            _
          $region79: #{generator_conf_forward.1} parent=76 // pred_check_branch
            %326 = sbr.rel (0) target = $region81
          $region80: #{generator_conf_forward.1} parent=76 // pred_region
            // Predicated region
            $region82: #{generator_conf_forward.1} parent=80 // pred_check
              _
            $region83: #{generator_conf_forward.1} parent=80 // pred_check_branch
              %328 = sbr.rel target = $region85
            $region84: #{generator_conf_forward.1} parent=80 // pred_region
              // Predicated region
              $region97: #{generator_conf_forward.1} parent=84 // pred_check
                _
              $region98: #{generator_conf_forward.1} parent=84 // pred_check_branch
                %362 = sbr.rel (0) target = $region100
              $region99: #{generator_conf_forward.1} parent=84 // pred_region
                loop: start=0, step=1, limit=1
                $region101: #{generator_conf_forward.1} parent=99 // loop_pre_header
                  _
                $region102: #{generator_conf_forward.1} parent=99 // loop_header
                  %s364 = sphi 0, %s368
                  %p365 = scmp.ge.s32.totalorder %s364, 1
                  %s369 = sphi %s324, %s324
                  %s370 = sphi %s319, %s319
                $region103: #{generator_conf_forward.1} parent=99 // loop_header_branch
                  %367 = sbr.rel (%p365) target = $region107
                $region104: #{generator_conf_forward.1} parent=99 // loop_body
                  _
                $region105: #{generator_conf_forward.1} parent=99 // loop_footer
                  %s368 = sadd.s32 1, %s364
                $region106: #{generator_conf_forward.1} parent=99 // loop_footer_branch
                  %363 = sbr.rel target = $region102
                $region107: #{generator_conf_forward.1} parent=99 // loop_exit
                  _
                %s372 = ssub.s32 16, 1
                loop: start=0, step=1, limit=1
                $region108: #{generator_conf_forward.1} parent=99 // loop_pre_header
                  _
                $region109: #{generator_conf_forward.1} parent=99 // loop_header
                  %s374 = sphi 0, %s378
                  %p375 = scmp.ge.s32.totalorder %s374, 1
                  %s379 = sphi %s324, %s324
                  %s380 = sphi %s319, %s319
                $region110: #{generator_conf_forward.1} parent=99 // loop_header_branch
                  %377 = sbr.rel (%p375) target = $region114
                $region111: #{generator_conf_forward.1} parent=99 // loop_body
                  %v381 = vld [vmem:[%s379] sm:%s372]
                  %382 = vst [vmem:[%s380] sm:%s372] %v381
                  %v383 = vld [vmem:[%s379 + $0x8] sm:%s372]
                  %384 = vst [vmem:[%s380 + $0x4] sm:%s372] %v383
                  %v385 = vld [vmem:[%s379 + $0x10] sm:%s372]
                  %386 = vst [vmem:[%s380 + $0x8] sm:%s372] %v385
                  %v387 = vld [vmem:[%s379 + $0x18] sm:%s372]
                  %388 = vst [vmem:[%s380 + $0xc] sm:%s372] %v387
                  %v389 = vld [vmem:[%s379 + $0x20] sm:%s372]
                  %390 = vst [vmem:[%s380 + $0x10] sm:%s372] %v389
                  %v391 = vld [vmem:[%s379 + $0x28] sm:%s372]
                  %392 = vst [vmem:[%s380 + $0x14] sm:%s372] %v391
                  %v393 = vld [vmem:[%s379 + $0x30] sm:%s372]
                  %394 = vst [vmem:[%s380 + $0x18] sm:%s372] %v393
                  %v395 = vld [vmem:[%s379 + $0x38] sm:%s372]
                  %396 = vst [vmem:[%s380 + $0x1c] sm:%s372] %v395
                  %v397 = vld [vmem:[%s379 + $0x40] sm:%s372]
                  %398 = vst [vmem:[%s380 + $0x20] sm:%s372] %v397
                  %v399 = vld [vmem:[%s379 + $0x48] sm:%s372]
                  %400 = vst [vmem:[%s380 + $0x24] sm:%s372] %v399
                $region112: #{generator_conf_forward.1} parent=99 // loop_footer
                  %s378 = sadd.s32 1, %s374
                $region113: #{generator_conf_forward.1} parent=99 // loop_footer_branch
                  %373 = sbr.rel target = $region109
                $region114: #{generator_conf_forward.1} parent=99 // loop_exit
                  _
              $region100: #{generator_conf_forward.1} parent=84 // pred_fallthru
                _
            $region85: #{generator_conf_forward.1} parent=80 // pred_fallthru
              _
            // Predicated region
            $region86: #{generator_conf_forward.1} parent=80 // pred_check
              _
            $region87: #{generator_conf_forward.1} parent=80 // pred_check_branch
              %330 = sbr.rel (0) target = $region89
            $region88: #{generator_conf_forward.1} parent=80 // pred_region
              %s332 = ssub.s32 16, 1
              loop: start=0, step=1, limit=1
              $region90: #{generator_conf_forward.1} parent=88 // loop_pre_header
                _
              $region91: #{generator_conf_forward.1} parent=88 // loop_header
                %s334 = sphi 0, %s338
                %p335 = scmp.ge.s32.totalorder %s334, 1
                %s339 = sphi %s324, %s324
                %s340 = sphi %s319, %s319
              $region92: #{generator_conf_forward.1} parent=88 // loop_header_branch
                %337 = sbr.rel (%p335) target = $region96
              $region93: #{generator_conf_forward.1} parent=88 // loop_body
                %v341 = vld [vmem:[%s339] sm:%s332]
                %342 = vst [vmem:[%s340] sm:%s332] %v341
                %v343 = vld [vmem:[%s339 + $0x8] sm:%s332]
                %344 = vst [vmem:[%s340 + $0x4] sm:%s332] %v343
                %v345 = vld [vmem:[%s339 + $0x10] sm:%s332]
                %346 = vst [vmem:[%s340 + $0x8] sm:%s332] %v345
                %v347 = vld [vmem:[%s339 + $0x18] sm:%s332]
                %348 = vst [vmem:[%s340 + $0xc] sm:%s332] %v347
                %v349 = vld [vmem:[%s339 + $0x20] sm:%s332]
                %350 = vst [vmem:[%s340 + $0x10] sm:%s332] %v349
                %v351 = vld [vmem:[%s339 + $0x28] sm:%s332]
                %352 = vst [vmem:[%s340 + $0x14] sm:%s332] %v351
                %v353 = vld [vmem:[%s339 + $0x30] sm:%s332]
                %354 = vst [vmem:[%s340 + $0x18] sm:%s332] %v353
                %v355 = vld [vmem:[%s339 + $0x38] sm:%s332]
                %356 = vst [vmem:[%s340 + $0x1c] sm:%s332] %v355
                %v357 = vld [vmem:[%s339 + $0x40] sm:%s332]
                %358 = vst [vmem:[%s340 + $0x20] sm:%s332] %v357
                %v359 = vld [vmem:[%s339 + $0x48] sm:%s332]
                %360 = vst [vmem:[%s340 + $0x24] sm:%s332] %v359
              $region94: #{generator_conf_forward.1} parent=88 // loop_footer
                %s338 = sadd.s32 1, %s334
              $region95: #{generator_conf_forward.1} parent=88 // loop_footer_branch
                %333 = sbr.rel target = $region91
              $region96: #{generator_conf_forward.1} parent=88 // loop_exit
                _
            $region89: #{generator_conf_forward.1} parent=80 // pred_fallthru
              _
          $region81: #{generator_conf_forward.1} parent=76 // pred_fallthru
            _
          %401 = vnop
        $region77: #{generator_conf_forward.1} parent=31 // pred_fallthru
          _
      $region32: #{generator_conf_forward.1} parent=5 // pred_fallthru
        _
      %p402 = scmp.le.s32.totalorder 1, %s12
      %p403 = scmp.lt.s32.totalorder %s12, 3
      %p404 = pnand %p402, %p403
      %p405 = pneg %p404
      // Predicated region
      $region115: #{generator_conf_forward.1} parent=5 // pred_check
        _
      $region116: #{generator_conf_forward.1} parent=5 // pred_check_branch
        %407 = sbr.rel (%p404) target = $region118
      $region117: #{generator_conf_forward.1} parent=5 // pred_region
        %s408 = ssub.s32 %s12, 1
        %s409 = sand.u32 %s39, 1
        %s410 = sand.u32 %s39, 1
        %s411 = smul.addr %s410, 40
        %s412 = scalar_lea.vmem [#allocation4], %s411
        // Predicated region
        $region119: #{generator_conf_forward.1} parent=117 // pred_check
          %p413 = pneg %p52
        $region120: #{generator_conf_forward.1} parent=117 // pred_check_branch
          %415 = sbr.rel (%p413) target = $region122
        $region121: #{generator_conf_forward.1} parent=117 // pred_region
          _
        $region122: #{generator_conf_forward.1} parent=117 // pred_fallthru
          _
        %s416 = sand.u32 %s69, 1
        %s417 = sand.u32 %s69, 1
        %s418 = smul.addr %s417, 40
        %s419 = scalar_lea.vmem [#allocation5], %s418
        // Predicated region
        $region123: #{generator_conf_forward.1} parent=117 // pred_check
          %p420 = pneg %p82
        $region124: #{generator_conf_forward.1} parent=117 // pred_check_branch
          %422 = sbr.rel (%p420) target = $region126
        $region125: #{generator_conf_forward.1} parent=117 // pred_region
          _
        $region126: #{generator_conf_forward.1} parent=117 // pred_fallthru
          _
        %s423 = sand.u32 %s39, 1
        %s424 = sand.u32 %s39, 1
        %s425 = smul.addr %s424, 40
        %s426 = scalar_lea.vmem [#allocation4], %s425
        %p427 = pneg %p52
        %p428 = pneg %p49
        %s429 = sand.u32 %s69, 1
        %s430 = sand.u32 %s69, 1
        %s431 = smul.addr %s430, 40
        %s432 = scalar_lea.vmem [#allocation5], %s431
        %p433 = pneg %p82
        %p434 = pneg %p79
        %p435 = pneg %p103
        %p436 = pneg %p100
        %p437 = pneg %p124
        %p438 = pneg %p121
        %p439 = pneg %p145
        %p440 = pneg %p142
        %p441 = pneg %p166
        %p442 = pneg %p163
        %p443 = pneg %p194
        %p444 = pneg %p191
        %p445 = scmp.lt.s32.totalorder %s21, 1
        %s446 = scalar_select %p445, %s21, 1
        %p447 = scmp.lt.s32.totalorder %s22, 0
        %s448 = scalar_select %p447, %s22, 0
        %s449 = smul.addr %s446, 4
        %s450 = sadd.s32 %s448, %s449
        %s451 = smul.addr %s450, 8
        %s452 = scalar_lea.vmem %s6, %s451
        %s453 = sadd.s32 %s22, 1
        %p454 = scmp.lt.s32.totalorder %s21, 1
        %s455 = scalar_select %p454, %s21, 1
        %p456 = scmp.lt.s32.totalorder %s22, 0
        %s457 = scalar_select %p456, %s22, 0
        %s458 = smul.addr %s455, 4
        %s459 = sadd.s32 %s457, %s458
        %s460 = smul.addr %s459, 8
        %s461 = scalar_lea.vmem %s6, %s460
        %s463 = smul.u32 %s22, 128
        %v464 = vld [vmem:[%s412] sm:$0xf]
        %v465 = vld [vmem:[%s412 + $0x4] sm:$0xf]
        %v466 = vld [vmem:[%s412 + $0x8] sm:$0xf]
        %v467 = vld [vmem:[%s412 + $0xc] sm:$0xf]
        %v468 = vld [vmem:[%s412 + $0x10] sm:$0xf]
        %v469 = vld [vmem:[%s412 + $0x14] sm:$0xf]
        %v470 = vld [vmem:[%s412 + $0x18] sm:$0xf]
        %v471 = vld [vmem:[%s412 + $0x1c] sm:$0xf]
        %v472 = vld [vmem:[%s412 + $0x20] sm:$0xf]
        %v473 = vld [vmem:[%s412 + $0x24] sm:$0xf]
        %474 = vst [vmem:[#allocation2] sm:$0xf] %v464
        %475 = vst [vmem:[#allocation2 + $0x8] sm:$0xf] %v465
        %476 = vst [vmem:[#allocation2 + $0x10] sm:$0xf] %v466
        %477 = vst [vmem:[#allocation2 + $0x18] sm:$0xf] %v467
        %478 = vst [vmem:[#allocation2 + $0x20] sm:$0xf] %v468
        %479 = vst [vmem:[#allocation2 + $0x28] sm:$0xf] %v469
        %480 = vst [vmem:[#allocation2 + $0x30] sm:$0xf] %v470
        %481 = vst [vmem:[#allocation2 + $0x38] sm:$0xf] %v471
        %482 = vst [vmem:[#allocation2 + $0x40] sm:$0xf] %v472
        %483 = vst [vmem:[#allocation2 + $0x48] sm:$0xf] %v473
        %v484 = vld [vmem:[%s419] sm:$0xf]
        %v485 = vld [vmem:[%s419 + $0x4] sm:$0xf]
        %v486 = vld [vmem:[%s419 + $0x8] sm:$0xf]
        %v487 = vld [vmem:[%s419 + $0xc] sm:$0xf]
        %v488 = vld [vmem:[%s419 + $0x10] sm:$0xf]
        %v489 = vld [vmem:[%s419 + $0x14] sm:$0xf]
        %v490 = vld [vmem:[%s419 + $0x18] sm:$0xf]
        %v491 = vld [vmem:[%s419 + $0x1c] sm:$0xf]
        %v492 = vld [vmem:[%s419 + $0x20] sm:$0xf]
        %v493 = vld [vmem:[%s419 + $0x24] sm:$0xf]
        %vm494 = vcmask 44032
        %495 = vst.msk [vmem:[#allocation2 + $0x4] sm:$0xf] %vm494, %v484
        %496 = vst.msk [vmem:[#allocation2 + $0xc] sm:$0xf] %vm494, %v485
        %497 = vst.msk [vmem:[#allocation2 + $0x14] sm:$0xf] %vm494, %v486
        %498 = vst.msk [vmem:[#allocation2 + $0x1c] sm:$0xf] %vm494, %v487
        %499 = vst.msk [vmem:[#allocation2 + $0x24] sm:$0xf] %vm494, %v488
        %500 = vst.msk [vmem:[#allocation2 + $0x2c] sm:$0xf] %vm494, %v489
        %501 = vst.msk [vmem:[#allocation2 + $0x34] sm:$0xf] %vm494, %v490
        %502 = vst.msk [vmem:[#allocation2 + $0x3c] sm:$0xf] %vm494, %v491
        %503 = vst.msk [vmem:[#allocation2 + $0x44] sm:$0xf] %vm494, %v492
        %504 = vst.msk [vmem:[#allocation2 + $0x4c] sm:$0xf] %vm494, %v493
        %v505 = vld [vmem:[%s412] sm:$0xf]
        %v506 = vld [vmem:[%s412 + $0x4] sm:$0xf]
        %v507 = vld [vmem:[%s412 + $0x8] sm:$0xf]
        %v508 = vld [vmem:[%s412 + $0xc] sm:$0xf]
        %v509 = vld [vmem:[%s412 + $0x10] sm:$0xf]
        %v510 = vld [vmem:[%s412 + $0x14] sm:$0xf]
        %v511 = vld [vmem:[%s412 + $0x18] sm:$0xf]
        %v512 = vld [vmem:[%s412 + $0x1c] sm:$0xf]
        %v513 = vld [vmem:[%s412 + $0x20] sm:$0xf]
        %v514 = vld [vmem:[%s412 + $0x24] sm:$0xf]
        %525 = vrot.lane.b32.xlu0 %v505, 127
        %v526 = vpop.permute.xlu0 %525
        %527 = vrot.lane.b32.xlu0 %v506, 127
        %v528 = vpop.permute.xlu0 %527
        %529 = vrot.lane.b32.xlu0 %v507, 127
        %v530 = vpop.permute.xlu0 %529
        %531 = vrot.lane.b32.xlu0 %v508, 127
        %v532 = vpop.permute.xlu0 %531
        %533 = vrot.lane.b32.xlu0 %v509, 127
        %v534 = vpop.permute.xlu0 %533
        %535 = vrot.lane.b32.xlu0 %v510, 127
        %v536 = vpop.permute.xlu0 %535
        %537 = vrot.lane.b32.xlu0 %v511, 127
        %v538 = vpop.permute.xlu0 %537
        %539 = vrot.lane.b32.xlu0 %v512, 127
        %v540 = vpop.permute.xlu0 %539
        %541 = vrot.lane.b32.xlu0 %v513, 127
        %v542 = vpop.permute.xlu0 %541
        %543 = vrot.lane.b32.xlu0 %v514, 127
        %v544 = vpop.permute.xlu0 %543
        %vm555 = vcmask 1035264
        %556 = vst.msk [vmem:[#allocation2 + $0x50] sm:$0xf] %vm555, %v526
        %557 = vst.msk [vmem:[#allocation2 + $0x58] sm:$0xf] %vm555, %v528
        %558 = vst.msk [vmem:[#allocation2 + $0x60] sm:$0xf] %vm555, %v530
        %559 = vst.msk [vmem:[#allocation2 + $0x68] sm:$0xf] %vm555, %v532
        %560 = vst.msk [vmem:[#allocation2 + $0x70] sm:$0xf] %vm555, %v534
        %561 = vst.msk [vmem:[#allocation2 + $0x78] sm:$0xf] %vm555, %v536
        %562 = vst.msk [vmem:[#allocation2 + $0x80] sm:$0xf] %vm555, %v538
        %563 = vst.msk [vmem:[#allocation2 + $0x88] sm:$0xf] %vm555, %v540
        %564 = vst.msk [vmem:[#allocation2 + $0x90] sm:$0xf] %vm555, %v542
        %565 = vst.msk [vmem:[#allocation2 + $0x98] sm:$0xf] %vm555, %v544
        %v566 = vld [vmem:[%s419] sm:$0xf]
        %v567 = vld [vmem:[%s419 + $0x4] sm:$0xf]
        %v568 = vld [vmem:[%s419 + $0x8] sm:$0xf]
        %v569 = vld [vmem:[%s419 + $0xc] sm:$0xf]
        %v570 = vld [vmem:[%s419 + $0x10] sm:$0xf]
        %v571 = vld [vmem:[%s419 + $0x14] sm:$0xf]
        %v572 = vld [vmem:[%s419 + $0x18] sm:$0xf]
        %v573 = vld [vmem:[%s419 + $0x1c] sm:$0xf]
        %v574 = vld [vmem:[%s419 + $0x20] sm:$0xf]
        %v575 = vld [vmem:[%s419 + $0x24] sm:$0xf]
        %586 = vrot.lane.b32.xlu0 %v566, 127
        %v587 = vpop.permute.xlu0 %586
        %588 = vrot.lane.b32.xlu0 %v567, 127
        %v589 = vpop.permute.xlu0 %588
        %590 = vrot.lane.b32.xlu0 %v568, 127
        %v591 = vpop.permute.xlu0 %590
        %592 = vrot.lane.b32.xlu0 %v569, 127
        %v593 = vpop.permute.xlu0 %592
        %594 = vrot.lane.b32.xlu0 %v570, 127
        %v595 = vpop.permute.xlu0 %594
        %596 = vrot.lane.b32.xlu0 %v571, 127
        %v597 = vpop.permute.xlu0 %596
        %598 = vrot.lane.b32.xlu0 %v572, 127
        %v599 = vpop.permute.xlu0 %598
        %600 = vrot.lane.b32.xlu0 %v573, 127
        %v601 = vpop.permute.xlu0 %600
        %602 = vrot.lane.b32.xlu0 %v574, 127
        %v603 = vpop.permute.xlu0 %602
        %604 = vrot.lane.b32.xlu0 %v575, 127
        %v605 = vpop.permute.xlu0 %604
        %v606 = vrot.slane %v587, 4
        %v607 = vrot.slane %v589, 4
        %v608 = vrot.slane %v591, 4
        %v609 = vrot.slane %v593, 4
        %v610 = vrot.slane %v595, 4
        %v611 = vrot.slane %v597, 4
        %v612 = vrot.slane %v599, 4
        %v613 = vrot.slane %v601, 4
        %v614 = vrot.slane %v603, 4
        %v615 = vrot.slane %v605, 4
        %vm616 = vcmask 1039360
        %v617 = vsel %vm616, %v606, %v587
        %v618 = vsel %vm616, %v607, %v589
        %v619 = vsel %vm616, %v608, %v591
        %v620 = vsel %vm616, %v609, %v593
        %v621 = vsel %vm616, %v610, %v595
        %v622 = vsel %vm616, %v611, %v597
        %v623 = vsel %vm616, %v612, %v599
        %v624 = vsel %vm616, %v613, %v601
        %v625 = vsel %vm616, %v614, %v603
        %v626 = vsel %vm616, %v615, %v605
        %vm637 = vcmask 1044472
        %vm638 = vcmask 48132
        %vm639 = vmor %vm638, %vm637
        %640 = vst.msk [vmem:[#allocation2 + $0x50] sm:$0xff] %vm639, %v617
        %641 = vst.msk [vmem:[#allocation2 + $0x58] sm:$0xff] %vm639, %v618
        %642 = vst.msk [vmem:[#allocation2 + $0x60] sm:$0xff] %vm639, %v619
        %643 = vst.msk [vmem:[#allocation2 + $0x68] sm:$0xff] %vm639, %v620
        %644 = vst.msk [vmem:[#allocation2 + $0x70] sm:$0xff] %vm639, %v621
        %645 = vst.msk [vmem:[#allocation2 + $0x78] sm:$0xff] %vm639, %v622
        %646 = vst.msk [vmem:[#allocation2 + $0x80] sm:$0xff] %vm639, %v623
        %647 = vst.msk [vmem:[#allocation2 + $0x88] sm:$0xff] %vm639, %v624
        %648 = vst.msk [vmem:[#allocation2 + $0x90] sm:$0xff] %vm639, %v625
        %649 = vst.msk [vmem:[#allocation2 + $0x98] sm:$0xff] %vm639, %v626
        %v650 = vld [vmem:[%s412] sm:$0xf]
        %v651 = vld [vmem:[%s412 + $0x4] sm:$0xf]
        %v652 = vld [vmem:[%s412 + $0x8] sm:$0xf]
        %v653 = vld [vmem:[%s412 + $0xc] sm:$0xf]
        %v654 = vld [vmem:[%s412 + $0x10] sm:$0xf]
        %v655 = vld [vmem:[%s412 + $0x14] sm:$0xf]
        %v656 = vld [vmem:[%s412 + $0x18] sm:$0xf]
        %v657 = vld [vmem:[%s412 + $0x1c] sm:$0xf]
        %v658 = vld [vmem:[%s412 + $0x20] sm:$0xf]
        %v659 = vld [vmem:[%s412 + $0x24] sm:$0xf]
        %670 = vrot.lane.b32.xlu0 %v650, 126
        %v671 = vpop.permute.xlu0 %670
        %672 = vrot.lane.b32.xlu0 %v651, 126
        %v673 = vpop.permute.xlu0 %672
        %674 = vrot.lane.b32.xlu0 %v652, 126
        %v675 = vpop.permute.xlu0 %674
        %676 = vrot.lane.b32.xlu0 %v653, 126
        %v677 = vpop.permute.xlu0 %676
        %678 = vrot.lane.b32.xlu0 %v654, 126
        %v679 = vpop.permute.xlu0 %678
        %680 = vrot.lane.b32.xlu0 %v655, 126
        %v681 = vpop.permute.xlu0 %680
        %682 = vrot.lane.b32.xlu0 %v656, 126
        %v683 = vpop.permute.xlu0 %682
        %684 = vrot.lane.b32.xlu0 %v657, 126
        %v685 = vpop.permute.xlu0 %684
        %686 = vrot.lane.b32.xlu0 %v658, 126
        %v687 = vpop.permute.xlu0 %686
        %688 = vrot.lane.b32.xlu0 %v659, 126
        %v689 = vpop.permute.xlu0 %688
        %vm700 = vcmask 1027072
        %701 = vst.msk [vmem:[#allocation2 + $0xa0] sm:$0xf] %vm700, %v671
        %702 = vst.msk [vmem:[#allocation2 + $0xa8] sm:$0xf] %vm700, %v673
        %703 = vst.msk [vmem:[#allocation2 + $0xb0] sm:$0xf] %vm700, %v675
        %704 = vst.msk [vmem:[#allocation2 + $0xb8] sm:$0xf] %vm700, %v677
        %705 = vst.msk [vmem:[#allocation2 + $0xc0] sm:$0xf] %vm700, %v679
        %706 = vst.msk [vmem:[#allocation2 + $0xc8] sm:$0xf] %vm700, %v681
        %707 = vst.msk [vmem:[#allocation2 + $0xd0] sm:$0xf] %vm700, %v683
        %708 = vst.msk [vmem:[#allocation2 + $0xd8] sm:$0xf] %vm700, %v685
        %709 = vst.msk [vmem:[#allocation2 + $0xe0] sm:$0xf] %vm700, %v687
        %710 = vst.msk [vmem:[#allocation2 + $0xe8] sm:$0xf] %vm700, %v689
        %v711 = vld [vmem:[%s419] sm:$0xf]
        %v712 = vld [vmem:[%s419 + $0x4] sm:$0xf]
        %v713 = vld [vmem:[%s419 + $0x8] sm:$0xf]
        %v714 = vld [vmem:[%s419 + $0xc] sm:$0xf]
        %v715 = vld [vmem:[%s419 + $0x10] sm:$0xf]
        %v716 = vld [vmem:[%s419 + $0x14] sm:$0xf]
        %v717 = vld [vmem:[%s419 + $0x18] sm:$0xf]
        %v718 = vld [vmem:[%s419 + $0x1c] sm:$0xf]
        %v719 = vld [vmem:[%s419 + $0x20] sm:$0xf]
        %v720 = vld [vmem:[%s419 + $0x24] sm:$0xf]
        %731 = vrot.lane.b32.xlu0 %v711, 126
        %v732 = vpop.permute.xlu0 %731
        %733 = vrot.lane.b32.xlu0 %v712, 126
        %v734 = vpop.permute.xlu0 %733
        %735 = vrot.lane.b32.xlu0 %v713, 126
        %v736 = vpop.permute.xlu0 %735
        %737 = vrot.lane.b32.xlu0 %v714, 126
        %v738 = vpop.permute.xlu0 %737
        %739 = vrot.lane.b32.xlu0 %v715, 126
        %v740 = vpop.permute.xlu0 %739
        %741 = vrot.lane.b32.xlu0 %v716, 126
        %v742 = vpop.permute.xlu0 %741
        %743 = vrot.lane.b32.xlu0 %v717, 126
        %v744 = vpop.permute.xlu0 %743
        %745 = vrot.lane.b32.xlu0 %v718, 126
        %v746 = vpop.permute.xlu0 %745
        %747 = vrot.lane.b32.xlu0 %v719, 126
        %v748 = vpop.permute.xlu0 %747
        %749 = vrot.lane.b32.xlu0 %v720, 126
        %v750 = vpop.permute.xlu0 %749
        %v751 = vrot.slane %v732, 4
        %v752 = vrot.slane %v734, 4
        %v753 = vrot.slane %v736, 4
        %v754 = vrot.slane %v738, 4
        %v755 = vrot.slane %v740, 4
        %v756 = vrot.slane %v742, 4
        %v757 = vrot.slane %v744, 4
        %v758 = vrot.slane %v746, 4
        %v759 = vrot.slane %v748, 4
        %v760 = vrot.slane %v750, 4
        %vm761 = vcmask 1031168
        %v762 = vsel %vm761, %v751, %v732
        %v763 = vsel %vm761, %v752, %v734
        %v764 = vsel %vm761, %v753, %v736
        %v765 = vsel %vm761, %v754, %v738
        %v766 = vsel %vm761, %v755, %v740
        %v767 = vsel %vm761, %v756, %v742
        %v768 = vsel %vm761, %v757, %v744
        %v769 = vsel %vm761, %v758, %v746
        %v770 = vsel %vm761, %v759, %v748
        %v771 = vsel %vm761, %v760, %v750
        %vm782 = vcmask 1044464
        %vm783 = vmor %vm638, %vm782
        %784 = vst.msk [vmem:[#allocation2 + $0xa0] sm:$0xff] %vm783, %v762
        %785 = vst.msk [vmem:[#allocation2 + $0xa8] sm:$0xff] %vm783, %v763
        %786 = vst.msk [vmem:[#allocation2 + $0xb0] sm:$0xff] %vm783, %v764
        %787 = vst.msk [vmem:[#allocation2 + $0xb8] sm:$0xff] %vm783, %v765
        %788 = vst.msk [vmem:[#allocation2 + $0xc0] sm:$0xff] %vm783, %v766
        %789 = vst.msk [vmem:[#allocation2 + $0xc8] sm:$0xff] %vm783, %v767
        %790 = vst.msk [vmem:[#allocation2 + $0xd0] sm:$0xff] %vm783, %v768
        %791 = vst.msk [vmem:[#allocation2 + $0xd8] sm:$0xff] %vm783, %v769
        %792 = vst.msk [vmem:[#allocation2 + $0xe0] sm:$0xff] %vm783, %v770
        %793 = vst.msk [vmem:[#allocation2 + $0xe8] sm:$0xff] %vm783, %v771
        %v794 = vld [vmem:[%s412] sm:$0xf]
        %v795 = vld [vmem:[%s412 + $0x4] sm:$0xf]
        %v796 = vld [vmem:[%s412 + $0x8] sm:$0xf]
        %v797 = vld [vmem:[%s412 + $0xc] sm:$0xf]
        %v798 = vld [vmem:[%s412 + $0x10] sm:$0xf]
        %v799 = vld [vmem:[%s412 + $0x14] sm:$0xf]
        %v800 = vld [vmem:[%s412 + $0x18] sm:$0xf]
        %v801 = vld [vmem:[%s412 + $0x1c] sm:$0xf]
        %v802 = vld [vmem:[%s412 + $0x20] sm:$0xf]
        %v803 = vld [vmem:[%s412 + $0x24] sm:$0xf]
        %814 = vrot.lane.b32.xlu0 %v794, 125
        %v815 = vpop.permute.xlu0 %814
        %816 = vrot.lane.b32.xlu0 %v795, 125
        %v817 = vpop.permute.xlu0 %816
        %818 = vrot.lane.b32.xlu0 %v796, 125
        %v819 = vpop.permute.xlu0 %818
        %820 = vrot.lane.b32.xlu0 %v797, 125
        %v821 = vpop.permute.xlu0 %820
        %822 = vrot.lane.b32.xlu0 %v798, 125
        %v823 = vpop.permute.xlu0 %822
        %824 = vrot.lane.b32.xlu0 %v799, 125
        %v825 = vpop.permute.xlu0 %824
        %826 = vrot.lane.b32.xlu0 %v800, 125
        %v827 = vpop.permute.xlu0 %826
        %828 = vrot.lane.b32.xlu0 %v801, 125
        %v829 = vpop.permute.xlu0 %828
        %830 = vrot.lane.b32.xlu0 %v802, 125
        %v831 = vpop.permute.xlu0 %830
        %832 = vrot.lane.b32.xlu0 %v803, 125
        %v833 = vpop.permute.xlu0 %832
        %vm844 = vcmask 1018880
        %845 = vst.msk [vmem:[#allocation2 + $0xf0] sm:$0xf] %vm844, %v815
        %846 = vst.msk [vmem:[#allocation2 + $0xf8] sm:$0xf] %vm844, %v817
        %847 = vst.msk [vmem:[#allocation2 + $0x100] sm:$0xf] %vm844, %v819
        %848 = vst.msk [vmem:[#allocation2 + $0x108] sm:$0xf] %vm844, %v821
        %849 = vst.msk [vmem:[#allocation2 + $0x110] sm:$0xf] %vm844, %v823
        %850 = vst.msk [vmem:[#allocation2 + $0x118] sm:$0xf] %vm844, %v825
        %851 = vst.msk [vmem:[#allocation2 + $0x120] sm:$0xf] %vm844, %v827
        %852 = vst.msk [vmem:[#allocation2 + $0x128] sm:$0xf] %vm844, %v829
        %853 = vst.msk [vmem:[#allocation2 + $0x130] sm:$0xf] %vm844, %v831
        %854 = vst.msk [vmem:[#allocation2 + $0x138] sm:$0xf] %vm844, %v833
        %v855 = vld [vmem:[%s419] sm:$0xf]
        %v856 = vld [vmem:[%s419 + $0x4] sm:$0xf]
        %v857 = vld [vmem:[%s419 + $0x8] sm:$0xf]
        %v858 = vld [vmem:[%s419 + $0xc] sm:$0xf]
        %v859 = vld [vmem:[%s419 + $0x10] sm:$0xf]
        %v860 = vld [vmem:[%s419 + $0x14] sm:$0xf]
        %v861 = vld [vmem:[%s419 + $0x18] sm:$0xf]
        %v862 = vld [vmem:[%s419 + $0x1c] sm:$0xf]
        %v863 = vld [vmem:[%s419 + $0x20] sm:$0xf]
        %v864 = vld [vmem:[%s419 + $0x24] sm:$0xf]
        %875 = vrot.lane.b32.xlu0 %v855, 125
        %v876 = vpop.permute.xlu0 %875
        %877 = vrot.lane.b32.xlu0 %v856, 125
        %v878 = vpop.permute.xlu0 %877
        %879 = vrot.lane.b32.xlu0 %v857, 125
        %v880 = vpop.permute.xlu0 %879
        %881 = vrot.lane.b32.xlu0 %v858, 125
        %v882 = vpop.permute.xlu0 %881
        %883 = vrot.lane.b32.xlu0 %v859, 125
        %v884 = vpop.permute.xlu0 %883
        %885 = vrot.lane.b32.xlu0 %v860, 125
        %v886 = vpop.permute.xlu0 %885
        %887 = vrot.lane.b32.xlu0 %v861, 125
        %v888 = vpop.permute.xlu0 %887
        %889 = vrot.lane.b32.xlu0 %v862, 125
        %v890 = vpop.permute.xlu0 %889
        %891 = vrot.lane.b32.xlu0 %v863, 125
        %v892 = vpop.permute.xlu0 %891
        %893 = vrot.lane.b32.xlu0 %v864, 125
        %v894 = vpop.permute.xlu0 %893
        %v895 = vrot.slane %v876, 4
        %v896 = vrot.slane %v878, 4
        %v897 = vrot.slane %v880, 4
        %v898 = vrot.slane %v882, 4
        %v899 = vrot.slane %v884, 4
        %v900 = vrot.slane %v886, 4
        %v901 = vrot.slane %v888, 4
        %v902 = vrot.slane %v890, 4
        %v903 = vrot.slane %v892, 4
        %v904 = vrot.slane %v894, 4
        %vm905 = vcmask 1022976
        %v906 = vsel %vm905, %v895, %v876
        %v907 = vsel %vm905, %v896, %v878
        %v908 = vsel %vm905, %v897, %v880
        %v909 = vsel %vm905, %v898, %v882
        %v910 = vsel %vm905, %v899, %v884
        %v911 = vsel %vm905, %v900, %v886
        %v912 = vsel %vm905, %v901, %v888
        %v913 = vsel %vm905, %v902, %v890
        %v914 = vsel %vm905, %v903, %v892
        %v915 = vsel %vm905, %v904, %v894
        %vm926 = vcmask 1044456
        %vm927 = vmor %vm638, %vm926
        %928 = vst.msk [vmem:[#allocation2 + $0xf0] sm:$0xff] %vm927, %v906
        %929 = vst.msk [vmem:[#allocation2 + $0xf8] sm:$0xff] %vm927, %v907
        %930 = vst.msk [vmem:[#allocation2 + $0x100] sm:$0xff] %vm927, %v908
        %931 = vst.msk [vmem:[#allocation2 + $0x108] sm:$0xff] %vm927, %v909
        %932 = vst.msk [vmem:[#allocation2 + $0x110] sm:$0xff] %vm927, %v910
        %933 = vst.msk [vmem:[#allocation2 + $0x118] sm:$0xff] %vm927, %v911
        %934 = vst.msk [vmem:[#allocation2 + $0x120] sm:$0xff] %vm927, %v912
        %935 = vst.msk [vmem:[#allocation2 + $0x128] sm:$0xff] %vm927, %v913
        %936 = vst.msk [vmem:[#allocation2 + $0x130] sm:$0xff] %vm927, %v914
        %937 = vst.msk [vmem:[#allocation2 + $0x138] sm:$0xff] %vm927, %v915
        %v938 = vld [vmem:[%s412] sm:$0xf]
        %v939 = vld [vmem:[%s412 + $0x4] sm:$0xf]
        %v940 = vld [vmem:[%s412 + $0x8] sm:$0xf]
        %v941 = vld [vmem:[%s412 + $0xc] sm:$0xf]
        %v942 = vld [vmem:[%s412 + $0x10] sm:$0xf]
        %v943 = vld [vmem:[%s412 + $0x14] sm:$0xf]
        %v944 = vld [vmem:[%s412 + $0x18] sm:$0xf]
        %v945 = vld [vmem:[%s412 + $0x1c] sm:$0xf]
        %v946 = vld [vmem:[%s412 + $0x20] sm:$0xf]
        %v947 = vld [vmem:[%s412 + $0x24] sm:$0xf]
        %958 = vrot.lane.b32.xlu0 %v938, 124
        %v959 = vpop.permute.xlu0 %958
        %960 = vrot.lane.b32.xlu0 %v939, 124
        %v961 = vpop.permute.xlu0 %960
        %962 = vrot.lane.b32.xlu0 %v940, 124
        %v963 = vpop.permute.xlu0 %962
        %964 = vrot.lane.b32.xlu0 %v941, 124
        %v965 = vpop.permute.xlu0 %964
        %966 = vrot.lane.b32.xlu0 %v942, 124
        %v967 = vpop.permute.xlu0 %966
        %968 = vrot.lane.b32.xlu0 %v943, 124
        %v969 = vpop.permute.xlu0 %968
        %970 = vrot.lane.b32.xlu0 %v944, 124
        %v971 = vpop.permute.xlu0 %970
        %972 = vrot.lane.b32.xlu0 %v945, 124
        %v973 = vpop.permute.xlu0 %972
        %974 = vrot.lane.b32.xlu0 %v946, 124
        %v975 = vpop.permute.xlu0 %974
        %976 = vrot.lane.b32.xlu0 %v947, 124
        %v977 = vpop.permute.xlu0 %976
        %vm988 = vcmask 1010688
        %989 = vst.msk [vmem:[#allocation2 + $0x140] sm:$0xf] %vm988, %v959
        %990 = vst.msk [vmem:[#allocation2 + $0x148] sm:$0xf] %vm988, %v961
        %991 = vst.msk [vmem:[#allocation2 + $0x150] sm:$0xf] %vm988, %v963
        %992 = vst.msk [vmem:[#allocation2 + $0x158] sm:$0xf] %vm988, %v965
        %993 = vst.msk [vmem:[#allocation2 + $0x160] sm:$0xf] %vm988, %v967
        %994 = vst.msk [vmem:[#allocation2 + $0x168] sm:$0xf] %vm988, %v969
        %995 = vst.msk [vmem:[#allocation2 + $0x170] sm:$0xf] %vm988, %v971
        %996 = vst.msk [vmem:[#allocation2 + $0x178] sm:$0xf] %vm988, %v973
        %997 = vst.msk [vmem:[#allocation2 + $0x180] sm:$0xf] %vm988, %v975
        %998 = vst.msk [vmem:[#allocation2 + $0x188] sm:$0xf] %vm988, %v977
        %v999 = vld [vmem:[%s419] sm:$0xf]
        %v1000 = vld [vmem:[%s419 + $0x4] sm:$0xf]
        %v1001 = vld [vmem:[%s419 + $0x8] sm:$0xf]
        %v1002 = vld [vmem:[%s419 + $0xc] sm:$0xf]
        %v1003 = vld [vmem:[%s419 + $0x10] sm:$0xf]
        %v1004 = vld [vmem:[%s419 + $0x14] sm:$0xf]
        %v1005 = vld [vmem:[%s419 + $0x18] sm:$0xf]
        %v1006 = vld [vmem:[%s419 + $0x1c] sm:$0xf]
        %v1007 = vld [vmem:[%s419 + $0x20] sm:$0xf]
        %v1008 = vld [vmem:[%s419 + $0x24] sm:$0xf]
        %1019 = vrot.lane.b32.xlu0 %v999, 124
        %v1020 = vpop.permute.xlu0 %1019
        %1021 = vrot.lane.b32.xlu0 %v1000, 124
        %v1022 = vpop.permute.xlu0 %1021
        %1023 = vrot.lane.b32.xlu0 %v1001, 124
        %v1024 = vpop.permute.xlu0 %1023
        %1025 = vrot.lane.b32.xlu0 %v1002, 124
        %v1026 = vpop.permute.xlu0 %1025
        %1027 = vrot.lane.b32.xlu0 %v1003, 124
        %v1028 = vpop.permute.xlu0 %1027
        %1029 = vrot.lane.b32.xlu0 %v1004, 124
        %v1030 = vpop.permute.xlu0 %1029
        %1031 = vrot.lane.b32.xlu0 %v1005, 124
        %v1032 = vpop.permute.xlu0 %1031
        %1033 = vrot.lane.b32.xlu0 %v1006, 124
        %v1034 = vpop.permute.xlu0 %1033
        %1035 = vrot.lane.b32.xlu0 %v1007, 124
        %v1036 = vpop.permute.xlu0 %1035
        %1037 = vrot.lane.b32.xlu0 %v1008, 124
        %v1038 = vpop.permute.xlu0 %1037
        %v1039 = vrot.slane %v1020, 4
        %v1040 = vrot.slane %v1022, 4
        %v1041 = vrot.slane %v1024, 4
        %v1042 = vrot.slane %v1026, 4
        %v1043 = vrot.slane %v1028, 4
        %v1044 = vrot.slane %v1030, 4
        %v1045 = vrot.slane %v1032, 4
        %v1046 = vrot.slane %v1034, 4
        %v1047 = vrot.slane %v1036, 4
        %v1048 = vrot.slane %v1038, 4
        %vm1049 = vcmask 1014784
        %v1050 = vsel %vm1049, %v1039, %v1020
        %v1051 = vsel %vm1049, %v1040, %v1022
        %v1052 = vsel %vm1049, %v1041, %v1024
        %v1053 = vsel %vm1049, %v1042, %v1026
        %v1054 = vsel %vm1049, %v1043, %v1028
        %v1055 = vsel %vm1049, %v1044, %v1030
        %v1056 = vsel %vm1049, %v1045, %v1032
        %v1057 = vsel %vm1049, %v1046, %v1034
        %v1058 = vsel %vm1049, %v1047, %v1036
        %v1059 = vsel %vm1049, %v1048, %v1038
        %vm1070 = vcmask 1044448
        %vm1071 = vmor %vm638, %vm1070
        %1072 = vst.msk [vmem:[#allocation2 + $0x140] sm:$0xff] %vm1071, %v1050
        %1073 = vst.msk [vmem:[#allocation2 + $0x148] sm:$0xff] %vm1071, %v1051
        %1074 = vst.msk [vmem:[#allocation2 + $0x150] sm:$0xff] %vm1071, %v1052
        %1075 = vst.msk [vmem:[#allocation2 + $0x158] sm:$0xff] %vm1071, %v1053
        %1076 = vst.msk [vmem:[#allocation2 + $0x160] sm:$0xff] %vm1071, %v1054
        %1077 = vst.msk [vmem:[#allocation2 + $0x168] sm:$0xff] %vm1071, %v1055
        %1078 = vst.msk [vmem:[#allocation2 + $0x170] sm:$0xff] %vm1071, %v1056
        %1079 = vst.msk [vmem:[#allocation2 + $0x178] sm:$0xff] %vm1071, %v1057
        %1080 = vst.msk [vmem:[#allocation2 + $0x180] sm:$0xff] %vm1071, %v1058
        %1081 = vst.msk [vmem:[#allocation2 + $0x188] sm:$0xff] %vm1071, %v1059
        %v1082 = vld [vmem:[%s412] sm:$0xf]
        %v1083 = vld [vmem:[%s412 + $0x4] sm:$0xf]
        %v1084 = vld [vmem:[%s412 + $0x8] sm:$0xf]
        %v1085 = vld [vmem:[%s412 + $0xc] sm:$0xf]
        %v1086 = vld [vmem:[%s412 + $0x10] sm:$0xf]
        %v1087 = vld [vmem:[%s412 + $0x14] sm:$0xf]
        %v1088 = vld [vmem:[%s412 + $0x18] sm:$0xf]
        %v1089 = vld [vmem:[%s412 + $0x1c] sm:$0xf]
        %v1090 = vld [vmem:[%s412 + $0x20] sm:$0xf]
        %v1091 = vld [vmem:[%s412 + $0x24] sm:$0xf]
        %1102 = vrot.lane.b32.xlu0 %v1082, 123
        %v1103 = vpop.permute.xlu0 %1102
        %1104 = vrot.lane.b32.xlu0 %v1083, 123
        %v1105 = vpop.permute.xlu0 %1104
        %1106 = vrot.lane.b32.xlu0 %v1084, 123
        %v1107 = vpop.permute.xlu0 %1106
        %1108 = vrot.lane.b32.xlu0 %v1085, 123
        %v1109 = vpop.permute.xlu0 %1108
        %1110 = vrot.lane.b32.xlu0 %v1086, 123
        %v1111 = vpop.permute.xlu0 %1110
        %1112 = vrot.lane.b32.xlu0 %v1087, 123
        %v1113 = vpop.permute.xlu0 %1112
        %1114 = vrot.lane.b32.xlu0 %v1088, 123
        %v1115 = vpop.permute.xlu0 %1114
        %1116 = vrot.lane.b32.xlu0 %v1089, 123
        %v1117 = vpop.permute.xlu0 %1116
        %1118 = vrot.lane.b32.xlu0 %v1090, 123
        %v1119 = vpop.permute.xlu0 %1118
        %1120 = vrot.lane.b32.xlu0 %v1091, 123
        %v1121 = vpop.permute.xlu0 %1120
        %vm1132 = vcmask 1002496
        %1133 = vst.msk [vmem:[#allocation2 + $0x190] sm:$0xf] %vm1132, %v1103
        %1134 = vst.msk [vmem:[#allocation2 + $0x198] sm:$0xf] %vm1132, %v1105
        %1135 = vst.msk [vmem:[#allocation2 + $0x1a0] sm:$0xf] %vm1132, %v1107
        %1136 = vst.msk [vmem:[#allocation2 + $0x1a8] sm:$0xf] %vm1132, %v1109
        %1137 = vst.msk [vmem:[#allocation2 + $0x1b0] sm:$0xf] %vm1132, %v1111
        %1138 = vst.msk [vmem:[#allocation2 + $0x1b8] sm:$0xf] %vm1132, %v1113
        %1139 = vst.msk [vmem:[#allocation2 + $0x1c0] sm:$0xf] %vm1132, %v1115
        %1140 = vst.msk [vmem:[#allocation2 + $0x1c8] sm:$0xf] %vm1132, %v1117
        %1141 = vst.msk [vmem:[#allocation2 + $0x1d0] sm:$0xf] %vm1132, %v1119
        %1142 = vst.msk [vmem:[#allocation2 + $0x1d8] sm:$0xf] %vm1132, %v1121
        %v1143 = vld [vmem:[%s419] sm:$0xf]
        %v1144 = vld [vmem:[%s419 + $0x4] sm:$0xf]
        %v1145 = vld [vmem:[%s419 + $0x8] sm:$0xf]
        %v1146 = vld [vmem:[%s419 + $0xc] sm:$0xf]
        %v1147 = vld [vmem:[%s419 + $0x10] sm:$0xf]
        %v1148 = vld [vmem:[%s419 + $0x14] sm:$0xf]
        %v1149 = vld [vmem:[%s419 + $0x18] sm:$0xf]
        %v1150 = vld [vmem:[%s419 + $0x1c] sm:$0xf]
        %v1151 = vld [vmem:[%s419 + $0x20] sm:$0xf]
        %v1152 = vld [vmem:[%s419 + $0x24] sm:$0xf]
        %1163 = vrot.lane.b32.xlu0 %v1143, 123
        %v1164 = vpop.permute.xlu0 %1163
        %1165 = vrot.lane.b32.xlu0 %v1144, 123
        %v1166 = vpop.permute.xlu0 %1165
        %1167 = vrot.lane.b32.xlu0 %v1145, 123
        %v1168 = vpop.permute.xlu0 %1167
        %1169 = vrot.lane.b32.xlu0 %v1146, 123
        %v1170 = vpop.permute.xlu0 %1169
        %1171 = vrot.lane.b32.xlu0 %v1147, 123
        %v1172 = vpop.permute.xlu0 %1171
        %1173 = vrot.lane.b32.xlu0 %v1148, 123
        %v1174 = vpop.permute.xlu0 %1173
        %1175 = vrot.lane.b32.xlu0 %v1149, 123
        %v1176 = vpop.permute.xlu0 %1175
        %1177 = vrot.lane.b32.xlu0 %v1150, 123
        %v1178 = vpop.permute.xlu0 %1177
        %1179 = vrot.lane.b32.xlu0 %v1151, 123
        %v1180 = vpop.permute.xlu0 %1179
        %1181 = vrot.lane.b32.xlu0 %v1152, 123
        %v1182 = vpop.permute.xlu0 %1181
        %v1183 = vrot.slane %v1164, 4
        %v1184 = vrot.slane %v1166, 4
        %v1185 = vrot.slane %v1168, 4
        %v1186 = vrot.slane %v1170, 4
        %v1187 = vrot.slane %v1172, 4
        %v1188 = vrot.slane %v1174, 4
        %v1189 = vrot.slane %v1176, 4
        %v1190 = vrot.slane %v1178, 4
        %v1191 = vrot.slane %v1180, 4
        %v1192 = vrot.slane %v1182, 4
        %vm1193 = vcmask 1006592
        %v1194 = vsel %vm1193, %v1183, %v1164
        %v1195 = vsel %vm1193, %v1184, %v1166
        %v1196 = vsel %vm1193, %v1185, %v1168
        %v1197 = vsel %vm1193, %v1186, %v1170
        %v1198 = vsel %vm1193, %v1187, %v1172
        %v1199 = vsel %vm1193, %v1188, %v1174
        %v1200 = vsel %vm1193, %v1189, %v1176
        %v1201 = vsel %vm1193, %v1190, %v1178
        %v1202 = vsel %vm1193, %v1191, %v1180
        %v1203 = vsel %vm1193, %v1192, %v1182
        %vm1214 = vcmask 1044440
        %vm1215 = vmor %vm638, %vm1214
        %1216 = vst.msk [vmem:[#allocation2 + $0x190] sm:$0xff] %vm1215, %v1194
        %1217 = vst.msk [vmem:[#allocation2 + $0x198] sm:$0xff] %vm1215, %v1195
        %1218 = vst.msk [vmem:[#allocation2 + $0x1a0] sm:$0xff] %vm1215, %v1196
        %1219 = vst.msk [vmem:[#allocation2 + $0x1a8] sm:$0xff] %vm1215, %v1197
        %1220 = vst.msk [vmem:[#allocation2 + $0x1b0] sm:$0xff] %vm1215, %v1198
        %1221 = vst.msk [vmem:[#allocation2 + $0x1b8] sm:$0xff] %vm1215, %v1199
        %1222 = vst.msk [vmem:[#allocation2 + $0x1c0] sm:$0xff] %vm1215, %v1200
        %1223 = vst.msk [vmem:[#allocation2 + $0x1c8] sm:$0xff] %vm1215, %v1201
        %1224 = vst.msk [vmem:[#allocation2 + $0x1d0] sm:$0xff] %vm1215, %v1202
        %1225 = vst.msk [vmem:[#allocation2 + $0x1d8] sm:$0xff] %vm1215, %v1203
        %v1226 = vld [vmem:[%s412] sm:$0xf]
        %v1227 = vld [vmem:[%s412 + $0x4] sm:$0xf]
        %v1228 = vld [vmem:[%s412 + $0x8] sm:$0xf]
        %v1229 = vld [vmem:[%s412 + $0xc] sm:$0xf]
        %v1230 = vld [vmem:[%s412 + $0x10] sm:$0xf]
        %v1231 = vld [vmem:[%s412 + $0x14] sm:$0xf]
        %v1232 = vld [vmem:[%s412 + $0x18] sm:$0xf]
        %v1233 = vld [vmem:[%s412 + $0x1c] sm:$0xf]
        %v1234 = vld [vmem:[%s412 + $0x20] sm:$0xf]
        %v1235 = vld [vmem:[%s412 + $0x24] sm:$0xf]
        %1246 = vrot.lane.b32.xlu0 %v1226, 122
        %v1247 = vpop.permute.xlu0 %1246
        %1248 = vrot.lane.b32.xlu0 %v1227, 122
        %v1249 = vpop.permute.xlu0 %1248
        %1250 = vrot.lane.b32.xlu0 %v1228, 122
        %v1251 = vpop.permute.xlu0 %1250
        %1252 = vrot.lane.b32.xlu0 %v1229, 122
        %v1253 = vpop.permute.xlu0 %1252
        %1254 = vrot.lane.b32.xlu0 %v1230, 122
        %v1255 = vpop.permute.xlu0 %1254
        %1256 = vrot.lane.b32.xlu0 %v1231, 122
        %v1257 = vpop.permute.xlu0 %1256
        %1258 = vrot.lane.b32.xlu0 %v1232, 122
        %v1259 = vpop.permute.xlu0 %1258
        %1260 = vrot.lane.b32.xlu0 %v1233, 122
        %v1261 = vpop.permute.xlu0 %1260
        %1262 = vrot.lane.b32.xlu0 %v1234, 122
        %v1263 = vpop.permute.xlu0 %1262
        %1264 = vrot.lane.b32.xlu0 %v1235, 122
        %v1265 = vpop.permute.xlu0 %1264
        %vm1276 = vcmask 994304
        %1277 = vst.msk [vmem:[#allocation2 + $0x1e0] sm:$0xf] %vm1276, %v1247
        %1278 = vst.msk [vmem:[#allocation2 + $0x1e8] sm:$0xf] %vm1276, %v1249
        %1279 = vst.msk [vmem:[#allocation2 + $0x1f0] sm:$0xf] %vm1276, %v1251
        %1280 = vst.msk [vmem:[#allocation2 + $0x1f8] sm:$0xf] %vm1276, %v1253
        %1281 = vst.msk [vmem:[#allocation2 + $0x200] sm:$0xf] %vm1276, %v1255
        %1282 = vst.msk [vmem:[#allocation2 + $0x208] sm:$0xf] %vm1276, %v1257
        %1283 = vst.msk [vmem:[#allocation2 + $0x210] sm:$0xf] %vm1276, %v1259
        %1284 = vst.msk [vmem:[#allocation2 + $0x218] sm:$0xf] %vm1276, %v1261
        %1285 = vst.msk [vmem:[#allocation2 + $0x220] sm:$0xf] %vm1276, %v1263
        %1286 = vst.msk [vmem:[#allocation2 + $0x228] sm:$0xf] %vm1276, %v1265
        %v1287 = vld [vmem:[%s419] sm:$0xf]
        %v1288 = vld [vmem:[%s419 + $0x4] sm:$0xf]
        %v1289 = vld [vmem:[%s419 + $0x8] sm:$0xf]
        %v1290 = vld [vmem:[%s419 + $0xc] sm:$0xf]
        %v1291 = vld [vmem:[%s419 + $0x10] sm:$0xf]
        %v1292 = vld [vmem:[%s419 + $0x14] sm:$0xf]
        %v1293 = vld [vmem:[%s419 + $0x18] sm:$0xf]
        %v1294 = vld [vmem:[%s419 + $0x1c] sm:$0xf]
        %v1295 = vld [vmem:[%s419 + $0x20] sm:$0xf]
        %v1296 = vld [vmem:[%s419 + $0x24] sm:$0xf]
        %1307 = vrot.lane.b32.xlu0 %v1287, 122
        %v1308 = vpop.permute.xlu0 %1307
        %1309 = vrot.lane.b32.xlu0 %v1288, 122
        %v1310 = vpop.permute.xlu0 %1309
        %1311 = vrot.lane.b32.xlu0 %v1289, 122
        %v1312 = vpop.permute.xlu0 %1311
        %1313 = vrot.lane.b32.xlu0 %v1290, 122
        %v1314 = vpop.permute.xlu0 %1313
        %1315 = vrot.lane.b32.xlu0 %v1291, 122
        %v1316 = vpop.permute.xlu0 %1315
        %1317 = vrot.lane.b32.xlu0 %v1292, 122
        %v1318 = vpop.permute.xlu0 %1317
        %1319 = vrot.lane.b32.xlu0 %v1293, 122
        %v1320 = vpop.permute.xlu0 %1319
        %1321 = vrot.lane.b32.xlu0 %v1294, 122
        %v1322 = vpop.permute.xlu0 %1321
        %1323 = vrot.lane.b32.xlu0 %v1295, 122
        %v1324 = vpop.permute.xlu0 %1323
        %1325 = vrot.lane.b32.xlu0 %v1296, 122
        %v1326 = vpop.permute.xlu0 %1325
        %v1327 = vrot.slane %v1308, 4
        %v1328 = vrot.slane %v1310, 4
        %v1329 = vrot.slane %v1312, 4
        %v1330 = vrot.slane %v1314, 4
        %v1331 = vrot.slane %v1316, 4
        %v1332 = vrot.slane %v1318, 4
        %v1333 = vrot.slane %v1320, 4
        %v1334 = vrot.slane %v1322, 4
        %v1335 = vrot.slane %v1324, 4
        %v1336 = vrot.slane %v1326, 4
        %vm1337 = vcmask 998400
        %v1338 = vsel %vm1337, %v1327, %v1308
        %v1339 = vsel %vm1337, %v1328, %v1310
        %v1340 = vsel %vm1337, %v1329, %v1312
        %v1341 = vsel %vm1337, %v1330, %v1314
        %v1342 = vsel %vm1337, %v1331, %v1316
        %v1343 = vsel %vm1337, %v1332, %v1318
        %v1344 = vsel %vm1337, %v1333, %v1320
        %v1345 = vsel %vm1337, %v1334, %v1322
        %v1346 = vsel %vm1337, %v1335, %v1324
        %v1347 = vsel %vm1337, %v1336, %v1326
        %vm1358 = vcmask 1044432
        %vm1359 = vmor %vm638, %vm1358
        %1360 = vst.msk [vmem:[#allocation2 + $0x1e0] sm:$0xff] %vm1359, %v1338
        %1361 = vst.msk [vmem:[#allocation2 + $0x1e8] sm:$0xff] %vm1359, %v1339
        %1362 = vst.msk [vmem:[#allocation2 + $0x1f0] sm:$0xff] %vm1359, %v1340
        %1363 = vst.msk [vmem:[#allocation2 + $0x1f8] sm:$0xff] %vm1359, %v1341
        %1364 = vst.msk [vmem:[#allocation2 + $0x200] sm:$0xff] %vm1359, %v1342
        %1365 = vst.msk [vmem:[#allocation2 + $0x208] sm:$0xff] %vm1359, %v1343
        %1366 = vst.msk [vmem:[#allocation2 + $0x210] sm:$0xff] %vm1359, %v1344
        %1367 = vst.msk [vmem:[#allocation2 + $0x218] sm:$0xff] %vm1359, %v1345
        %1368 = vst.msk [vmem:[#allocation2 + $0x220] sm:$0xff] %vm1359, %v1346
        %1369 = vst.msk [vmem:[#allocation2 + $0x228] sm:$0xff] %vm1359, %v1347
        %v1370 = vld [vmem:[%s2] sm:$0xff]
        %v1371 = vld [vmem:[%s2 + $0x8] sm:$0xff]
        %v1372 = vld [vmem:[%s2 + $0x10] sm:$0xf]
        %v1373 = vld [vmem:[%s2 + $0x14] sm:$0xff]
        %v1374 = vld [vmem:[%s2 + $0x1c] sm:$0xff]
        %v1375 = vld [vmem:[%s2 + $0x24] sm:$0xf]
        %v1376 = vld [vmem:[%s2 + $0x28] sm:$0xff]
        %v1377 = vld [vmem:[%s2 + $0x30] sm:$0xff]
        %v1378 = vld [vmem:[%s2 + $0x38] sm:$0xf]
        %v1379 = vld [vmem:[%s2 + $0x3c] sm:$0xff]
        %v1380 = vld [vmem:[%s2 + $0x44] sm:$0xff]
        %v1381 = vld [vmem:[%s2 + $0x4c] sm:$0xf]
        %v1382 = vld [vmem:[#allocation2] sm:$0xff]
        %v1383 = vld [vmem:[#allocation2 + $0x8] sm:$0xff]
        %v1384 = vld [vmem:[#allocation2 + $0x10] sm:$0xff]
        %v1385 = vld [vmem:[#allocation2 + $0x18] sm:$0xff]
        %v1386 = vld [vmem:[#allocation2 + $0x20] sm:$0xff]
        %v1387 = vld [vmem:[#allocation2 + $0x28] sm:$0xff]
        %v1388 = vld [vmem:[#allocation2 + $0x30] sm:$0xff]
        %v1389 = vld [vmem:[#allocation2 + $0x38] sm:$0xff]
        %v1390 = vld [vmem:[#allocation2 + $0x40] sm:$0xff]
        %v1391 = vld [vmem:[#allocation2 + $0x48] sm:$0xff]
        %v1392 = vld [vmem:[#allocation2 + $0x50] sm:$0xff]
        %v1393 = vld [vmem:[#allocation2 + $0x58] sm:$0xff]
        %v1394 = vld [vmem:[#allocation2 + $0x60] sm:$0xff]
        %v1395 = vld [vmem:[#allocation2 + $0x68] sm:$0xff]
        %v1396 = vld [vmem:[#allocation2 + $0x70] sm:$0xff]
        %v1397 = vld [vmem:[#allocation2 + $0x78] sm:$0xff]
        %v1398 = vld [vmem:[#allocation2 + $0x80] sm:$0xff]
        %v1399 = vld [vmem:[#allocation2 + $0x88] sm:$0xff]
        %v1400 = vld [vmem:[#allocation2 + $0x90] sm:$0xff]
        %v1401 = vld [vmem:[#allocation2 + $0x98] sm:$0xff]
        %v1402 = vld [vmem:[#allocation2 + $0xa0] sm:$0xff]
        %v1403 = vld [vmem:[#allocation2 + $0xa8] sm:$0xff]
        %v1404 = vld [vmem:[#allocation2 + $0xb0] sm:$0xff]
        %v1405 = vld [vmem:[#allocation2 + $0xb8] sm:$0xff]
        %v1406 = vld [vmem:[#allocation2 + $0xc0] sm:$0xff]
        %v1407 = vld [vmem:[#allocation2 + $0xc8] sm:$0xff]
        %v1408 = vld [vmem:[#allocation2 + $0xd0] sm:$0xff]
        %v1409 = vld [vmem:[#allocation2 + $0xd8] sm:$0xff]
        %v1410 = vld [vmem:[#allocation2 + $0xe0] sm:$0xff]
        %v1411 = vld [vmem:[#allocation2 + $0xe8] sm:$0xff]
        %v1412 = vld [vmem:[#allocation2 + $0xf0] sm:$0xff]
        %v1413 = vld [vmem:[#allocation2 + $0xf8] sm:$0xff]
        %v1414 = vld [vmem:[#allocation2 + $0x100] sm:$0xff]
        %v1415 = vld [vmem:[#allocation2 + $0x108] sm:$0xff]
        %v1416 = vld [vmem:[#allocation2 + $0x110] sm:$0xff]
        %v1417 = vld [vmem:[#allocation2 + $0x118] sm:$0xff]
        %v1418 = vld [vmem:[#allocation2 + $0x120] sm:$0xff]
        %v1419 = vld [vmem:[#allocation2 + $0x128] sm:$0xff]
        %v1420 = vld [vmem:[#allocation2 + $0x130] sm:$0xff]
        %v1421 = vld [vmem:[#allocation2 + $0x138] sm:$0xff]
        %v1422 = vld [vmem:[#allocation2 + $0x140] sm:$0xff]
        %v1423 = vld [vmem:[#allocation2 + $0x148] sm:$0xff]
        %v1424 = vld [vmem:[#allocation2 + $0x150] sm:$0xff]
        %v1425 = vld [vmem:[#allocation2 + $0x158] sm:$0xff]
        %v1426 = vld [vmem:[#allocation2 + $0x160] sm:$0xff]
        %v1427 = vld [vmem:[#allocation2 + $0x168] sm:$0xff]
        %v1428 = vld [vmem:[#allocation2 + $0x170] sm:$0xff]
        %v1429 = vld [vmem:[#allocation2 + $0x178] sm:$0xff]
        %v1430 = vld [vmem:[#allocation2 + $0x180] sm:$0xff]
        %v1431 = vld [vmem:[#allocation2 + $0x188] sm:$0xff]
        %v1432 = vld [vmem:[#allocation2 + $0x190] sm:$0xff]
        %v1433 = vld [vmem:[#allocation2 + $0x198] sm:$0xff]
        %v1434 = vld [vmem:[#allocation2 + $0x1a0] sm:$0xff]
        %v1435 = vld [vmem:[#allocation2 + $0x1a8] sm:$0xff]
        %v1436 = vld [vmem:[#allocation2 + $0x1b0] sm:$0xff]
        %v1437 = vld [vmem:[#allocation2 + $0x1b8] sm:$0xff]
        %v1438 = vld [vmem:[#allocation2 + $0x1c0] sm:$0xff]
        %v1439 = vld [vmem:[#allocation2 + $0x1c8] sm:$0xff]
        %v1440 = vld [vmem:[#allocation2 + $0x1d0] sm:$0xff]
        %v1441 = vld [vmem:[#allocation2 + $0x1d8] sm:$0xff]
        %v1442 = vld [vmem:[#allocation2 + $0x1e0] sm:$0xff]
        %v1443 = vld [vmem:[#allocation2 + $0x1e8] sm:$0xff]
        %v1444 = vld [vmem:[#allocation2 + $0x1f0] sm:$0xff]
        %v1445 = vld [vmem:[#allocation2 + $0x1f8] sm:$0xff]
        %v1446 = vld [vmem:[#allocation2 + $0x200] sm:$0xff]
        %v1447 = vld [vmem:[#allocation2 + $0x208] sm:$0xff]
        %v1448 = vld [vmem:[#allocation2 + $0x210] sm:$0xff]
        %v1449 = vld [vmem:[#allocation2 + $0x218] sm:$0xff]
        %v1450 = vld [vmem:[#allocation2 + $0x220] sm:$0xff]
        %v1451 = vld [vmem:[#allocation2 + $0x228] sm:$0xff]
        %v1452 = vld [vmem:[%s3] sm:$0xff]
        %v1453 = vld [vmem:[%s3 + $0x8] sm:$0xff]
        %v1454 = vld [vmem:[%s3 + $0x10] sm:$0xff]
        %v1455 = vld [vmem:[%s3 + $0x18] sm:$0xff]
        %1457 = vset.pattern.permute.xlu0 0
        %1458 = vperm.xlu0 %1457, %v1452
        %v1459 = vpop.permute.xlu0 %1458
        %1462 = vset.pattern.permute.xlu0 0
        %1463 = vperm.xlu0 %1462, %v1453
        %v1464 = vpop.permute.xlu0 %1463
        %1467 = vset.pattern.permute.xlu0 0
        %1468 = vperm.xlu0 %1467, %v1454
        %v1469 = vpop.permute.xlu0 %1468
        %1472 = vset.pattern.permute.xlu0 0
        %1473 = vperm.xlu0 %1472, %v1455
        %v1474 = vpop.permute.xlu0 %1473
        %v1488 = vunpack.c.l.b16 %v1370
        %v1489 = vunpack.c.h.b16 %v1370
        %v1490 = vunpack.c.l.b16 %v1371
        %v1491 = vunpack.c.h.b16 %v1371
        %v1492 = vunpack.c.l.b16 %v1372
        %v1493 = vunpack.c.l.b16 %v1373
        %v1494 = vunpack.c.h.b16 %v1373
        %v1495 = vunpack.c.l.b16 %v1374
        %v1496 = vunpack.c.h.b16 %v1374
        %v1497 = vunpack.c.l.b16 %v1375
        %v1498 = vunpack.c.l.b16 %v1376
        %v1499 = vunpack.c.h.b16 %v1376
        %v1500 = vunpack.c.l.b16 %v1377
        %v1501 = vunpack.c.h.b16 %v1377
        %v1502 = vunpack.c.l.b16 %v1378
        %v1503 = vunpack.c.l.b16 %v1379
        %v1504 = vunpack.c.h.b16 %v1379
        %v1505 = vunpack.c.l.b16 %v1380
        %v1506 = vunpack.c.h.b16 %v1380
        %v1507 = vunpack.c.l.b16 %v1381
        %v1508 = vpack.c.b16 %v1493, %v1488
        %v1509 = vpack.c.b16 %v1494, %v1489
        %v1510 = vpack.c.b16 %v1495, %v1490
        %v1511 = vpack.c.b16 %v1496, %v1491
        %v1512 = vpack.c.b16 %v1497, %v1492
        %v1513 = vpack.c.b16 %v1503, %v1498
        %v1514 = vpack.c.b16 %v1504, %v1499
        %v1515 = vpack.c.b16 %v1505, %v1500
        %v1516 = vpack.c.b16 %v1506, %v1501
        %v1517 = vpack.c.b16 %v1507, %v1502
        %v1596 = vunpack.c.l.b16 %v1382
        %v1597 = vunpack.c.h.b16 %v1382
        %v1598 = vunpack.c.l.b16 %v1383
        %v1599 = vunpack.c.h.b16 %v1383
        %v1600 = vunpack.c.l.b16 %v1384
        %v1601 = vunpack.c.h.b16 %v1384
        %v1602 = vunpack.c.l.b16 %v1385
        %v1603 = vunpack.c.h.b16 %v1385
        %v1604 = vunpack.c.l.b16 %v1386
        %v1605 = vunpack.c.h.b16 %v1386
        %v1606 = vunpack.c.l.b16 %v1387
        %v1607 = vunpack.c.h.b16 %v1387
        %v1608 = vunpack.c.l.b16 %v1388
        %v1609 = vunpack.c.h.b16 %v1388
        %v1610 = vunpack.c.l.b16 %v1389
        %v1611 = vunpack.c.h.b16 %v1389
        %v1612 = vunpack.c.l.b16 %v1390
        %v1613 = vunpack.c.h.b16 %v1390
        %v1614 = vunpack.c.l.b16 %v1391
        %v1615 = vunpack.c.h.b16 %v1391
        %v1616 = vunpack.c.l.b16 %v1392
        %v1617 = vunpack.c.h.b16 %v1392
        %v1618 = vunpack.c.l.b16 %v1393
        %v1619 = vunpack.c.h.b16 %v1393
        %v1620 = vunpack.c.l.b16 %v1394
        %v1621 = vunpack.c.h.b16 %v1394
        %v1622 = vunpack.c.l.b16 %v1395
        %v1623 = vunpack.c.h.b16 %v1395
        %v1624 = vunpack.c.l.b16 %v1396
        %v1625 = vunpack.c.h.b16 %v1396
        %v1626 = vunpack.c.l.b16 %v1397
        %v1627 = vunpack.c.h.b16 %v1397
        %v1628 = vunpack.c.l.b16 %v1398
        %v1629 = vunpack.c.h.b16 %v1398
        %v1630 = vunpack.c.l.b16 %v1399
        %v1631 = vunpack.c.h.b16 %v1399
        %v1632 = vunpack.c.l.b16 %v1400
        %v1633 = vunpack.c.h.b16 %v1400
        %v1634 = vunpack.c.l.b16 %v1401
        %v1635 = vunpack.c.h.b16 %v1401
        %v1636 = vunpack.c.l.b16 %v1402
        %v1637 = vunpack.c.h.b16 %v1402
        %v1638 = vunpack.c.l.b16 %v1403
        %v1639 = vunpack.c.h.b16 %v1403
        %v1640 = vunpack.c.l.b16 %v1404
        %v1641 = vunpack.c.h.b16 %v1404
        %v1642 = vunpack.c.l.b16 %v1405
        %v1643 = vunpack.c.h.b16 %v1405
        %v1644 = vunpack.c.l.b16 %v1406
        %v1645 = vunpack.c.h.b16 %v1406
        %v1646 = vunpack.c.l.b16 %v1407
        %v1647 = vunpack.c.h.b16 %v1407
        %v1648 = vunpack.c.l.b16 %v1408
        %v1649 = vunpack.c.h.b16 %v1408
        %v1650 = vunpack.c.l.b16 %v1409
        %v1651 = vunpack.c.h.b16 %v1409
        %v1652 = vunpack.c.l.b16 %v1410
        %v1653 = vunpack.c.h.b16 %v1410
        %v1654 = vunpack.c.l.b16 %v1411
        %v1655 = vunpack.c.h.b16 %v1411
        %v1656 = vunpack.c.l.b16 %v1412
        %v1657 = vunpack.c.h.b16 %v1412
        %v1658 = vunpack.c.l.b16 %v1413
        %v1659 = vunpack.c.h.b16 %v1413
        %v1660 = vunpack.c.l.b16 %v1414
        %v1661 = vunpack.c.h.b16 %v1414
        %v1662 = vunpack.c.l.b16 %v1415
        %v1663 = vunpack.c.h.b16 %v1415
        %v1664 = vunpack.c.l.b16 %v1416
        %v1665 = vunpack.c.h.b16 %v1416
        %v1666 = vunpack.c.l.b16 %v1417
        %v1667 = vunpack.c.h.b16 %v1417
        %v1668 = vunpack.c.l.b16 %v1418
        %v1669 = vunpack.c.h.b16 %v1418
        %v1670 = vunpack.c.l.b16 %v1419
        %v1671 = vunpack.c.h.b16 %v1419
        %v1672 = vunpack.c.l.b16 %v1420
        %v1673 = vunpack.c.h.b16 %v1420
        %v1674 = vunpack.c.l.b16 %v1421
        %v1675 = vunpack.c.h.b16 %v1421
        %v1676 = vunpack.c.l.b16 %v1422
        %v1677 = vunpack.c.h.b16 %v1422
        %v1678 = vunpack.c.l.b16 %v1423
        %v1679 = vunpack.c.h.b16 %v1423
        %v1680 = vunpack.c.l.b16 %v1424
        %v1681 = vunpack.c.h.b16 %v1424
        %v1682 = vunpack.c.l.b16 %v1425
        %v1683 = vunpack.c.h.b16 %v1425
        %v1684 = vunpack.c.l.b16 %v1426
        %v1685 = vunpack.c.h.b16 %v1426
        %v1686 = vunpack.c.l.b16 %v1427
        %v1687 = vunpack.c.h.b16 %v1427
        %v1688 = vunpack.c.l.b16 %v1428
        %v1689 = vunpack.c.h.b16 %v1428
        %v1690 = vunpack.c.l.b16 %v1429
        %v1691 = vunpack.c.h.b16 %v1429
        %v1692 = vunpack.c.l.b16 %v1430
        %v1693 = vunpack.c.h.b16 %v1430
        %v1694 = vunpack.c.l.b16 %v1431
        %v1695 = vunpack.c.h.b16 %v1431
        %v1696 = vunpack.c.l.b16 %v1432
        %v1697 = vunpack.c.h.b16 %v1432
        %v1698 = vunpack.c.l.b16 %v1433
        %v1699 = vunpack.c.h.b16 %v1433
        %v1700 = vunpack.c.l.b16 %v1434
        %v1701 = vunpack.c.h.b16 %v1434
        %v1702 = vunpack.c.l.b16 %v1435
        %v1703 = vunpack.c.h.b16 %v1435
        %v1704 = vunpack.c.l.b16 %v1436
        %v1705 = vunpack.c.h.b16 %v1436
        %v1706 = vunpack.c.l.b16 %v1437
        %v1707 = vunpack.c.h.b16 %v1437
        %v1708 = vunpack.c.l.b16 %v1438
        %v1709 = vunpack.c.h.b16 %v1438
        %v1710 = vunpack.c.l.b16 %v1439
        %v1711 = vunpack.c.h.b16 %v1439
        %v1712 = vunpack.c.l.b16 %v1440
        %v1713 = vunpack.c.h.b16 %v1440
        %v1714 = vunpack.c.l.b16 %v1441
        %v1715 = vunpack.c.h.b16 %v1441
        %v1716 = vunpack.c.l.b16 %v1442
        %v1717 = vunpack.c.h.b16 %v1442
        %v1718 = vunpack.c.l.b16 %v1443
        %v1719 = vunpack.c.h.b16 %v1443
        %v1720 = vunpack.c.l.b16 %v1444
        %v1721 = vunpack.c.h.b16 %v1444
        %v1722 = vunpack.c.l.b16 %v1445
        %v1723 = vunpack.c.h.b16 %v1445
        %v1724 = vunpack.c.l.b16 %v1446
        %v1725 = vunpack.c.h.b16 %v1446
        %v1726 = vunpack.c.l.b16 %v1447
        %v1727 = vunpack.c.h.b16 %v1447
        %v1728 = vunpack.c.l.b16 %v1448
        %v1729 = vunpack.c.h.b16 %v1448
        %v1730 = vunpack.c.l.b16 %v1449
        %v1731 = vunpack.c.h.b16 %v1449
        %v1732 = vunpack.c.l.b16 %v1450
        %v1733 = vunpack.c.h.b16 %v1450
        %v1734 = vunpack.c.l.b16 %v1451
        %v1735 = vunpack.c.h.b16 %v1451
        %v1736 = vpack.c.b16 %v1598, %v1596
        %v1737 = vpack.c.b16 %v1599, %v1597
        %v1738 = vpack.c.b16 %v1602, %v1600
        %v1739 = vpack.c.b16 %v1603, %v1601
        %v1740 = vpack.c.b16 %v1606, %v1604
        %v1741 = vpack.c.b16 %v1607, %v1605
        %v1742 = vpack.c.b16 %v1610, %v1608
        %v1743 = vpack.c.b16 %v1611, %v1609
        %v1744 = vpack.c.b16 %v1614, %v1612
        %v1745 = vpack.c.b16 %v1615, %v1613
        %v1746 = vpack.c.b16 %v1618, %v1616
        %v1747 = vpack.c.b16 %v1619, %v1617
        %v1748 = vpack.c.b16 %v1622, %v1620
        %v1749 = vpack.c.b16 %v1623, %v1621
        %v1750 = vpack.c.b16 %v1626, %v1624
        %v1751 = vpack.c.b16 %v1627, %v1625
        %v1752 = vpack.c.b16 %v1630, %v1628
        %v1753 = vpack.c.b16 %v1631, %v1629
        %v1754 = vpack.c.b16 %v1634, %v1632
        %v1755 = vpack.c.b16 %v1635, %v1633
        %v1756 = vpack.c.b16 %v1638, %v1636
        %v1757 = vpack.c.b16 %v1639, %v1637
        %v1758 = vpack.c.b16 %v1642, %v1640
        %v1759 = vpack.c.b16 %v1643, %v1641
        %v1760 = vpack.c.b16 %v1646, %v1644
        %v1761 = vpack.c.b16 %v1647, %v1645
        %v1762 = vpack.c.b16 %v1650, %v1648
        %v1763 = vpack.c.b16 %v1651, %v1649
        %v1764 = vpack.c.b16 %v1654, %v1652
        %v1765 = vpack.c.b16 %v1655, %v1653
        %v1766 = vpack.c.b16 %v1658, %v1656
        %v1767 = vpack.c.b16 %v1659, %v1657
        %v1768 = vpack.c.b16 %v1662, %v1660
        %v1769 = vpack.c.b16 %v1663, %v1661
        %v1770 = vpack.c.b16 %v1666, %v1664
        %v1771 = vpack.c.b16 %v1667, %v1665
        %v1772 = vpack.c.b16 %v1670, %v1668
        %v1773 = vpack.c.b16 %v1671, %v1669
        %v1774 = vpack.c.b16 %v1674, %v1672
        %v1775 = vpack.c.b16 %v1675, %v1673
        %v1776 = vpack.c.b16 %v1678, %v1676
        %v1777 = vpack.c.b16 %v1679, %v1677
        %v1778 = vpack.c.b16 %v1682, %v1680
        %v1779 = vpack.c.b16 %v1683, %v1681
        %v1780 = vpack.c.b16 %v1686, %v1684
        %v1781 = vpack.c.b16 %v1687, %v1685
        %v1782 = vpack.c.b16 %v1690, %v1688
        %v1783 = vpack.c.b16 %v1691, %v1689
        %v1784 = vpack.c.b16 %v1694, %v1692
        %v1785 = vpack.c.b16 %v1695, %v1693
        %v1786 = vpack.c.b16 %v1698, %v1696
        %v1787 = vpack.c.b16 %v1699, %v1697
        %v1788 = vpack.c.b16 %v1702, %v1700
        %v1789 = vpack.c.b16 %v1703, %v1701
        %v1790 = vpack.c.b16 %v1706, %v1704
        %v1791 = vpack.c.b16 %v1707, %v1705
        %v1792 = vpack.c.b16 %v1710, %v1708
        %v1793 = vpack.c.b16 %v1711, %v1709
        %v1794 = vpack.c.b16 %v1714, %v1712
        %v1795 = vpack.c.b16 %v1715, %v1713
        %v1796 = vpack.c.b16 %v1718, %v1716
        %v1797 = vpack.c.b16 %v1719, %v1717
        %v1798 = vpack.c.b16 %v1722, %v1720
        %v1799 = vpack.c.b16 %v1723, %v1721
        %v1800 = vpack.c.b16 %v1726, %v1724
        %v1801 = vpack.c.b16 %v1727, %v1725
        %v1802 = vpack.c.b16 %v1730, %v1728
        %v1803 = vpack.c.b16 %v1731, %v1729
        %v1804 = vpack.c.b16 %v1734, %v1732
        %v1805 = vpack.c.b16 %v1735, %v1733
        %vm1876 = vcmask 392192
        %v1878 = vsel %vm1876, %v1512, 0
        %v1881 = vsel %vm1876, %v1517, 0
        %1883 = vmatpush.bf16.msra.mxu0 %v1750
        %1884 = vmatpush.bf16.msra.mxu0 %v1748
        %1885 = vmatpush.bf16.msra.mxu0 %v1746
        %1886 = vmatpush.bf16.msra.mxu0 %v1744
        %1887 = vmatpush.bf16.msra.mxu0 %v1742
        %1888 = vmatpush.bf16.msra.mxu0 %v1740
        %1889 = vmatpush.bf16.msra.mxu0 %v1738
        %1890 = vmatpush.bf16.msra.mxu0 %v1736
        %1891 = vmatmul.bf16.gmra.mxu0 %v1508
        %v1892 = vpop.f32.mrf.mxu0
        %v1893 = vadd.f32 %v1459, %v1892
        %v1894 = vpop.f32.mrf.mxu0
        %v1895 = vadd.f32 %v1464, %v1894
        %1896 = vmatmul.bf16.gmra.mxu0 %v1513
        %v1897 = vpop.f32.mrf.mxu0
        %v1898 = vadd.f32 %v1469, %v1897
        %v1899 = vpop.f32.mrf.mxu0
        %v1900 = vadd.f32 %v1474, %v1899
        %1901 = vdwg.mxu0
        %1902 = vmatpush.bf16.msra.mxu0 %v1766
        %1903 = vmatpush.bf16.msra.mxu0 %v1764
        %1904 = vmatpush.bf16.msra.mxu0 %v1762
        %1905 = vmatpush.bf16.msra.mxu0 %v1760
        %1906 = vmatpush.bf16.msra.mxu0 %v1758
        %1907 = vmatpush.bf16.msra.mxu0 %v1756
        %1908 = vmatpush.bf16.msra.mxu0 %v1754
        %1909 = vmatpush.bf16.msra.mxu0 %v1752
        %1910 = vmatmul.bf16.gmra.mxu0 %v1509
        %v1911 = vpop.f32.mrf.mxu0
        %v1912 = vadd.f32 %v1893, %v1911
        %v1913 = vpop.f32.mrf.mxu0
        %v1914 = vadd.f32 %v1895, %v1913
        %1915 = vmatmul.bf16.gmra.mxu0 %v1514
        %v1916 = vpop.f32.mrf.mxu0
        %v1917 = vadd.f32 %v1898, %v1916
        %v1918 = vpop.f32.mrf.mxu0
        %v1919 = vadd.f32 %v1900, %v1918
        %1920 = vdwg.mxu0
        %1921 = vmatpush.bf16.msra.mxu0 %v1782
        %1922 = vmatpush.bf16.msra.mxu0 %v1780
        %1923 = vmatpush.bf16.msra.mxu0 %v1778
        %1924 = vmatpush.bf16.msra.mxu0 %v1776
        %1925 = vmatpush.bf16.msra.mxu0 %v1774
        %1926 = vmatpush.bf16.msra.mxu0 %v1772
        %1927 = vmatpush.bf16.msra.mxu0 %v1770
        %1928 = vmatpush.bf16.msra.mxu0 %v1768
        %1929 = vmatmul.bf16.gmra.mxu0 %v1510
        %v1930 = vpop.f32.mrf.mxu0
        %v1931 = vadd.f32 %v1912, %v1930
        %v1932 = vpop.f32.mrf.mxu0
        %v1933 = vadd.f32 %v1914, %v1932
        %1934 = vmatmul.bf16.gmra.mxu0 %v1515
        %v1935 = vpop.f32.mrf.mxu0
        %v1936 = vadd.f32 %v1917, %v1935
        %v1937 = vpop.f32.mrf.mxu0
        %v1938 = vadd.f32 %v1919, %v1937
        %1939 = vdwg.mxu0
        %1940 = vmatpush.bf16.msra.mxu0 %v1798
        %1941 = vmatpush.bf16.msra.mxu0 %v1796
        %1942 = vmatpush.bf16.msra.mxu0 %v1794
        %1943 = vmatpush.bf16.msra.mxu0 %v1792
        %1944 = vmatpush.bf16.msra.mxu0 %v1790
        %1945 = vmatpush.bf16.msra.mxu0 %v1788
        %1946 = vmatpush.bf16.msra.mxu0 %v1786
        %1947 = vmatpush.bf16.msra.mxu0 %v1784
        %1948 = vmatmul.bf16.gmra.mxu0 %v1511
        %v1949 = vpop.f32.mrf.mxu0
        %v1950 = vadd.f32 %v1931, %v1949
        %v1951 = vpop.f32.mrf.mxu0
        %v1952 = vadd.f32 %v1933, %v1951
        %1953 = vmatmul.bf16.gmra.mxu0 %v1516
        %v1954 = vpop.f32.mrf.mxu0
        %v1955 = vadd.f32 %v1936, %v1954
        %v1956 = vpop.f32.mrf.mxu0
        %v1957 = vadd.f32 %v1938, %v1956
        %1958 = vdwg.mxu0
        %1959 = vmatpush.bf16.msra.mxu0 0
        %1960 = vmatpush.bf16.msra.mxu0 0
        %1961 = vmatpush.bf16.msra.mxu0 0
        %1962 = vmatpush.bf16.msra.mxu0 0
        %1963 = vmatpush.bf16.msra.mxu0 0
        %1964 = vmatpush.bf16.msra.mxu0 %v1804
        %1965 = vmatpush.bf16.msra.mxu0 %v1802
        %1966 = vmatpush.bf16.msra.mxu0 %v1800
        %1967 = vmatmul.bf16.gmra.mxu0 %v1878
        %v1968 = vpop.f32.mrf.mxu0
        %v1969 = vadd.f32 %v1950, %v1968
        %v1970 = vpop.f32.mrf.mxu0
        %v1971 = vadd.f32 %v1952, %v1970
        %1972 = vmatmul.bf16.gmra.mxu0 %v1881
        %v1973 = vpop.f32.mrf.mxu0
        %v1974 = vadd.f32 %v1955, %v1973
        %v1975 = vpop.f32.mrf.mxu0
        %v1976 = vadd.f32 %v1957, %v1975
        %1977 = vdwg.mxu0
        %1978 = vmatpush.bf16.msra.mxu0 %v1751
        %1979 = vmatpush.bf16.msra.mxu0 %v1749
        %1980 = vmatpush.bf16.msra.mxu0 %v1747
        %1981 = vmatpush.bf16.msra.mxu0 %v1745
        %1982 = vmatpush.bf16.msra.mxu0 %v1743
        %1983 = vmatpush.bf16.msra.mxu0 %v1741
        %1984 = vmatpush.bf16.msra.mxu0 %v1739
        %1985 = vmatpush.bf16.msra.mxu0 %v1737
        %1986 = vmatmul.bf16.gmra.mxu0 %v1508
        %v1987 = vpop.f32.mrf.mxu0
        %v1988 = vadd.f32 %v1459, %v1987
        %v1989 = vpop.f32.mrf.mxu0
        %v1990 = vadd.f32 %v1464, %v1989
        %1991 = vmatmul.bf16.gmra.mxu0 %v1513
        %v1992 = vpop.f32.mrf.mxu0
        %v1993 = vadd.f32 %v1469, %v1992
        %v1994 = vpop.f32.mrf.mxu0
        %v1995 = vadd.f32 %v1474, %v1994
        %1996 = vdwg.mxu0
        %1997 = vmatpush.bf16.msra.mxu0 %v1767
        %1998 = vmatpush.bf16.msra.mxu0 %v1765
        %1999 = vmatpush.bf16.msra.mxu0 %v1763
        %2000 = vmatpush.bf16.msra.mxu0 %v1761
        %2001 = vmatpush.bf16.msra.mxu0 %v1759
        %2002 = vmatpush.bf16.msra.mxu0 %v1757
        %2003 = vmatpush.bf16.msra.mxu0 %v1755
        %2004 = vmatpush.bf16.msra.mxu0 %v1753
        %2005 = vmatmul.bf16.gmra.mxu0 %v1509
        %v2006 = vpop.f32.mrf.mxu0
        %v2007 = vadd.f32 %v1988, %v2006
        %v2008 = vpop.f32.mrf.mxu0
        %v2009 = vadd.f32 %v1990, %v2008
        %2010 = vmatmul.bf16.gmra.mxu0 %v1514
        %v2011 = vpop.f32.mrf.mxu0
        %v2012 = vadd.f32 %v1993, %v2011
        %v2013 = vpop.f32.mrf.mxu0
        %v2014 = vadd.f32 %v1995, %v2013
        %2015 = vdwg.mxu0
        %2016 = vmatpush.bf16.msra.mxu0 %v1783
        %2017 = vmatpush.bf16.msra.mxu0 %v1781
        %2018 = vmatpush.bf16.msra.mxu0 %v1779
        %2019 = vmatpush.bf16.msra.mxu0 %v1777
        %2020 = vmatpush.bf16.msra.mxu0 %v1775
        %2021 = vmatpush.bf16.msra.mxu0 %v1773
        %2022 = vmatpush.bf16.msra.mxu0 %v1771
        %2023 = vmatpush.bf16.msra.mxu0 %v1769
        %2024 = vmatmul.bf16.gmra.mxu0 %v1510
        %v2025 = vpop.f32.mrf.mxu0
        %v2026 = vadd.f32 %v2007, %v2025
        %v2027 = vpop.f32.mrf.mxu0
        %v2028 = vadd.f32 %v2009, %v2027
        %2029 = vmatmul.bf16.gmra.mxu0 %v1515
        %v2030 = vpop.f32.mrf.mxu0
        %v2031 = vadd.f32 %v2012, %v2030
        %v2032 = vpop.f32.mrf.mxu0
        %v2033 = vadd.f32 %v2014, %v2032
        %2034 = vdwg.mxu0
        %2035 = vmatpush.bf16.msra.mxu0 %v1799
        %2036 = vmatpush.bf16.msra.mxu0 %v1797
        %2037 = vmatpush.bf16.msra.mxu0 %v1795
        %2038 = vmatpush.bf16.msra.mxu0 %v1793
        %2039 = vmatpush.bf16.msra.mxu0 %v1791
        %2040 = vmatpush.bf16.msra.mxu0 %v1789
        %2041 = vmatpush.bf16.msra.mxu0 %v1787
        %2042 = vmatpush.bf16.msra.mxu0 %v1785
        %2043 = vmatmul.bf16.gmra.mxu0 %v1511
        %v2044 = vpop.f32.mrf.mxu0
        %v2045 = vadd.f32 %v2026, %v2044
        %v2046 = vpop.f32.mrf.mxu0
        %v2047 = vadd.f32 %v2028, %v2046
        %2048 = vmatmul.bf16.gmra.mxu0 %v1516
        %v2049 = vpop.f32.mrf.mxu0
        %v2050 = vadd.f32 %v2031, %v2049
        %v2051 = vpop.f32.mrf.mxu0
        %v2052 = vadd.f32 %v2033, %v2051
        %2053 = vdwg.mxu0
        %2054 = vmatpush.bf16.msra.mxu0 0
        %2055 = vmatpush.bf16.msra.mxu0 0
        %2056 = vmatpush.bf16.msra.mxu0 0
        %2057 = vmatpush.bf16.msra.mxu0 0
        %2058 = vmatpush.bf16.msra.mxu0 0
        %2059 = vmatpush.bf16.msra.mxu0 %v1805
        %2060 = vmatpush.bf16.msra.mxu0 %v1803
        %2061 = vmatpush.bf16.msra.mxu0 %v1801
        %2062 = vmatmul.bf16.gmra.mxu0 %v1878
        %v2063 = vpop.f32.mrf.mxu0
        %v2064 = vadd.f32 %v2045, %v2063
        %v2065 = vpop.f32.mrf.mxu0
        %v2066 = vadd.f32 %v2047, %v2065
        %2067 = vmatmul.bf16.gmra.mxu0 %v1881
        %v2068 = vpop.f32.mrf.mxu0
        %v2069 = vadd.f32 %v2050, %v2068
        %v2070 = vpop.f32.mrf.mxu0
        %v2071 = vadd.f32 %v2052, %v2070
        %2072 = vdwg.mxu0
        %vm2073 = vcmp.gt.f32.partialorder %v1969, 0.0
        %vm2074 = vcmp.gt.f32.partialorder %v2064, 0.0
        %vm2075 = vcmp.gt.f32.partialorder %v1971, 0.0
        %vm2076 = vcmp.gt.f32.partialorder %v2066, 0.0
        %vm2077 = vcmp.gt.f32.partialorder %v1974, 0.0
        %vm2078 = vcmp.gt.f32.partialorder %v2069, 0.0
        %vm2079 = vcmp.gt.f32.partialorder %v1976, 0.0
        %vm2080 = vcmp.gt.f32.partialorder %v2071, 0.0
        %v2081 = vmul.f32 %v1969, 0.01
        %v2082 = vmul.f32 %v2064, 0.01
        %v2083 = vmul.f32 %v1971, 0.01
        %v2084 = vmul.f32 %v2066, 0.01
        %v2085 = vmul.f32 %v1974, 0.01
        %v2086 = vmul.f32 %v2069, 0.01
        %v2087 = vmul.f32 %v1976, 0.01
        %v2088 = vmul.f32 %v2071, 0.01
        %v2089 = vsel %vm2073, %v1969, %v2081
        %v2090 = vsel %vm2074, %v2064, %v2082
        %v2091 = vsel %vm2075, %v1971, %v2083
        %v2092 = vsel %vm2076, %v2066, %v2084
        %v2093 = vsel %vm2077, %v1974, %v2085
        %v2094 = vsel %vm2078, %v2069, %v2086
        %v2095 = vsel %vm2079, %v1976, %v2087
        %v2096 = vsel %vm2080, %v2071, %v2088
        %p2097 = scmp.eq.s32.totalorder %s22, 0
        %s2098 = sadd.s32 %s463, 130
        %p2099 = scmp.gt.s32.totalorder %s2098, 16
        %p2100 = por %p2097, %p2099
        // Predicated region
        $region127: #{generator_conf_forward.1} parent=117 // pred_check
          %p2101 = pneg %p2100
        $region128: #{generator_conf_forward.1} parent=117 // pred_check_branch
          %2103 = sbr.rel (%p2101) target = $region130
        $region129: #{generator_conf_forward.1} parent=117 // pred_region
          %v2104 = vlaneseq
          %v2105 = vand.u32 %v2104, 127
          %v2106 = vadd.s32 %v2105, 128
          %s2107 = sadd.s32 %s463, 4294967293
          %v2108 = vstv %s2107
          %v2109 = vadd.s32 %v2105, %v2108
          %v2110 = vadd.s32 %v2106, %v2108
          %vm2111 = vcmp.ge.s32.totalorder %v2109, 1
          %vm2112 = vcmp.ge.s32.totalorder %v2110, 1
          %vm2113 = vcmp.le.s32.totalorder %v2109, 16
          %vm2114 = vcmp.le.s32.totalorder %v2110, 16
          %vm2115 = vmand %vm2111, %vm2113
          %vm2116 = vmand %vm2112, %vm2114
          %v2117 = vsel %vm2115, %v2089, 0.0
          %v2118 = vsel %vm2116, %v2090, 0.0
          %v2119 = vsel %vm2115, %v2091, 0.0
          %v2120 = vsel %vm2116, %v2092, 0.0
          %v2121 = vsel %vm2115, %v2093, 0.0
          %v2122 = vsel %vm2116, %v2094, 0.0
          %v2123 = vsel %vm2115, %v2095, 0.0
          %v2124 = vsel %vm2116, %v2096, 0.0
          %vm2125 = vcmp.eq.s32.totalorder %v2109, 0
          %vm2126 = vcmp.eq.s32.totalorder %v2110, 0
          %2128 = vset.pattern.permute.xlu0 5
          %2129 = vperm.xlu0 %2128, %v2089
          %v2130 = vpop.permute.xlu0 %2129
          %2133 = vset.pattern.permute.xlu0 5
          %2134 = vperm.xlu0 %2133, %v2091
          %v2135 = vpop.permute.xlu0 %2134
          %2138 = vset.pattern.permute.xlu0 5
          %2139 = vperm.xlu0 %2138, %v2093
          %v2140 = vpop.permute.xlu0 %2139
          %2143 = vset.pattern.permute.xlu0 5
          %2144 = vperm.xlu0 %2143, %v2095
          %v2145 = vpop.permute.xlu0 %2144
          %v2147 = vsel %vm2125, %v2130, %v2117
          %v2148 = vsel %vm2126, %v2130, %v2118
          %v2149 = vsel %vm2125, %v2135, %v2119
          %v2150 = vsel %vm2126, %v2135, %v2120
          %v2151 = vsel %vm2125, %v2140, %v2121
          %v2152 = vsel %vm2126, %v2140, %v2122
          %v2153 = vsel %vm2125, %v2145, %v2123
          %v2154 = vsel %vm2126, %v2145, %v2124
          %2155 = vst [vmem:[#allocation3] sm:$0xff] %v2147
          %2156 = vst [vmem:[#allocation3 + $0x8] sm:$0xff] %v2149
          %2157 = vst [vmem:[#allocation3 + $0x10] sm:$0xff] %v2151
          %2158 = vst [vmem:[#allocation3 + $0x18] sm:$0xff] %v2153
          %2167 = vrot.lane.b32.xlu0 %v2147, 127
          %v2168 = vpop.permute.xlu0 %2167
          %2169 = vrot.lane.b32.xlu0 %v2148, 127
          %v2170 = vpop.permute.xlu0 %2169
          %2171 = vrot.lane.b32.xlu0 %v2149, 127
          %v2172 = vpop.permute.xlu0 %2171
          %2173 = vrot.lane.b32.xlu0 %v2150, 127
          %v2174 = vpop.permute.xlu0 %2173
          %2175 = vrot.lane.b32.xlu0 %v2151, 127
          %v2176 = vpop.permute.xlu0 %2175
          %2177 = vrot.lane.b32.xlu0 %v2152, 127
          %v2178 = vpop.permute.xlu0 %2177
          %2179 = vrot.lane.b32.xlu0 %v2153, 127
          %v2180 = vpop.permute.xlu0 %2179
          %2181 = vrot.lane.b32.xlu0 %v2154, 127
          %v2182 = vpop.permute.xlu0 %2181
          %vm2183 = vcmask 1039360
          %v2184 = vsel %vm2183, %v2168, %v2170
          %v2185 = vsel %vm2183, %v2172, %v2174
          %v2186 = vsel %vm2183, %v2176, %v2178
          %v2187 = vsel %vm2183, %v2180, %v2182
          %2192 = vst [vmem:[#allocation3 + $0x20] sm:$0xff] %v2184
          %2193 = vst [vmem:[#allocation3 + $0x28] sm:$0xff] %v2185
          %2194 = vst [vmem:[#allocation3 + $0x30] sm:$0xff] %v2186
          %2195 = vst [vmem:[#allocation3 + $0x38] sm:$0xff] %v2187
          %2196 = vrot.lane.b32.xlu0 %v2147, 126
          %v2197 = vpop.permute.xlu0 %2196
          %2198 = vrot.lane.b32.xlu0 %v2148, 126
          %v2199 = vpop.permute.xlu0 %2198
          %2200 = vrot.lane.b32.xlu0 %v2149, 126
          %v2201 = vpop.permute.xlu0 %2200
          %2202 = vrot.lane.b32.xlu0 %v2150, 126
          %v2203 = vpop.permute.xlu0 %2202
          %2204 = vrot.lane.b32.xlu0 %v2151, 126
          %v2205 = vpop.permute.xlu0 %2204
          %2206 = vrot.lane.b32.xlu0 %v2152, 126
          %v2207 = vpop.permute.xlu0 %2206
          %2208 = vrot.lane.b32.xlu0 %v2153, 126
          %v2209 = vpop.permute.xlu0 %2208
          %2210 = vrot.lane.b32.xlu0 %v2154, 126
          %v2211 = vpop.permute.xlu0 %2210
          %vm2212 = vcmask 1031168
          %v2213 = vsel %vm2212, %v2197, %v2199
          %v2214 = vsel %vm2212, %v2201, %v2203
          %v2215 = vsel %vm2212, %v2205, %v2207
          %v2216 = vsel %vm2212, %v2209, %v2211
          %2221 = vst [vmem:[#allocation3 + $0x40] sm:$0xff] %v2213
          %2222 = vst [vmem:[#allocation3 + $0x48] sm:$0xff] %v2214
          %2223 = vst [vmem:[#allocation3 + $0x50] sm:$0xff] %v2215
          %2224 = vst [vmem:[#allocation3 + $0x58] sm:$0xff] %v2216
          %2225 = vrot.lane.b32.xlu0 %v2147, 125
          %v2226 = vpop.permute.xlu0 %2225
          %2227 = vrot.lane.b32.xlu0 %v2148, 125
          %v2228 = vpop.permute.xlu0 %2227
          %2229 = vrot.lane.b32.xlu0 %v2149, 125
          %v2230 = vpop.permute.xlu0 %2229
          %2231 = vrot.lane.b32.xlu0 %v2150, 125
          %v2232 = vpop.permute.xlu0 %2231
          %2233 = vrot.lane.b32.xlu0 %v2151, 125
          %v2234 = vpop.permute.xlu0 %2233
          %2235 = vrot.lane.b32.xlu0 %v2152, 125
          %v2236 = vpop.permute.xlu0 %2235
          %2237 = vrot.lane.b32.xlu0 %v2153, 125
          %v2238 = vpop.permute.xlu0 %2237
          %2239 = vrot.lane.b32.xlu0 %v2154, 125
          %v2240 = vpop.permute.xlu0 %2239
          %vm2241 = vcmask 1022976
          %v2242 = vsel %vm2241, %v2226, %v2228
          %v2243 = vsel %vm2241, %v2230, %v2232
          %v2244 = vsel %vm2241, %v2234, %v2236
          %v2245 = vsel %vm2241, %v2238, %v2240
          %2250 = vst [vmem:[#allocation3 + $0x60] sm:$0xff] %v2242
          %2251 = vst [vmem:[#allocation3 + $0x68] sm:$0xff] %v2243
          %2252 = vst [vmem:[#allocation3 + $0x70] sm:$0xff] %v2244
          %2253 = vst [vmem:[#allocation3 + $0x78] sm:$0xff] %v2245
          %2254 = vrot.lane.b32.xlu0 %v2147, 124
          %v2255 = vpop.permute.xlu0 %2254
          %2256 = vrot.lane.b32.xlu0 %v2148, 124
          %v2257 = vpop.permute.xlu0 %2256
          %2258 = vrot.lane.b32.xlu0 %v2149, 124
          %v2259 = vpop.permute.xlu0 %2258
          %2260 = vrot.lane.b32.xlu0 %v2150, 124
          %v2261 = vpop.permute.xlu0 %2260
          %2262 = vrot.lane.b32.xlu0 %v2151, 124
          %v2263 = vpop.permute.xlu0 %2262
          %2264 = vrot.lane.b32.xlu0 %v2152, 124
          %v2265 = vpop.permute.xlu0 %2264
          %2266 = vrot.lane.b32.xlu0 %v2153, 124
          %v2267 = vpop.permute.xlu0 %2266
          %2268 = vrot.lane.b32.xlu0 %v2154, 124
          %v2269 = vpop.permute.xlu0 %2268
          %vm2270 = vcmask 1014784
          %v2271 = vsel %vm2270, %v2255, %v2257
          %v2272 = vsel %vm2270, %v2259, %v2261
          %v2273 = vsel %vm2270, %v2263, %v2265
          %v2274 = vsel %vm2270, %v2267, %v2269
          %2279 = vst [vmem:[#allocation3 + $0x80] sm:$0xff] %v2271
          %2280 = vst [vmem:[#allocation3 + $0x88] sm:$0xff] %v2272
          %2281 = vst [vmem:[#allocation3 + $0x90] sm:$0xff] %v2273
          %2282 = vst [vmem:[#allocation3 + $0x98] sm:$0xff] %v2274
          %2283 = vrot.lane.b32.xlu0 %v2147, 123
          %v2284 = vpop.permute.xlu0 %2283
          %2285 = vrot.lane.b32.xlu0 %v2148, 123
          %v2286 = vpop.permute.xlu0 %2285
          %2287 = vrot.lane.b32.xlu0 %v2149, 123
          %v2288 = vpop.permute.xlu0 %2287
          %2289 = vrot.lane.b32.xlu0 %v2150, 123
          %v2290 = vpop.permute.xlu0 %2289
          %2291 = vrot.lane.b32.xlu0 %v2151, 123
          %v2292 = vpop.permute.xlu0 %2291
          %2293 = vrot.lane.b32.xlu0 %v2152, 123
          %v2294 = vpop.permute.xlu0 %2293
          %2295 = vrot.lane.b32.xlu0 %v2153, 123
          %v2296 = vpop.permute.xlu0 %2295
          %2297 = vrot.lane.b32.xlu0 %v2154, 123
          %v2298 = vpop.permute.xlu0 %2297
          %vm2299 = vcmask 1006592
          %v2300 = vsel %vm2299, %v2284, %v2286
          %v2301 = vsel %vm2299, %v2288, %v2290
          %v2302 = vsel %vm2299, %v2292, %v2294
          %v2303 = vsel %vm2299, %v2296, %v2298
          %2308 = vst [vmem:[#allocation3 + $0xa0] sm:$0xff] %v2300
          %2309 = vst [vmem:[#allocation3 + $0xa8] sm:$0xff] %v2301
          %2310 = vst [vmem:[#allocation3 + $0xb0] sm:$0xff] %v2302
          %2311 = vst [vmem:[#allocation3 + $0xb8] sm:$0xff] %v2303
          %2312 = vrot.lane.b32.xlu0 %v2147, 122
          %v2313 = vpop.permute.xlu0 %2312
          %2314 = vrot.lane.b32.xlu0 %v2148, 122
          %v2315 = vpop.permute.xlu0 %2314
          %2316 = vrot.lane.b32.xlu0 %v2149, 122
          %v2317 = vpop.permute.xlu0 %2316
          %2318 = vrot.lane.b32.xlu0 %v2150, 122
          %v2319 = vpop.permute.xlu0 %2318
          %2320 = vrot.lane.b32.xlu0 %v2151, 122
          %v2321 = vpop.permute.xlu0 %2320
          %2322 = vrot.lane.b32.xlu0 %v2152, 122
          %v2323 = vpop.permute.xlu0 %2322
          %2324 = vrot.lane.b32.xlu0 %v2153, 122
          %v2325 = vpop.permute.xlu0 %2324
          %2326 = vrot.lane.b32.xlu0 %v2154, 122
          %v2327 = vpop.permute.xlu0 %2326
          %vm2328 = vcmask 998400
          %v2329 = vsel %vm2328, %v2313, %v2315
          %v2330 = vsel %vm2328, %v2317, %v2319
          %v2331 = vsel %vm2328, %v2321, %v2323
          %v2332 = vsel %vm2328, %v2325, %v2327
          %2337 = vst [vmem:[#allocation3 + $0xc0] sm:$0xff] %v2329
          %2338 = vst [vmem:[#allocation3 + $0xc8] sm:$0xff] %v2330
          %2339 = vst [vmem:[#allocation3 + $0xd0] sm:$0xff] %v2331
          %2340 = vst [vmem:[#allocation3 + $0xd8] sm:$0xff] %v2332
        $region130: #{generator_conf_forward.1} parent=117 // pred_fallthru
          _
        %p2341 = pneg %p2100
        // Predicated region
        $region131: #{generator_conf_forward.1} parent=117 // pred_check
          _
        $region132: #{generator_conf_forward.1} parent=117 // pred_check_branch
          %2343 = sbr.rel (%p2100) target = $region134
        $region133: #{generator_conf_forward.1} parent=117 // pred_region
          %2344 = vst [vmem:[#allocation3] sm:$0xff] %v2089
          %2345 = vst [vmem:[#allocation3 + $0x8] sm:$0xff] %v2091
          %2346 = vst [vmem:[#allocation3 + $0x10] sm:$0xff] %v2093
          %2347 = vst [vmem:[#allocation3 + $0x18] sm:$0xff] %v2095
          %2356 = vrot.lane.b32.xlu0 %v2089, 127
          %v2357 = vpop.permute.xlu0 %2356
          %2358 = vrot.lane.b32.xlu0 %v2090, 127
          %v2359 = vpop.permute.xlu0 %2358
          %2360 = vrot.lane.b32.xlu0 %v2091, 127
          %v2361 = vpop.permute.xlu0 %2360
          %2362 = vrot.lane.b32.xlu0 %v2092, 127
          %v2363 = vpop.permute.xlu0 %2362
          %2364 = vrot.lane.b32.xlu0 %v2093, 127
          %v2365 = vpop.permute.xlu0 %2364
          %2366 = vrot.lane.b32.xlu0 %v2094, 127
          %v2367 = vpop.permute.xlu0 %2366
          %2368 = vrot.lane.b32.xlu0 %v2095, 127
          %v2369 = vpop.permute.xlu0 %2368
          %2370 = vrot.lane.b32.xlu0 %v2096, 127
          %v2371 = vpop.permute.xlu0 %2370
          %vm2372 = vcmask 1039360
          %v2373 = vsel %vm2372, %v2357, %v2359
          %v2374 = vsel %vm2372, %v2361, %v2363
          %v2375 = vsel %vm2372, %v2365, %v2367
          %v2376 = vsel %vm2372, %v2369, %v2371
          %2381 = vst [vmem:[#allocation3 + $0x20] sm:$0xff] %v2373
          %2382 = vst [vmem:[#allocation3 + $0x28] sm:$0xff] %v2374
          %2383 = vst [vmem:[#allocation3 + $0x30] sm:$0xff] %v2375
          %2384 = vst [vmem:[#allocation3 + $0x38] sm:$0xff] %v2376
          %2385 = vrot.lane.b32.xlu0 %v2089, 126
          %v2386 = vpop.permute.xlu0 %2385
          %2387 = vrot.lane.b32.xlu0 %v2090, 126
          %v2388 = vpop.permute.xlu0 %2387
          %2389 = vrot.lane.b32.xlu0 %v2091, 126
          %v2390 = vpop.permute.xlu0 %2389
          %2391 = vrot.lane.b32.xlu0 %v2092, 126
          %v2392 = vpop.permute.xlu0 %2391
          %2393 = vrot.lane.b32.xlu0 %v2093, 126
          %v2394 = vpop.permute.xlu0 %2393
          %2395 = vrot.lane.b32.xlu0 %v2094, 126
          %v2396 = vpop.permute.xlu0 %2395
          %2397 = vrot.lane.b32.xlu0 %v2095, 126
          %v2398 = vpop.permute.xlu0 %2397
          %2399 = vrot.lane.b32.xlu0 %v2096, 126
          %v2400 = vpop.permute.xlu0 %2399
          %vm2401 = vcmask 1031168
          %v2402 = vsel %vm2401, %v2386, %v2388
          %v2403 = vsel %vm2401, %v2390, %v2392
          %v2404 = vsel %vm2401, %v2394, %v2396
          %v2405 = vsel %vm2401, %v2398, %v2400
          %2410 = vst [vmem:[#allocation3 + $0x40] sm:$0xff] %v2402
          %2411 = vst [vmem:[#allocation3 + $0x48] sm:$0xff] %v2403
          %2412 = vst [vmem:[#allocation3 + $0x50] sm:$0xff] %v2404
          %2413 = vst [vmem:[#allocation3 + $0x58] sm:$0xff] %v2405
          %2414 = vrot.lane.b32.xlu0 %v2089, 125
          %v2415 = vpop.permute.xlu0 %2414
          %2416 = vrot.lane.b32.xlu0 %v2090, 125
          %v2417 = vpop.permute.xlu0 %2416
          %2418 = vrot.lane.b32.xlu0 %v2091, 125
          %v2419 = vpop.permute.xlu0 %2418
          %2420 = vrot.lane.b32.xlu0 %v2092, 125
          %v2421 = vpop.permute.xlu0 %2420
          %2422 = vrot.lane.b32.xlu0 %v2093, 125
          %v2423 = vpop.permute.xlu0 %2422
          %2424 = vrot.lane.b32.xlu0 %v2094, 125
          %v2425 = vpop.permute.xlu0 %2424
          %2426 = vrot.lane.b32.xlu0 %v2095, 125
          %v2427 = vpop.permute.xlu0 %2426
          %2428 = vrot.lane.b32.xlu0 %v2096, 125
          %v2429 = vpop.permute.xlu0 %2428
          %vm2430 = vcmask 1022976
          %v2431 = vsel %vm2430, %v2415, %v2417
          %v2432 = vsel %vm2430, %v2419, %v2421
          %v2433 = vsel %vm2430, %v2423, %v2425
          %v2434 = vsel %vm2430, %v2427, %v2429
          %2439 = vst [vmem:[#allocation3 + $0x60] sm:$0xff] %v2431
          %2440 = vst [vmem:[#allocation3 + $0x68] sm:$0xff] %v2432
          %2441 = vst [vmem:[#allocation3 + $0x70] sm:$0xff] %v2433
          %2442 = vst [vmem:[#allocation3 + $0x78] sm:$0xff] %v2434
          %2443 = vrot.lane.b32.xlu0 %v2089, 124
          %v2444 = vpop.permute.xlu0 %2443
          %2445 = vrot.lane.b32.xlu0 %v2090, 124
          %v2446 = vpop.permute.xlu0 %2445
          %2447 = vrot.lane.b32.xlu0 %v2091, 124
          %v2448 = vpop.permute.xlu0 %2447
          %2449 = vrot.lane.b32.xlu0 %v2092, 124
          %v2450 = vpop.permute.xlu0 %2449
          %2451 = vrot.lane.b32.xlu0 %v2093, 124
          %v2452 = vpop.permute.xlu0 %2451
          %2453 = vrot.lane.b32.xlu0 %v2094, 124
          %v2454 = vpop.permute.xlu0 %2453
          %2455 = vrot.lane.b32.xlu0 %v2095, 124
          %v2456 = vpop.permute.xlu0 %2455
          %2457 = vrot.lane.b32.xlu0 %v2096, 124
          %v2458 = vpop.permute.xlu0 %2457
          %vm2459 = vcmask 1014784
          %v2460 = vsel %vm2459, %v2444, %v2446
          %v2461 = vsel %vm2459, %v2448, %v2450
          %v2462 = vsel %vm2459, %v2452, %v2454
          %v2463 = vsel %vm2459, %v2456, %v2458
          %2468 = vst [vmem:[#allocation3 + $0x80] sm:$0xff] %v2460
          %2469 = vst [vmem:[#allocation3 + $0x88] sm:$0xff] %v2461
          %2470 = vst [vmem:[#allocation3 + $0x90] sm:$0xff] %v2462
          %2471 = vst [vmem:[#allocation3 + $0x98] sm:$0xff] %v2463
          %2472 = vrot.lane.b32.xlu0 %v2089, 123
          %v2473 = vpop.permute.xlu0 %2472
          %2474 = vrot.lane.b32.xlu0 %v2090, 123
          %v2475 = vpop.permute.xlu0 %2474
          %2476 = vrot.lane.b32.xlu0 %v2091, 123
          %v2477 = vpop.permute.xlu0 %2476
          %2478 = vrot.lane.b32.xlu0 %v2092, 123
          %v2479 = vpop.permute.xlu0 %2478
          %2480 = vrot.lane.b32.xlu0 %v2093, 123
          %v2481 = vpop.permute.xlu0 %2480
          %2482 = vrot.lane.b32.xlu0 %v2094, 123
          %v2483 = vpop.permute.xlu0 %2482
          %2484 = vrot.lane.b32.xlu0 %v2095, 123
          %v2485 = vpop.permute.xlu0 %2484
          %2486 = vrot.lane.b32.xlu0 %v2096, 123
          %v2487 = vpop.permute.xlu0 %2486
          %vm2488 = vcmask 1006592
          %v2489 = vsel %vm2488, %v2473, %v2475
          %v2490 = vsel %vm2488, %v2477, %v2479
          %v2491 = vsel %vm2488, %v2481, %v2483
          %v2492 = vsel %vm2488, %v2485, %v2487
          %2497 = vst [vmem:[#allocation3 + $0xa0] sm:$0xff] %v2489
          %2498 = vst [vmem:[#allocation3 + $0xa8] sm:$0xff] %v2490
          %2499 = vst [vmem:[#allocation3 + $0xb0] sm:$0xff] %v2491
          %2500 = vst [vmem:[#allocation3 + $0xb8] sm:$0xff] %v2492
          %2501 = vrot.lane.b32.xlu0 %v2089, 122
          %v2502 = vpop.permute.xlu0 %2501
          %2503 = vrot.lane.b32.xlu0 %v2090, 122
          %v2504 = vpop.permute.xlu0 %2503
          %2505 = vrot.lane.b32.xlu0 %v2091, 122
          %v2506 = vpop.permute.xlu0 %2505
          %2507 = vrot.lane.b32.xlu0 %v2092, 122
          %v2508 = vpop.permute.xlu0 %2507
          %2509 = vrot.lane.b32.xlu0 %v2093, 122
          %v2510 = vpop.permute.xlu0 %2509
          %2511 = vrot.lane.b32.xlu0 %v2094, 122
          %v2512 = vpop.permute.xlu0 %2511
          %2513 = vrot.lane.b32.xlu0 %v2095, 122
          %v2514 = vpop.permute.xlu0 %2513
          %2515 = vrot.lane.b32.xlu0 %v2096, 122
          %v2516 = vpop.permute.xlu0 %2515
          %vm2517 = vcmask 998400
          %v2518 = vsel %vm2517, %v2502, %v2504
          %v2519 = vsel %vm2517, %v2506, %v2508
          %v2520 = vsel %vm2517, %v2510, %v2512
          %v2521 = vsel %vm2517, %v2514, %v2516
          %2526 = vst [vmem:[#allocation3 + $0xc0] sm:$0xff] %v2518
          %2527 = vst [vmem:[#allocation3 + $0xc8] sm:$0xff] %v2519
          %2528 = vst [vmem:[#allocation3 + $0xd0] sm:$0xff] %v2520
          %2529 = vst [vmem:[#allocation3 + $0xd8] sm:$0xff] %v2521
        $region134: #{generator_conf_forward.1} parent=117 // pred_fallthru
          _
        %v2530 = vld [vmem:[%s4] sm:$0xff]
        %v2531 = vld [vmem:[%s4 + $0x8] sm:$0xff]
        %v2532 = vld [vmem:[%s4 + $0x10] sm:$0xff]
        %v2533 = vld [vmem:[%s4 + $0x18] sm:$0xff]
        %v2534 = vld [vmem:[%s4 + $0x20] sm:$0xff]
        %v2535 = vld [vmem:[%s4 + $0x28] sm:$0xff]
        %v2536 = vld [vmem:[%s4 + $0x30] sm:$0xff]
        %v2537 = vld [vmem:[%s4 + $0x38] sm:$0xff]
        %v2538 = vld [vmem:[#allocation3] sm:$0xff]
        %v2539 = vld [vmem:[#allocation3 + $0x8] sm:$0xff]
        %v2540 = vld [vmem:[#allocation3 + $0x10] sm:$0xff]
        %v2541 = vld [vmem:[#allocation3 + $0x18] sm:$0xff]
        %v2542 = vld [vmem:[#allocation3 + $0x20] sm:$0xff]
        %v2543 = vld [vmem:[#allocation3 + $0x28] sm:$0xff]
        %v2544 = vld [vmem:[#allocation3 + $0x30] sm:$0xff]
        %v2545 = vld [vmem:[#allocation3 + $0x38] sm:$0xff]
        %v2546 = vld [vmem:[#allocation3 + $0x40] sm:$0xff]
        %v2547 = vld [vmem:[#allocation3 + $0x48] sm:$0xff]
        %v2548 = vld [vmem:[#allocation3 + $0x50] sm:$0xff]
        %v2549 = vld [vmem:[#allocation3 + $0x58] sm:$0xff]
        %v2550 = vld [vmem:[#allocation3 + $0x60] sm:$0xff]
        %v2551 = vld [vmem:[#allocation3 + $0x68] sm:$0xff]
        %v2552 = vld [vmem:[#allocation3 + $0x70] sm:$0xff]
        %v2553 = vld [vmem:[#allocation3 + $0x78] sm:$0xff]
        %v2554 = vld [vmem:[#allocation3 + $0x80] sm:$0xff]
        %v2555 = vld [vmem:[#allocation3 + $0x88] sm:$0xff]
        %v2556 = vld [vmem:[#allocation3 + $0x90] sm:$0xff]
        %v2557 = vld [vmem:[#allocation3 + $0x98] sm:$0xff]
        %v2558 = vld [vmem:[#allocation3 + $0xa0] sm:$0xff]
        %v2559 = vld [vmem:[#allocation3 + $0xa8] sm:$0xff]
        %v2560 = vld [vmem:[#allocation3 + $0xb0] sm:$0xff]
        %v2561 = vld [vmem:[#allocation3 + $0xb8] sm:$0xff]
        %v2562 = vld [vmem:[#allocation3 + $0xc0] sm:$0xff]
        %v2563 = vld [vmem:[#allocation3 + $0xc8] sm:$0xff]
        %v2564 = vld [vmem:[#allocation3 + $0xd0] sm:$0xff]
        %v2565 = vld [vmem:[#allocation3 + $0xd8] sm:$0xff]
        %v2566 = vld [vmem:[%s5] sm:$0xff]
        %v2567 = vld [vmem:[%s5 + $0x8] sm:$0xff]
        %v2568 = vld [vmem:[%s5 + $0x10] sm:$0xff]
        %v2569 = vld [vmem:[%s5 + $0x18] sm:$0xff]
        %2571 = vset.pattern.permute.xlu0 0
        %2572 = vperm.xlu0 %2571, %v2566
        %v2573 = vpop.permute.xlu0 %2572
        %2576 = vset.pattern.permute.xlu0 0
        %2577 = vperm.xlu0 %2576, %v2567
        %v2578 = vpop.permute.xlu0 %2577
        %2581 = vset.pattern.permute.xlu0 0
        %2582 = vperm.xlu0 %2581, %v2568
        %v2583 = vpop.permute.xlu0 %2582
        %2586 = vset.pattern.permute.xlu0 0
        %2587 = vperm.xlu0 %2586, %v2569
        %v2588 = vpop.permute.xlu0 %2587
        %vm2590 = vcmask 785408
        %v2592 = vsel %vm2590, %v2531, 0
        %v2595 = vsel %vm2590, %v2533, 0
        %v2598 = vsel %vm2590, %v2535, 0
        %v2601 = vsel %vm2590, %v2537, 0
        %2603 = vmatpush.msra.mxu0 %v2553
        %2604 = vmatpush.msra.mxu0 %v2552
        %2605 = vmatpush.msra.mxu0 %v2551
        %2606 = vmatpush.msra.mxu0 %v2550
        %2607 = vmatpush.msra.mxu0 %v2549
        %2608 = vmatpush.msra.mxu0 %v2548
        %2609 = vmatpush.msra.mxu0 %v2547
        %2610 = vmatpush.msra.mxu0 %v2546
        %2611 = vmatpush.msra.mxu0 %v2545
        %2612 = vmatpush.msra.mxu0 %v2544
        %2613 = vmatpush.msra.mxu0 %v2543
        %2614 = vmatpush.msra.mxu0 %v2542
        %2615 = vmatpush.msra.mxu0 %v2541
        %2616 = vmatpush.msra.mxu0 %v2540
        %2617 = vmatpush.msra.mxu0 %v2539
        %2618 = vmatpush.msra.mxu0 %v2538
        %2619 = vmatmul.f32.gmra.mxu0 %v2530
        %v2620 = vpop.f32.mrf.mxu0
        %v2621 = vadd.f32 %v2573, %v2620
        %2622 = vmatmul.f32.gmra.mxu0 %v2532
        %v2623 = vpop.f32.mrf.mxu0
        %v2624 = vadd.f32 %v2578, %v2623
        %2625 = vmatmul.f32.gmra.mxu0 %v2534
        %v2626 = vpop.f32.mrf.mxu0
        %v2627 = vadd.f32 %v2583, %v2626
        %2628 = vmatmul.f32.gmra.mxu0 %v2536
        %v2629 = vpop.f32.mrf.mxu0
        %v2630 = vadd.f32 %v2588, %v2629
        %2631 = vdwg.mxu0
        %2632 = vmatpush.msra.mxu0 0.0
        %2633 = vmatpush.msra.mxu0 0.0
        %2634 = vmatpush.msra.mxu0 0.0
        %2635 = vmatpush.msra.mxu0 0.0
        %2636 = vmatpush.msra.mxu0 %v2565
        %2637 = vmatpush.msra.mxu0 %v2564
        %2638 = vmatpush.msra.mxu0 %v2563
        %2639 = vmatpush.msra.mxu0 %v2562
        %2640 = vmatpush.msra.mxu0 %v2561
        %2641 = vmatpush.msra.mxu0 %v2560
        %2642 = vmatpush.msra.mxu0 %v2559
        %2643 = vmatpush.msra.mxu0 %v2558
        %2644 = vmatpush.msra.mxu0 %v2557
        %2645 = vmatpush.msra.mxu0 %v2556
        %2646 = vmatpush.msra.mxu0 %v2555
        %2647 = vmatpush.msra.mxu0 %v2554
        %2648 = vmatmul.f32.gmra.mxu0 %v2592
        %v2649 = vpop.f32.mrf.mxu0
        %v2650 = vadd.f32 %v2621, %v2649
        %2651 = vmatmul.f32.gmra.mxu0 %v2595
        %v2652 = vpop.f32.mrf.mxu0
        %v2653 = vadd.f32 %v2624, %v2652
        %2654 = vmatmul.f32.gmra.mxu0 %v2598
        %v2655 = vpop.f32.mrf.mxu0
        %v2656 = vadd.f32 %v2627, %v2655
        %2657 = vmatmul.f32.gmra.mxu0 %v2601
        %v2658 = vpop.f32.mrf.mxu0
        %v2659 = vadd.f32 %v2630, %v2658
        %2660 = vdwg.mxu0
        %v2661 = vmul.f32 %v2650, 1.442695
        %v2662 = vpow.pop %v2661
        %v2663 = vmul.f32 %v2653, 1.442695
        %v2664 = vpow.pop %v2663
        %2665 = vst [vmem:[%s461] sm:$0xff] %v2662
        %2666 = vst [vmem:[%s461 + $0x8] sm:$0xff] %v2664
        %v2667 = vand.u32 2147483647, %v2656
        %vm2668 = vcmp.le.f32.partialorder %v2667, 0.7853982
        %vm2669 = vcmp.lt.s32.totalorder %v2656, 0
        %v2670 = vand.u32 %v2656, 2139095040
        %v2671 = vshrl.u32 %v2670, 23
        %v2672 = vsub.s32 %v2671, 127
        %v2673 = vand.u32 2147483647, %v2656
        %v2674 = vand.u32 %v2673, 8388607
        %v2675 = vor.u32 %v2674, 8388608
        %v2676 = vsub.s32 0, %v2675
        %v2677 = vadd.s32 %v2672, 1
        %vm2678 = vcmp.gt.s32.totalorder %v2677, 0
        %v2679 = vsel %vm2678, %v2677, 0
        %v2680 = vshrl.u32 %v2679, 5
        %v2681 = vand.u32 %v2679, 31
        %v2682 = vsub.s32 32, %v2681
        %v2683 = vshrl.u32 683565275, %v2682
        %v2684 = vshll.u32 683565275, %v2681
        %v2685 = vshrl.u32 2475754826, %v2682
        %v2686 = vor.u32 %v2684, %v2685
        %v2687 = vshll.u32 2475754826, %v2681
        %v2688 = vshrl.u32 2131351028, %v2682
        %v2689 = vor.u32 %v2687, %v2688
        %v2690 = vshll.u32 2131351028, %v2681
        %v2691 = vshrl.u32 2102212464, %v2682
        %v2692 = vor.u32 %v2690, %v2691
        %v2693 = vshll.u32 2102212464, %v2681
        %v2694 = vshrl.u32 920167782, %v2682
        %v2695 = vor.u32 %v2693, %v2694
        %v2696 = vshll.u32 920167782, %v2681
        %v2697 = vshrl.u32 1326507024, %v2682
        %v2698 = vor.u32 %v2696, %v2697
        %vm2699 = vcmp.lt.s32.totalorder %v2680, 1
        %vm2700 = vcmp.lt.s32.totalorder %v2680, 2
        %vm2701 = vcmp.lt.s32.totalorder %v2680, 3
        %vm2702 = vcmp.lt.s32.totalorder %v2680, 4
        %v2703 = vsel %vm2699, %v2683, %v2686
        %v2704 = vsel %vm2702, %v2692, 2102212464
        %v2705 = vsel %vm2701, %v2689, %v2704
        %v2706 = vsel %vm2700, %v2703, %v2705
        %v2707 = vsel %vm2699, %v2686, %v2689
        %v2708 = vsel %vm2702, %v2695, 920167782
        %v2709 = vsel %vm2701, %v2692, %v2708
        %v2710 = vsel %vm2700, %v2707, %v2709
        %v2711 = vsel %vm2699, %v2689, %v2692
        %v2712 = vsel %vm2702, %v2698, 1326507024
        %v2713 = vsel %vm2701, %v2695, %v2712
        %v2714 = vsel %vm2700, %v2711, %v2713
        %v2715 = vshll.u32 %v2675, 8
        %v2716 = vand.u32 %v2715, 65535
        %v2717 = vshrl.u32 %v2715, 16
        %v2718 = vand.u32 %v2714, 65535
        %v2719 = vshrl.u32 %v2714, 16
        %v2720 = vmul.u32 %v2716, %v2718
        %v2721 = vmul.u32 %v2716, %v2719
        %v2722 = vmul.u32 %v2717, %v2718
        %v2723 = vmul.u32 %v2717, %v2719
        %v2724 = vshll.u32 %v2721, 16
        %v2725 = vshrl.u32 %v2721, 16
        %v2726 = vshll.u32 %v2722, 16
        %v2727 = vshrl.u32 %v2722, 16
        %vm2728 = vc.u32 %v2720, %v2724
        %v2729 = vsel %vm2728, 1, 0
        %v2730 = vadd.s32 %v2720, %v2724
        %v2731 = vadd.s32 %v2723, %v2729
        %vm2732 = vc.u32 %v2730, %v2726
        %v2733 = vsel %vm2732, 1, 0
        %v2734 = vadd.s32 %v2730, %v2726
        %v2735 = vadd.s32 %v2731, %v2733
        %v2736 = vadd.s32 %v2735, %v2725
        %v2737 = vadd.s32 %v2736, %v2727
        %v2738 = vand.u32 %v2715, 65535
        %v2739 = vshrl.u32 %v2715, 16
        %v2740 = vand.u32 %v2710, 65535
        %v2741 = vshrl.u32 %v2710, 16
        %v2742 = vmul.u32 %v2738, %v2740
        %v2743 = vmul.u32 %v2738, %v2741
        %v2744 = vmul.u32 %v2739, %v2740
        %v2745 = vmul.u32 %v2739, %v2741
        %v2746 = vshll.u32 %v2743, 16
        %v2747 = vshrl.u32 %v2743, 16
        %v2748 = vshll.u32 %v2744, 16
        %v2749 = vshrl.u32 %v2744, 16
        %vm2750 = vc.u32 %v2742, %v2746
        %v2751 = vsel %vm2750, 1, 0
        %v2752 = vadd.s32 %v2742, %v2746
        %v2753 = vadd.s32 %v2745, %v2751
        %vm2754 = vc.u32 %v2752, %v2748
        %v2755 = vsel %vm2754, 1, 0
        %v2756 = vadd.s32 %v2752, %v2748
        %v2757 = vadd.s32 %v2753, %v2755
        %v2758 = vadd.s32 %v2757, %v2747
        %v2759 = vadd.s32 %v2758, %v2749
        %v2760 = vmul.u32 %v2715, %v2706
        %v2761 = vadd.s32 %v2737, %v2756
        %vm2762 = vc.u32 %v2737, %v2756
        %v2763 = vadd.s32 %v2759, 1
        %v2764 = vsel %vm2762, %v2763, %v2759
        %v2765 = vadd.s32 %v2760, %v2764
        %v2766 = vadd.s32 %v2765, 536870912
        %v2767 = vshrl.u32 %v2766, 30
        %v2768 = vshll.u32 %v2767, 30
        %v2769 = vsub.s32 %v2765, %v2768
        %vm2770 = vcmp.lt.s32.totalorder %v2769, 0
        %v2771 = vsub.s32 0, %v2769
        %v2772 = vsel %vm2770, %v2771, %v2769
        %v2773 = vclz %v2772
        %v2774 = vsub.s32 %v2773, 2
        %vm2775 = vcmp.gt.s32.totalorder 0, %v2774
        %v2776 = vsel %vm2775, 0, %v2774
        %v2777 = vsub.s32 32, %v2776
        %v2778 = vshll.u32 %v2769, %v2776
        %v2779 = vshrl.u32 %v2761, %v2777
        %v2780 = vor.u32 %v2778, %v2779
        %v2781 = vsub.s32 4294967266, %v2776
        %v2782 = vadd.s32 %v2781, 127
        %v2783 = vshll.u32 %v2782, 23
        %v2784 = vor.u32 4788187, %v2783
        %v2785 = vand.u32 2147483647, %v2784
        %v2787 = vcvt.s32.f32 %v2780
        %v2788 = vmul.f32 %v2787, %v2785
        %v2789 = vxor.u32 %v2788, 2147483648
        %v2790 = vsel %vm2669, %v2789, %v2788
        %v2791 = vsub.s32 4, %v2767
        %v2792 = vsel %vm2669, %v2791, %v2767
        %v2793 = vsel %vm2668, %v2656, %v2790
        %v2794 = vsel %vm2668, 0, %v2792
        %v2795 = vmul.f32 %v2793, %v2793
        %v2796 = vmul.f32 %v2795, -0.001358992
        %v2797 = vadd.f32 %v2796, 0.041655596
        %v2798 = vmul.f32 %v2795, %v2797
        %v2799 = vadd.f32 %v2798, -0.4999988
        %v2800 = vmul.f32 %v2795, %v2799
        %v2801 = vadd.f32 1.0, %v2800
        %v2802 = vmul.f32 %v2793, %v2793
        %v2803 = vmul.f32 %v2802, -0.00019511016
        %v2804 = vadd.f32 %v2803, 0.008332121
        %v2805 = vmul.f32 %v2802, %v2804
        %v2806 = vadd.f32 %v2805, -0.16666654
        %v2807 = vmul.f32 %v2802, %v2806
        %v2808 = vadd.f32 %v2807, 1.0
        %v2809 = vmul.f32 %v2808, %v2793
        %vm2810 = vweird.f32 %v2656
        %v2811 = vadd.s32 %v2794, 3
        %v2812 = vand.u32 %v2811, 3
        %vm2813 = vcmp.lt.s32.totalorder %v2812, 2
        %vm2814 = vcmp.eq.s32.totalorder %v2812, 0
        %v2815 = vxor.u32 %v2809, 2147483648
        %v2816 = vsel %vm2814, %v2801, %v2815
        %vm2817 = vcmp.eq.s32.totalorder %v2812, 2
        %v2818 = vxor.u32 %v2801, 2147483648
        %v2819 = vsel %vm2817, %v2818, %v2809
        %v2820 = vsel %vm2813, %v2816, %v2819
        %v2821 = vsel %vm2810, nan, %v2820
        %v2822 = vand.u32 2147483647, %v2659
        %vm2823 = vcmp.le.f32.partialorder %v2822, 0.7853982
        %vm2824 = vcmp.lt.s32.totalorder %v2659, 0
        %v2825 = vand.u32 %v2659, 2139095040
        %v2826 = vshrl.u32 %v2825, 23
        %v2827 = vsub.s32 %v2826, 127
        %v2828 = vand.u32 2147483647, %v2659
        %v2829 = vand.u32 %v2828, 8388607
        %v2830 = vor.u32 %v2829, 8388608
        %v2831 = vsub.s32 0, %v2830
        %v2832 = vadd.s32 %v2827, 1
        %vm2833 = vcmp.gt.s32.totalorder %v2832, 0
        %v2834 = vsel %vm2833, %v2832, 0
        %v2835 = vshrl.u32 %v2834, 5
        %v2836 = vand.u32 %v2834, 31
        %v2837 = vsub.s32 32, %v2836
        %v2838 = vshrl.u32 683565275, %v2837
        %v2839 = vshll.u32 683565275, %v2836
        %v2840 = vshrl.u32 2475754826, %v2837
        %v2841 = vor.u32 %v2839, %v2840
        %v2842 = vshll.u32 2475754826, %v2836
        %v2843 = vshrl.u32 2131351028, %v2837
        %v2844 = vor.u32 %v2842, %v2843
        %v2845 = vshll.u32 2131351028, %v2836
        %v2846 = vshrl.u32 2102212464, %v2837
        %v2847 = vor.u32 %v2845, %v2846
        %v2848 = vshll.u32 2102212464, %v2836
        %v2849 = vshrl.u32 920167782, %v2837
        %v2850 = vor.u32 %v2848, %v2849
        %v2851 = vshll.u32 920167782, %v2836
        %v2852 = vshrl.u32 1326507024, %v2837
        %v2853 = vor.u32 %v2851, %v2852
        %vm2854 = vcmp.lt.s32.totalorder %v2835, 1
        %vm2855 = vcmp.lt.s32.totalorder %v2835, 2
        %vm2856 = vcmp.lt.s32.totalorder %v2835, 3
        %vm2857 = vcmp.lt.s32.totalorder %v2835, 4
        %v2858 = vsel %vm2854, %v2838, %v2841
        %v2859 = vsel %vm2857, %v2847, 2102212464
        %v2860 = vsel %vm2856, %v2844, %v2859
        %v2861 = vsel %vm2855, %v2858, %v2860
        %v2862 = vsel %vm2854, %v2841, %v2844
        %v2863 = vsel %vm2857, %v2850, 920167782
        %v2864 = vsel %vm2856, %v2847, %v2863
        %v2865 = vsel %vm2855, %v2862, %v2864
        %v2866 = vsel %vm2854, %v2844, %v2847
        %v2867 = vsel %vm2857, %v2853, 1326507024
        %v2868 = vsel %vm2856, %v2850, %v2867
        %v2869 = vsel %vm2855, %v2866, %v2868
        %v2870 = vshll.u32 %v2830, 8
        %v2871 = vand.u32 %v2870, 65535
        %v2872 = vshrl.u32 %v2870, 16
        %v2873 = vand.u32 %v2869, 65535
        %v2874 = vshrl.u32 %v2869, 16
        %v2875 = vmul.u32 %v2871, %v2873
        %v2876 = vmul.u32 %v2871, %v2874
        %v2877 = vmul.u32 %v2872, %v2873
        %v2878 = vmul.u32 %v2872, %v2874
        %v2879 = vshll.u32 %v2876, 16
        %v2880 = vshrl.u32 %v2876, 16
        %v2881 = vshll.u32 %v2877, 16
        %v2882 = vshrl.u32 %v2877, 16
        %vm2883 = vc.u32 %v2875, %v2879
        %v2884 = vsel %vm2883, 1, 0
        %v2885 = vadd.s32 %v2875, %v2879
        %v2886 = vadd.s32 %v2878, %v2884
        %vm2887 = vc.u32 %v2885, %v2881
        %v2888 = vsel %vm2887, 1, 0
        %v2889 = vadd.s32 %v2885, %v2881
        %v2890 = vadd.s32 %v2886, %v2888
        %v2891 = vadd.s32 %v2890, %v2880
        %v2892 = vadd.s32 %v2891, %v2882
        %v2893 = vand.u32 %v2870, 65535
        %v2894 = vshrl.u32 %v2870, 16
        %v2895 = vand.u32 %v2865, 65535
        %v2896 = vshrl.u32 %v2865, 16
        %v2897 = vmul.u32 %v2893, %v2895
        %v2898 = vmul.u32 %v2893, %v2896
        %v2899 = vmul.u32 %v2894, %v2895
        %v2900 = vmul.u32 %v2894, %v2896
        %v2901 = vshll.u32 %v2898, 16
        %v2902 = vshrl.u32 %v2898, 16
        %v2903 = vshll.u32 %v2899, 16
        %v2904 = vshrl.u32 %v2899, 16
        %vm2905 = vc.u32 %v2897, %v2901
        %v2906 = vsel %vm2905, 1, 0
        %v2907 = vadd.s32 %v2897, %v2901
        %v2908 = vadd.s32 %v2900, %v2906
        %vm2909 = vc.u32 %v2907, %v2903
        %v2910 = vsel %vm2909, 1, 0
        %v2911 = vadd.s32 %v2907, %v2903
        %v2912 = vadd.s32 %v2908, %v2910
        %v2913 = vadd.s32 %v2912, %v2902
        %v2914 = vadd.s32 %v2913, %v2904
        %v2915 = vmul.u32 %v2870, %v2861
        %v2916 = vadd.s32 %v2892, %v2911
        %vm2917 = vc.u32 %v2892, %v2911
        %v2918 = vadd.s32 %v2914, 1
        %v2919 = vsel %vm2917, %v2918, %v2914
        %v2920 = vadd.s32 %v2915, %v2919
        %v2921 = vadd.s32 %v2920, 536870912
        %v2922 = vshrl.u32 %v2921, 30
        %v2923 = vshll.u32 %v2922, 30
        %v2924 = vsub.s32 %v2920, %v2923
        %vm2925 = vcmp.lt.s32.totalorder %v2924, 0
        %v2926 = vsub.s32 0, %v2924
        %v2927 = vsel %vm2925, %v2926, %v2924
        %v2928 = vclz %v2927
        %v2929 = vsub.s32 %v2928, 2
        %vm2930 = vcmp.gt.s32.totalorder 0, %v2929
        %v2931 = vsel %vm2930, 0, %v2929
        %v2932 = vsub.s32 32, %v2931
        %v2933 = vshll.u32 %v2924, %v2931
        %v2934 = vshrl.u32 %v2916, %v2932
        %v2935 = vor.u32 %v2933, %v2934
        %v2936 = vsub.s32 4294967266, %v2931
        %v2937 = vadd.s32 %v2936, 127
        %v2938 = vshll.u32 %v2937, 23
        %v2939 = vor.u32 4788187, %v2938
        %v2940 = vand.u32 2147483647, %v2939
        %v2942 = vcvt.s32.f32 %v2935
        %v2943 = vmul.f32 %v2942, %v2940
        %v2944 = vxor.u32 %v2943, 2147483648
        %v2945 = vsel %vm2824, %v2944, %v2943
        %v2946 = vsub.s32 4, %v2922
        %v2947 = vsel %vm2824, %v2946, %v2922
        %v2948 = vsel %vm2823, %v2659, %v2945
        %v2949 = vsel %vm2823, 0, %v2947
        %v2950 = vmul.f32 %v2948, %v2948
        %v2951 = vmul.f32 %v2950, -0.001358992
        %v2952 = vadd.f32 %v2951, 0.041655596
        %v2953 = vmul.f32 %v2950, %v2952
        %v2954 = vadd.f32 %v2953, -0.4999988
        %v2955 = vmul.f32 %v2950, %v2954
        %v2956 = vadd.f32 1.0, %v2955
        %v2957 = vmul.f32 %v2948, %v2948
        %v2958 = vmul.f32 %v2957, -0.00019511016
        %v2959 = vadd.f32 %v2958, 0.008332121
        %v2960 = vmul.f32 %v2957, %v2959
        %v2961 = vadd.f32 %v2960, -0.16666654
        %v2962 = vmul.f32 %v2957, %v2961
        %v2963 = vadd.f32 %v2962, 1.0
        %v2964 = vmul.f32 %v2963, %v2948
        %vm2965 = vweird.f32 %v2659
        %v2966 = vadd.s32 %v2949, 3
        %v2967 = vand.u32 %v2966, 3
        %vm2968 = vcmp.lt.s32.totalorder %v2967, 2
        %vm2969 = vcmp.eq.s32.totalorder %v2967, 0
        %v2970 = vxor.u32 %v2964, 2147483648
        %v2971 = vsel %vm2969, %v2956, %v2970
        %vm2972 = vcmp.eq.s32.totalorder %v2967, 2
        %v2973 = vxor.u32 %v2956, 2147483648
        %v2974 = vsel %vm2972, %v2973, %v2964
        %v2975 = vsel %vm2968, %v2971, %v2974
        %v2976 = vsel %vm2965, nan, %v2975
        %2977 = vst [vmem:[%s461 + $0x10] sm:$0xff] %v2821
        %2978 = vst [vmem:[%s461 + $0x18] sm:$0xff] %v2976
        %p2979 = scmp.lt.s32.totalorder %s21, 1
        %s2980 = scalar_select %p2979, %s21, 1
        %p2981 = scmp.lt.s32.totalorder %s22, 0
        %s2982 = scalar_select %p2981, %s22, 0
        %s2983 = smul.addr %s2980, 4
        %s2984 = sadd.s32 %s2982, %s2983
        %s2985 = smul.addr %s2984, 8
        %s2986 = scalar_lea.vmem %s6, %s2985
        // Predicated region
        $region135: #{generator_conf_forward.1} parent=117 // pred_check
          %p2987 = pneg %p191
        $region136: #{generator_conf_forward.1} parent=117 // pred_check_branch
          %2989 = sbr.rel (%p2987) target = $region138
        $region137: #{generator_conf_forward.1} parent=117 // pred_region
          _
        $region138: #{generator_conf_forward.1} parent=117 // pred_fallthru
          _
      $region118: #{generator_conf_forward.1} parent=5 // pred_fallthru
        _
      %p2990 = scmp.le.s32.totalorder 2, %s12
      // Predicated region
      $region139: #{generator_conf_forward.1} parent=5 // pred_check
        %p2991 = pneg %p2990
      $region140: #{generator_conf_forward.1} parent=5 // pred_check_branch
        %2993 = sbr.rel (%p2991) target = $region142
      $region141: #{generator_conf_forward.1} parent=5 // pred_region
        %s2994 = ssub.s32 %s12, 2
        // Predicated region
        $region143: #{generator_conf_forward.1} parent=141 // pred_check
          %p2995 = pneg %p197
        $region144: #{generator_conf_forward.1} parent=141 // pred_check_branch
          %2997 = sbr.rel (%p2995) target = $region146
        $region145: #{generator_conf_forward.1} parent=141 // pred_region
          %p2998 = scmp.lt.s32.totalorder %s23, 1
          %s2999 = scalar_select %p2998, %s23, 1
          %p3000 = scmp.lt.s32.totalorder %s24, 0
          %s3001 = scalar_select %p3000, %s24, 0
          %s3002 = smul.addr %s2999, 4
          %s3003 = sadd.s32 %s3001, %s3002
          %s3004 = smul.addr %s3003, 8
          %s3005 = scalar_lea.vmem %s6, %s3004
        $region146: #{generator_conf_forward.1} parent=141 // pred_fallthru
          _
      $region142: #{generator_conf_forward.1} parent=5 // pred_fallthru
        _
    $region6: #{generator_conf_forward.1} parent=1 // loop_footer
      %s16 = sadd.s32 1, %s12
    $region7: #{generator_conf_forward.1} parent=1 // loop_footer_branch
      %11 = sbr.rel target = $region3
    $region8: #{generator_conf_forward.1} parent=1 // loop_exit
      _

</llo_original>
